<compile_context>
chip_gen: v7x
topology: tpu7x:2x2x1
jax: 0.10.0
libtpu: 0.0.40
codegen_flags: <defaults>
</compile_context>

<pallas_src>
import math
from functools import partial

import jax
import jax.numpy as jnp
from jax import lax
from jax.experimental import pallas as pl
from jax.experimental.pallas import tpu as pltpu

MXU_DTYPE = jnp.bfloat16   # MXU operand dtype (f32 accumulation everywhere)
ACT_DTYPE = jnp.bfloat16   # inter-kernel activation dtype (HBM traffic)
LN_EPS = 1e-5              # PyTorch LayerNorm default eps
_VMEM_LIMIT = 56 * 1024 * 1024   # <= v7x physical VMEM; plenty of headroom on v5e/v6e


def _cparams(semantics):
    return pltpu.CompilerParams(dimension_semantics=semantics,
                                vmem_limit_bytes=_VMEM_LIMIT)


# ----------------------------------------------------------------------------
# single-buffering (pl.Buffered(1)) feature probe for constant-index operands
# ----------------------------------------------------------------------------
_BUF1_OK = None


def _single_buffer_ok():
    global _BUF1_OK
    if _BUF1_OK is None:
        try:
            def _k(a_ref, w_ref, o_ref):
                o_ref[...] = a_ref[...] + w_ref[...]
            a = jnp.zeros((16, 128), jnp.float32)
            w = jnp.zeros((8, 128), jnp.float32)
            f = pl.pallas_call(
                _k,
                out_shape=jax.ShapeDtypeStruct((16, 128), jnp.float32),
                grid=(2,),
                in_specs=[
                    pl.BlockSpec((8, 128), lambda i: (i, 0)),
                    pl.BlockSpec((8, 128), lambda i: (0, 0),
                                 pipeline_mode=pl.Buffered(1)),
                ],
                out_specs=pl.BlockSpec((8, 128), lambda i: (i, 0)),
            )
            jax.block_until_ready(f(a, w))
            _BUF1_OK = True
        except Exception:
            _BUF1_OK = False
    return _BUF1_OK


def _bspec(shape, index_map, constant=False):
    """BlockSpec; constant-index operands (weights, biases, LN params) are
    single-buffered when the runtime supports pl.Buffered(1)."""
    if constant and _single_buffer_ok():
        return pl.BlockSpec(shape, index_map, pipeline_mode=pl.Buffered(1))
    return pl.BlockSpec(shape, index_map)


# ----------------------------------------------------------------------------
# small helpers
# ----------------------------------------------------------------------------
def _mm(x, w):
    """MXU matmul: bf16 operands, f32 accumulation."""
    return jnp.dot(x.astype(MXU_DTYPE), w.astype(MXU_DTYPE),
                   preferred_element_type=jnp.float32)


def _layernorm(y, gamma, beta):
    mu = jnp.mean(y, axis=-1, keepdims=True)
    var = jnp.mean((y - mu) ** 2, axis=-1, keepdims=True)
    return (y - mu) * lax.rsqrt(var + LN_EPS) * gamma + beta


def _pick_tm(m, target=512):
    """Row-tile: largest multiple-of-8 divisor of m that is <= target and < m,
    so the grid never degenerates to one step once m >= 16 (keeps pipelining and
    megacore sharding alive)."""
    if m <= 8:
        return m
    for cand in (1024, 512, 256, 128, 64, 32, 16, 8):
        if cand <= target and m % cand == 0 and cand < m:
            return cand
    return m


def _pick_tn(n, cap=512):
    """Lane-axis chunk (streamed weight columns / FFN hidden chunk): largest
    128-multiple divisor of n that is <= cap, else the whole axis."""
    if n <= cap:
        return n
    for cand in (512, 384, 256, 128):
        if cand <= cap and n % cand == 0:
            return cand
    return n


# ----------------------------------------------------------------------------
# fused linear: y = [LN]( act(x @ W + b) [+ residual] ), bf16 out
# ----------------------------------------------------------------------------
def _linear_kernel(*refs, act, has_res, has_ln):
    it = iter(refs)
    x_ref, w_ref, b_ref = next(it), next(it), next(it)
    res_ref = next(it) if has_res else None
    if has_ln:
        g_ref, beta_ref = next(it), next(it)
    o_ref = next(it)

    y = _mm(x_ref[...], w_ref[...]) + b_ref[...]
    if act == "relu":
        y = jnp.maximum(y, 0.0)
    if has_res:
        y = y + res_ref[...].astype(jnp.float32)
    if has_ln:
        y = _layernorm(y, g_ref[...], beta_ref[...])
    o_ref[...] = y.astype(o_ref.dtype)


def fused_linear(x, w, b, *, act="none", residual=None, ln=None,
                 out_dtype=ACT_DTYPE):
    """x:(M,K), w:(K,N) bf16, b:(1,N) f32 -> (M,N) out_dtype.
    M-tiled and, when there is no LayerNorm epilogue (which needs full rows),
    N-tiled so the weight slab is streamed column-chunk by column-chunk."""
    M, K = x.shape
    N = w.shape[1]
    has_res = residual is not None
    has_ln = ln is not None
    tm = _pick_tm(M)
    tn = N if has_ln else _pick_tn(N)
    m_t, n_t = M // tm, N // tn
    w_const = (n_t == 1)

    inputs = [x, w, b]
    in_specs = [
        pl.BlockSpec((tm, K), lambda i, j: (i, 0)),
        _bspec((K, tn), lambda i, j: (0, j), constant=w_const),
        _bspec((1, tn), lambda i, j: (0, j), constant=w_const),
    ]
    if has_res:
        inputs.append(residual)
        in_specs.append(pl.BlockSpec((tm, tn), lambda i, j: (i, j)))
    if has_ln:
        gamma, beta = ln
        inputs += [gamma, beta]
        in_specs += [_bspec((1, N), lambda i, j: (0, 0), constant=True),
                     _bspec((1, N), lambda i, j: (0, 0), constant=True)]

    return pl.pallas_call(
        partial(_linear_kernel, act=act, has_res=has_res, has_ln=has_ln),
        out_shape=jax.ShapeDtypeStruct((M, N), out_dtype),
        grid=(m_t, n_t),
        in_specs=in_specs,
        out_specs=pl.BlockSpec((tm, tn), lambda i, j: (i, j)),
        compiler_params=_cparams(("parallel", "parallel")),
    )(*inputs)


# ----------------------------------------------------------------------------
# fused FFN sublayer: LayerNorm( x + W2 @ relu(W1 @ x) ), F axis streamed
# ----------------------------------------------------------------------------
def _ffn_kernel(x_ref, w1_ref, b1_ref, w2_ref, b2_ref, g_ref, beta_ref,
                o_ref, acc_ref):
    k = pl.program_id(1)

    @pl.when(k == 0)
    def _():
        acc_ref[...] = jnp.zeros_like(acc_ref)

    h = jnp.maximum(_mm(x_ref[...], w1_ref[...]) + b1_ref[...], 0.0)
    acc_ref[...] += _mm(h, w2_ref[...])

    @pl.when(k == pl.num_programs(1) - 1)
    def _():
        y = acc_ref[...] + b2_ref[...] + x_ref[...].astype(jnp.float32)
        o_ref[...] = _layernorm(y, g_ref[...], beta_ref[...]).astype(o_ref.dtype)


def fused_ffn(x, w1, b1, w2, b2, gamma, beta, *, out_dtype=ACT_DTYPE):
    M, D = x.shape
    F = w1.shape[1]
    tm = _pick_tm(M)
    tf = _pick_tn(F)
    m_t, f_t = M // tm, F // tf
    w_const = (f_t == 1)
    return pl.pallas_call(
        _ffn_kernel,
        out_shape=jax.ShapeDtypeStruct((M, D), out_dtype),
        grid=(m_t, f_t),
        in_specs=[
            pl.BlockSpec((tm, D), lambda i, k: (i, 0)),
            _bspec((D, tf), lambda i, k: (0, k), constant=w_const),
            _bspec((1, tf), lambda i, k: (0, k), constant=w_const),
            _bspec((tf, D), lambda i, k: (k, 0), constant=w_const),
            _bspec((1, D), lambda i, k: (0, 0), constant=True),
            _bspec((1, D), lambda i, k: (0, 0), constant=True),
            _bspec((1, D), lambda i, k: (0, 0), constant=True),
        ],
        out_specs=pl.BlockSpec((tm, D), lambda i, k: (i, 0)),
        scratch_shapes=[pltpu.VMEM((tm, D), jnp.float32)],
        compiler_params=_cparams(("parallel", "arbitrary")),
    )(x, w1, b1, w2, b2, gamma, beta)


# ----------------------------------------------------------------------------
# multi-head self-attention over the fused bf16 qkv slab
# ----------------------------------------------------------------------------
def _attn_kernel(qkv_ref, o_ref, *, D, H, scale):
    """All heads of one batch element.  Heads are static lane slices of the bf16
    qkv slab; per-head contexts are concatenated and written with a single
    lane-dense (S, D) store (no masked per-head partial stores)."""
    dh = D // H
    ctxs = []
    for h in range(H):                                     # static unroll
        q = qkv_ref[0, :, h * dh:(h + 1) * dh]             # (S, dh) bf16
        k = qkv_ref[0, :, D + h * dh:D + (h + 1) * dh]
        v = qkv_ref[0, :, 2 * D + h * dh:2 * D + (h + 1) * dh]
        s = lax.dot_general(q, k, (((1,), (1,)), ((), ())),
                            preferred_element_type=jnp.float32) * scale
        s = s - jnp.max(s, axis=-1, keepdims=True)
        e = jnp.exp(s)
        p = e * pl.reciprocal(jnp.sum(e, axis=-1, keepdims=True), approx=True)
        ctxs.append(jnp.dot(p.astype(MXU_DTYPE), v,
                            preferred_element_type=jnp.float32))
    o_ref[0, :, :] = jnp.concatenate(ctxs, axis=-1).astype(o_ref.dtype)


def attention(qkv, B, S, D, H):
    """qkv:(B*S, 3D) bf16 -> context (B, S, D) bf16."""
    # TODO(synk): flash-style KV tiling for very long sequences and the optional
    # attention `mask` path are not implemented (whole (1,S,3D) block per step).
    scale = 1.0 / math.sqrt(D // H)
    qkv3 = qkv.reshape(B, S, 3 * D)
    return pl.pallas_call(
        partial(_attn_kernel, D=D, H=H, scale=scale),
        out_shape=jax.ShapeDtypeStruct((B, S, D), ACT_DTYPE),
        grid=(B,),
        in_specs=[pl.BlockSpec((1, S, 3 * D), lambda b: (b, 0, 0))],
        out_specs=pl.BlockSpec((1, S, D), lambda b: (b, 0, 0)),
        compiler_params=_cparams(("parallel",)),
    )(qkv3)


# ----------------------------------------------------------------------------
# fused tail: mean-pool + output projection + all six heads in ONE kernel
# ----------------------------------------------------------------------------
def _tail_kernel(x_ref, ow_ref, ob_ref, w1_ref, b1_ref, w2_ref, b2_ref, o_ref, *,
                 softmax_segs, relu_segs, sigmoid_segs):
    pooled = jnp.mean(x_ref[...].astype(jnp.float32), axis=1)     # (B, D)
    shared = _mm(pooled, ow_ref[...]) + ob_ref[...]               # (B, D)
    h = jnp.maximum(_mm(shared, w1_ref[...]) + b1_ref[...], 0.0)  # (B, 2D)
    y = _mm(h, w2_ref[...]) + b2_ref[...]                         # (B, o_pad)
    col = lax.broadcasted_iota(jnp.int32, y.shape, 1)

    def in_seg(a, b):
        return (col >= a) & (col < b)

    for a, b in softmax_segs:                                     # segment softmax
        m = in_seg(a, b)
        ym = jnp.where(m, y, -jnp.inf)
        mx = jnp.max(ym, axis=-1, keepdims=True)
        e = jnp.exp(ym - mx)
        sm = e * pl.reciprocal(jnp.sum(e, axis=-1, keepdims=True), approx=True)
        y = jnp.where(m, sm, y)
    for a, b in relu_segs:
        y = jnp.where(in_seg(a, b), jnp.maximum(y, 0.0), y)
    for a, b in sigmoid_segs:
        y = jnp.where(in_seg(a, b), jax.nn.sigmoid(y), y)
    o_ref[...] = y


def fused_tail(x3d, ow, ob, hw1, hb1, hw2, hb2, *,
               softmax_segs, relu_segs, sigmoid_segs):
    B, S, D = x3d.shape
    H1 = hw1.shape[1]
    Np = hw2.shape[1]
    return pl.pallas_call(
        partial(_tail_kernel, softmax_segs=softmax_segs,
                relu_segs=relu_segs, sigmoid_segs=sigmoid_segs),
        out_shape=jax.ShapeDtypeStruct((B, Np), jnp.float32),
        grid=(1,),
        in_specs=[
            _bspec((B, S, D), lambda i: (0, 0, 0), constant=True),
            _bspec((D, D), lambda i: (0, 0), constant=True),
            _bspec((1, D), lambda i: (0, 0), constant=True),
            _bspec((D, H1), lambda i: (0, 0), constant=True),
            _bspec((1, H1), lambda i: (0, 0), constant=True),
            _bspec((H1, Np), lambda i: (0, 0), constant=True),
            _bspec((1, Np), lambda i: (0, 0), constant=True),
        ],
        out_specs=pl.BlockSpec((B, Np), lambda i: (0, 0)),
        compiler_params=_cparams(("arbitrary",)),
    )(x3d, ow, ob, hw1, hb1, hw2, hb2)


# ----------------------------------------------------------------------------
# Head packing layout (static python ints)
# ----------------------------------------------------------------------------
_HEAD_ORDER = ("market_state", "market_regime", "volatility", "actions", "value",
               "confidence")


def head_layout(cfg):
    D = cfg["hidden_dim"]
    hid = {"market_state": D // 2, "market_regime": D // 4, "volatility": D // 4,
           "actions": D // 2, "value": D // 4, "confidence": D // 4}
    out = {"market_state": cfg["prediction_horizon"] * cfg["market_features"],
           "market_regime": cfg["num_regimes"],
           "volatility": cfg["prediction_horizon"],
           "actions": cfg["action_dim"],
           "value": 1, "confidence": 1}

    def offsets(sizes):
        offs, o = {}, 0
        for name in _HEAD_ORDER:
            offs[name] = (o, o + sizes[name])
            o += sizes[name]
        return offs, o

    h_off, h_tot = offsets(hid)
    o_off, o_tot = offsets(out)
    o_pad = max(128, ((o_tot + 127) // 128) * 128)   # lane-dense output width
    return h_off, h_tot, o_off, o_tot, o_pad


# ----------------------------------------------------------------------------
# Parameter initialization (Xavier-uniform weights stored bf16, f32 biases)
# ----------------------------------------------------------------------------
def init_params(key, cfg):
    D, I, L = cfg["hidden_dim"], cfg["input_dim"], cfg["num_layers"]
    needed = 2 + 6 * L + 12
    ks = iter(jax.random.split(key, needed))

    def xavier(fi, fo):
        limit = math.sqrt(6.0 / (fi + fo))
        return jax.random.uniform(next(ks), (fi, fo), jnp.float32, -limit, limit)

    def wcast(w):
        return w.astype(MXU_DTYPE)

    params = {}
    params["in_w"] = wcast(xavier(I, D))
    params["in_b"] = jnp.zeros((1, D), jnp.float32)

    layers = []
    for _ in range(L):
        lp = {}
        wq, wk, wv = xavier(D, D), xavier(D, D), xavier(D, D)
        lp["wqkv"] = wcast(jnp.concatenate([wq, wk, wv], axis=1))      # (D, 3D)
        lp["bqkv"] = jnp.zeros((1, 3 * D), jnp.float32)
        lp["wo"] = wcast(xavier(D, D)); lp["bo"] = jnp.zeros((1, D), jnp.float32)
        lp["w1"] = wcast(xavier(D, D)); lp["b1"] = jnp.zeros((1, D), jnp.float32)   # ff_dim == hidden_dim
        lp["w2"] = wcast(xavier(D, D)); lp["b2"] = jnp.zeros((1, D), jnp.float32)
        lp["ln1_g"] = jnp.ones((1, D), jnp.float32); lp["ln1_b"] = jnp.zeros((1, D), jnp.float32)
        lp["ln2_g"] = jnp.ones((1, D), jnp.float32); lp["ln2_b"] = jnp.zeros((1, D), jnp.float32)
        layers.append(lp)
    params["layers"] = layers

    params["out_w"] = wcast(xavier(D, D))
    params["out_b"] = jnp.zeros((1, D), jnp.float32)

    # fused heads: concatenated layer-1, block-diagonal lane-padded layer-2
    h_off, h_tot, o_off, _, o_pad = head_layout(cfg)
    w1_parts = []
    w2_bd = jnp.zeros((h_tot, o_pad), jnp.float32)
    for name in _HEAD_ORDER:
        a1, b1 = h_off[name]
        a2, b2 = o_off[name]
        w1_parts.append(xavier(D, b1 - a1))
        w2_bd = w2_bd.at[a1:b1, a2:b2].set(xavier(b1 - a1, b2 - a2))
    params["hw1"] = wcast(jnp.concatenate(w1_parts, axis=1))           # (D, 2D)
    params["hb1"] = jnp.zeros((1, h_tot), jnp.float32)
    params["hw2"] = wcast(w2_bd)                                       # (2D, o_pad)
    params["hb2"] = jnp.zeros((1, o_pad), jnp.float32)
    return params


def sinusoidal_pe(seq_len, d_model):
    # NOTE: assumes even d_model (true for any realistic hidden_dim).
    pos = jnp.arange(seq_len, dtype=jnp.float32)[:, None]
    i = jnp.arange(d_model // 2, dtype=jnp.float32)[None, :]
    angle = pos / jnp.power(10000.0, 2.0 * i / d_model)
    pe = jnp.zeros((seq_len, d_model), jnp.float32)
    pe = pe.at[:, 0::2].set(jnp.sin(angle))
    pe = pe.at[:, 1::2].set(jnp.cos(angle))
    return pe


# ----------------------------------------------------------------------------
# Model forward
# ----------------------------------------------------------------------------
def encoder_layer(xf, lp, B, S, D, H):
    qkv = fused_linear(xf, lp["wqkv"], lp["bqkv"])                     # (B*S,3D) bf16
    ctx = attention(qkv, B, S, D, H).reshape(B * S, D)                 # (B*S, D) bf16
    x1 = fused_linear(ctx, lp["wo"], lp["bo"], residual=xf,
                      ln=(lp["ln1_g"], lp["ln1_b"]))                   # LN(x + attn)
    return fused_ffn(x1, lp["w1"], lp["b1"], lp["w2"], lp["b2"],
                     lp["ln2_g"], lp["ln2_b"])                         # LN(x1 + FFN)


def core_transformer_encode(x, params, num_heads):
    """Input projection + positional encoding + encoder stack -> (B,S,D) bf16."""
    B, S, I = x.shape
    D = params["in_w"].shape[1]
    pe = jnp.tile(sinusoidal_pe(S, D), (B, 1))                         # (B*S, D) f32
    xf = fused_linear(x.reshape(B * S, I), params["in_w"], params["in_b"],
                      residual=pe)                                     # proj + PE
    for lp in params["layers"]:
        xf = encoder_layer(xf, lp, B, S, D, num_heads)
    return xf.reshape(B, S, D)


def world_model_forward(params, x, *, cfg):
    # TODO(synk): optional attention `mask` and `return_attention` paths not implemented.
    B = x.shape[0]
    if x.ndim == 2:
        x = x[:, None, :]
    tokens = core_transformer_encode(x, params, cfg["num_heads"])      # (B,S,D) bf16

    _, _, o_off, _, _ = head_layout(cfg)
    y = fused_tail(
        tokens, params["out_w"], params["out_b"],
        params["hw1"], params["hb1"], params["hw2"], params["hb2"],
        softmax_segs=(o_off["market_regime"], o_off["actions"]),
        relu_segs=(o_off["volatility"],),
        sigmoid_segs=(o_off["confidence"],))                           # (B, o_pad) f32

    def sl(name):
        a, b = o_off[name]
        return y[:, a:b]

    market_state = sl("market_state").reshape(
        B, cfg["prediction_horizon"], cfg["market_features"])
    return {
        "predictions": {
            "market_state": market_state,
            "market_regime": sl("market_regime"),
            "volatility": sl("volatility"),
        },
        "policy": {"actions": sl("actions"), "value": sl("value")},
        "confidence": sl("confidence"),
    }


# ----------------------------------------------------------------------------
if __name__ == "__main__":
    cfg = dict(
        input_dim=16, hidden_dim=32, num_heads=4, num_layers=2,
        action_dim=3, prediction_horizon=5, market_features=5, num_regimes=4,
    )
    B, S = 2, 8

    key = jax.random.PRNGKey(0)
    pkey, xkey = jax.random.split(key)
    params = init_params(pkey, cfg)
    x = jax.random.normal(xkey, (B, S, cfg["input_dim"]), jnp.float32)

    fwd = jax.jit(partial(world_model_forward, cfg=cfg))
    out = fwd(params, x)
    jax.tree_util.tree_map(jax.block_until_ready, out)

    assert out["predictions"]["market_state"].shape == (B, cfg["prediction_horizon"], cfg["market_features"])
    assert out["predictions"]["market_regime"].shape == (B, cfg["num_regimes"])
    assert out["predictions"]["volatility"].shape == (B, cfg["prediction_horizon"])
    assert out["policy"]["actions"].shape == (B, cfg["action_dim"])
    assert out["policy"]["value"].shape == (B, 1)
    assert out["confidence"].shape == (B, 1)

    # sanity checks on the in-kernel segment activations
    # (tolerance covers the approximate EUP reciprocal used in the softmaxes)
    assert bool(jnp.all(jnp.abs(jnp.sum(out["policy"]["actions"], axis=-1) - 1.0) < 5e-3))
    assert bool(jnp.all(jnp.abs(jnp.sum(out["predictions"]["market_regime"], axis=-1) - 1.0) < 5e-3))
    assert bool(jnp.all((out["confidence"] >= 0.0) & (out["confidence"] <= 1.0)))
    assert bool(jnp.all(out["predictions"]["volatility"] >= 0.0))
    assert bool(jnp.all(jnp.isfinite(out["predictions"]["market_state"])))

    print("KERNEL_OK")
</pallas_src>

<mosaic_0001>
module attributes {stable_mosaic.version = 11 : i64} {
  func.func @_linear_kernel(%arg0: i32, %arg1: i32, %arg2: memref<8x32xbf16, #tpu.memory_space<vmem>>, %arg3: memref<32x96xbf16, #tpu.memory_space<vmem>>, %arg4: memref<1x96xf32, #tpu.memory_space<vmem>>, %arg5: memref<8x96xbf16, #tpu.memory_space<vmem>>) attributes {dimension_semantics = [#tpu.dimension_semantics<parallel>, #tpu.dimension_semantics<parallel>], iteration_bounds = array<i64: 2, 1>, scalar_prefetch = 0 : i64, scratch_operands = 0 : i64, tpu.core_type = #tpu.core_type<tc>, window_params = [{transform_indices = @transform_0, window_bounds = array<i64: 8, 32>}, {pipeline_mode = #tpu.pipeline_mode<synchronous>, transform_indices = @transform_1, window_bounds = array<i64: 32, 96>}, {pipeline_mode = #tpu.pipeline_mode<synchronous>, transform_indices = @transform_2, window_bounds = array<i64: 1, 96>}, {transform_indices = @transform_3, window_bounds = array<i64: 8, 96>}]} {
    %c0 = arith.constant 0 : index
    %c0_0 = arith.constant 0 : index
    %0 = vector.load %arg2[%c0, %c0_0] : memref<8x32xbf16, #tpu.memory_space<vmem>>, vector<8x32xbf16>
    %c0_1 = arith.constant 0 : index
    %c0_2 = arith.constant 0 : index
    %1 = vector.load %arg3[%c0_1, %c0_2] : memref<32x96xbf16, #tpu.memory_space<vmem>>, vector<32x96xbf16>
    %cst = arith.constant dense<0.000000e+00> : vector<8x96xf32>
    %2 = tpu.matmul %0, %1, %cst {dimension_numbers = #tpu.dot_dimension_numbers<[1], [0], [0], [1], [0, 0, 1, 1], [], []>} : vector<8x32xbf16>, vector<32x96xbf16>, vector<8x96xf32> -> vector<8x96xf32>
    %c0_3 = arith.constant 0 : index
    %c0_4 = arith.constant 0 : index
    %3 = vector.load %arg4[%c0_3, %c0_4] : memref<1x96xf32, #tpu.memory_space<vmem>>, vector<1x96xf32>
    %4 = vector.broadcast %3 : vector<1x96xf32> to vector<8x96xf32>
    %5 = arith.addf %2, %4 : vector<8x96xf32>
    %6 = arith.truncf %5 : vector<8x96xf32> to vector<8x96xbf16>
    %c0_5 = arith.constant 0 : index
    %c0_6 = arith.constant 0 : index
    %7 = vector.load %arg5[%c0_5, %c0_6] : memref<8x96xbf16, #tpu.memory_space<vmem>>, vector<8x96xbf16>
    tpu.vector_store %arg5[%c0_5, %c0_6], %6 {strides = array<i32>} : memref<8x96xbf16, #tpu.memory_space<vmem>>, vector<8x96xbf16>,
    return
  }
  func.func @transform_0(%arg0: i32, %arg1: i32) -> (i32, i32) {
    %c0_i32 = arith.constant 0 : i32
    %c0_i32_0 = arith.constant 0 : i32
    return %arg0, %c0_i32 : i32, i32
  }
  func.func @transform_1(%arg0: i32, %arg1: i32) -> (i32, i32) {
    %c0_i32 = arith.constant 0 : i32
    %c0_i32_0 = arith.constant 0 : i32
    return %c0_i32, %arg1 : i32, i32
  }
  func.func @transform_2(%arg0: i32, %arg1: i32) -> (i32, i32) {
    %c0_i32 = arith.constant 0 : i32
    %c0_i32_0 = arith.constant 0 : i32
    return %c0_i32, %arg1 : i32, i32
  }
  func.func @transform_3(%arg0: i32, %arg1: i32) -> (i32, i32) {
    %c0_i32 = arith.constant 0 : i32
    return %arg0, %arg1 : i32, i32
  }
}

module attributes {stable_mosaic.version = 11 : i64} {
  func.func @_attn_kernel(%arg0: i32, %arg1: memref<1x8x96xbf16, #tpu.memory_space<vmem>>, %arg2: memref<1x8x32xbf16, #tpu.memory_space<vmem>>) attributes {dimension_semantics = [#tpu.dimension_semantics<parallel>], iteration_bounds = array<i64: 2>, scalar_prefetch = 0 : i64, scratch_operands = 0 : i64, tpu.core_type = #tpu.core_type<tc>, window_params = [{transform_indices = @transform_0, window_bounds = array<i64: 1, 8, 96>}, {transform_indices = @transform_1, window_bounds = array<i64: 1, 8, 32>}]} {
    %c0 = arith.constant 0 : index
    %c0_0 = arith.constant 0 : index
    %c0_1 = arith.constant 0 : index
    %0 = vector.load %arg1[%c0, %c0_0, %c0_1] : memref<1x8x96xbf16, #tpu.memory_space<vmem>>, vector<1x8x8xbf16>
    %1 = vector.shape_cast %0 : vector<1x8x8xbf16> to vector<8x8xbf16>
    %c0_2 = arith.constant 0 : index
    %c0_3 = arith.constant 0 : index
    %c32 = arith.constant 32 : index
    %2 = vector.load %arg1[%c0_2, %c0_3, %c32] : memref<1x8x96xbf16, #tpu.memory_space<vmem>>, vector<1x8x8xbf16>
    %3 = vector.shape_cast %2 : vector<1x8x8xbf16> to vector<8x8xbf16>
    %c0_4 = arith.constant 0 : index
    %c0_5 = arith.constant 0 : index
    %c64 = arith.constant 64 : index
    %4 = vector.load %arg1[%c0_4, %c0_5, %c64] : memref<1x8x96xbf16, #tpu.memory_space<vmem>>, vector<1x8x8xbf16>
    %5 = vector.shape_cast %4 : vector<1x8x8xbf16> to vector<8x8xbf16>
    %cst = arith.constant dense<0.000000e+00> : vector<8x8xf32>
    %6 = tpu.matmul %1, %3, %cst {dimension_numbers = #tpu.dot_dimension_numbers<[1], [1], [0], [0], [0, 0, 1, 0], [], []>} : vector<8x8xbf16>, vector<8x8xbf16>, vector<8x8xf32> -> vector<8x8xf32>
    %cst_6 = arith.constant 0.353553385 : f32
    %7 = vector.broadcast %cst_6 : f32 to vector<8x8xf32>
    %8 = arith.mulf %6, %7 : vector<8x8xf32>
    %cst_7 = arith.constant dense<0xFF800000> : vector<8xf32>
    %9 = vector.multi_reduction <maximumf>, %8, %cst_7 [1] : vector<8x8xf32> to vector<8xf32>
    %10 = vector.shape_cast %9 : vector<8xf32> to vector<8x1xf32>
    %11 = vector.broadcast %10 : vector<8x1xf32> to vector<8x8xf32>
    %12 = arith.subf %8, %11 : vector<8x8xf32>
    %13 = math.exp %12 : vector<8x8xf32>
    %cst_8 = arith.constant dense<0.000000e+00> : vector<8xf32>
    %14 = vector.multi_reduction <add>, %13, %cst_8 [1] : vector<8x8xf32> to vector<8xf32>
    %15 = vector.shape_cast %14 : vector<8xf32> to vector<8x1xf32>
    %16 = tpu.reciprocal %15 {approx = true} : vector<8x1xf32> -> vector<8x1xf32>
    %17 = vector.broadcast %16 : vector<8x1xf32> to vector<8x8xf32>
    %18 = arith.mulf %13, %17 : vector<8x8xf32>
    %19 = arith.truncf %18 : vector<8x8xf32> to vector<8x8xbf16>
    %cst_9 = arith.constant dense<0.000000e+00> : vector<8x8xf32>
    %20 = tpu.matmul %19, %5, %cst_9 {dimension_numbers = #tpu.dot_dimension_numbers<[1], [0], [0], [1], [0, 0, 1, 1], [], []>} : vector<8x8xbf16>, vector<8x8xbf16>, vector<8x8xf32> -> vector<8x8xf32>
    %c0_10 = arith.constant 0 : index
    %c0_11 = arith.constant 0 : index
    %c8 = arith.constant 8 : index
    %21 = vector.load %arg1[%c0_10, %c0_11, %c8] : memref<1x8x96xbf16, #tpu.memory_space<vmem>>, vector<1x8x8xbf16>
    %22 = vector.shape_cast %21 : vector<1x8x8xbf16> to vector<8x8xbf16>
    %c0_12 = arith.constant 0 : index
    %c0_13 = arith.constant 0 : index
    %c40 = arith.constant 40 : index
    %23 = vector.load %arg1[%c0_12, %c0_13, %c40] : memref<1x8x96xbf16, #tpu.memory_space<vmem>>, vector<1x8x8xbf16>
    %24 = vector.shape_cast %23 : vector<1x8x8xbf16> to vector<8x8xbf16>
    %c0_14 = arith.constant 0 : index
    %c0_15 = arith.constant 0 : index
    %c72 = arith.constant 72 : index
    %25 = vector.load %arg1[%c0_14, %c0_15, %c72] : memref<1x8x96xbf16, #tpu.memory_space<vmem>>, vector<1x8x8xbf16>
    %26 = vector.shape_cast %25 : vector<1x8x8xbf16> to vector<8x8xbf16>
    %cst_16 = arith.constant dense<0.000000e+00> : vector<8x8xf32>
    %27 = tpu.matmul %22, %24, %cst_16 {dimension_numbers = #tpu.dot_dimension_numbers<[1], [1], [0], [0], [0, 0, 1, 0], [], []>} : vector<8x8xbf16>, vector<8x8xbf16>, vector<8x8xf32> -> vector<8x8xf32>
    %cst_17 = arith.constant 0.353553385 : f32
    %28 = vector.broadcast %cst_17 : f32 to vector<8x8xf32>
    %29 = arith.mulf %27, %28 : vector<8x8xf32>
    %cst_18 = arith.constant dense<0xFF800000> : vector<8xf32>
    %30 = vector.multi_reduction <maximumf>, %29, %cst_18 [1] : vector<8x8xf32> to vector<8xf32>
    %31 = vector.shape_cast %30 : vector<8xf32> to vector<8x1xf32>
    %32 = vector.broadcast %31 : vector<8x1xf32> to vector<8x8xf32>
    %33 = arith.subf %29, %32 : vector<8x8xf32>
    %34 = math.exp %33 : vector<8x8xf32>
    %cst_19 = arith.constant dense<0.000000e+00> : vector<8xf32>
    %35 = vector.multi_reduction <add>, %34, %cst_19 [1] : vector<8x8xf32> to vector<8xf32>
    %36 = vector.shape_cast %35 : vector<8xf32> to vector<8x1xf32>
    %37 = tpu.reciprocal %36 {approx = true} : vector<8x1xf32> -> vector<8x1xf32>
    %38 = vector.broadcast %37 : vector<8x1xf32> to vector<8x8xf32>
    %39 = arith.mulf %34, %38 : vector<8x8xf32>
    %40 = arith.truncf %39 : vector<8x8xf32> to vector<8x8xbf16>
    %cst_20 = arith.constant dense<0.000000e+00> : vector<8x8xf32>
    %41 = tpu.matmul %40, %26, %cst_20 {dimension_numbers = #tpu.dot_dimension_numbers<[1], [0], [0], [1], [0, 0, 1, 1], [], []>} : vector<8x8xbf16>, vector<8x8xbf16>, vector<8x8xf32> -> vector<8x8xf32>
    %c0_21 = arith.constant 0 : index
    %c0_22 = arith.constant 0 : index
    %c16 = arith.constant 16 : index
    %42 = vector.load %arg1[%c0_21, %c0_22, %c16] : memref<1x8x96xbf16, #tpu.memory_space<vmem>>, vector<1x8x8xbf16>
    %43 = vector.shape_cast %42 : vector<1x8x8xbf16> to vector<8x8xbf16>
    %c0_23 = arith.constant 0 : index
    %c0_24 = arith.constant 0 : index
    %c48 = arith.constant 48 : index
    %44 = vector.load %arg1[%c0_23, %c0_24, %c48] : memref<1x8x96xbf16, #tpu.memory_space<vmem>>, vector<1x8x8xbf16>
    %45 = vector.shape_cast %44 : vector<1x8x8xbf16> to vector<8x8xbf16>
    %c0_25 = arith.constant 0 : index
    %c0_26 = arith.constant 0 : index
    %c80 = arith.constant 80 : index
    %46 = vector.load %arg1[%c0_25, %c0_26, %c80] : memref<1x8x96xbf16, #tpu.memory_space<vmem>>, vector<1x8x8xbf16>
    %47 = vector.shape_cast %46 : vector<1x8x8xbf16> to vector<8x8xbf16>
    %cst_27 = arith.constant dense<0.000000e+00> : vector<8x8xf32>
    %48 = tpu.matmul %43, %45, %cst_27 {dimension_numbers = #tpu.dot_dimension_numbers<[1], [1], [0], [0], [0, 0, 1, 0], [], []>} : vector<8x8xbf16>, vector<8x8xbf16>, vector<8x8xf32> -> vector<8x8xf32>
    %cst_28 = arith.constant 0.353553385 : f32
    %49 = vector.broadcast %cst_28 : f32 to vector<8x8xf32>
    %50 = arith.mulf %48, %49 : vector<8x8xf32>
    %cst_29 = arith.constant dense<0xFF800000> : vector<8xf32>
    %51 = vector.multi_reduction <maximumf>, %50, %cst_29 [1] : vector<8x8xf32> to vector<8xf32>
    %52 = vector.shape_cast %51 : vector<8xf32> to vector<8x1xf32>
    %53 = vector.broadcast %52 : vector<8x1xf32> to vector<8x8xf32>
    %54 = arith.subf %50, %53 : vector<8x8xf32>
    %55 = math.exp %54 : vector<8x8xf32>
    %cst_30 = arith.constant dense<0.000000e+00> : vector<8xf32>
    %56 = vector.multi_reduction <add>, %55, %cst_30 [1] : vector<8x8xf32> to vector<8xf32>
    %57 = vector.shape_cast %56 : vector<8xf32> to vector<8x1xf32>
    %58 = tpu.reciprocal %57 {approx = true} : vector<8x1xf32> -> vector<8x1xf32>
    %59 = vector.broadcast %58 : vector<8x1xf32> to vector<8x8xf32>
    %60 = arith.mulf %55, %59 : vector<8x8xf32>
    %61 = arith.truncf %60 : vector<8x8xf32> to vector<8x8xbf16>
    %cst_31 = arith.constant dense<0.000000e+00> : vector<8x8xf32>
    %62 = tpu.matmul %61, %47, %cst_31 {dimension_numbers = #tpu.dot_dimension_numbers<[1], [0], [0], [1], [0, 0, 1, 1], [], []>} : vector<8x8xbf16>, vector<8x8xbf16>, vector<8x8xf32> -> vector<8x8xf32>
    %c0_32 = arith.constant 0 : index
    %c0_33 = arith.constant 0 : index
    %c24 = arith.constant 24 : index
    %63 = vector.load %arg1[%c0_32, %c0_33, %c24] : memref<1x8x96xbf16, #tpu.memory_space<vmem>>, vector<1x8x8xbf16>
    %64 = vector.shape_cast %63 : vector<1x8x8xbf16> to vector<8x8xbf16>
    %c0_34 = arith.constant 0 : index
    %c0_35 = arith.constant 0 : index
    %c56 = arith.constant 56 : index
    %65 = vector.load %arg1[%c0_34, %c0_35, %c56] : memref<1x8x96xbf16, #tpu.memory_space<vmem>>, vector<1x8x8xbf16>
    %66 = vector.shape_cast %65 : vector<1x8x8xbf16> to vector<8x8xbf16>
    %c0_36 = arith.constant 0 : index
    %c0_37 = arith.constant 0 : index
    %c88 = arith.constant 88 : index
    %67 = vector.load %arg1[%c0_36, %c0_37, %c88] : memref<1x8x96xbf16, #tpu.memory_space<vmem>>, vector<1x8x8xbf16>
    %68 = vector.shape_cast %67 : vector<1x8x8xbf16> to vector<8x8xbf16>
    %cst_38 = arith.constant dense<0.000000e+00> : vector<8x8xf32>
    %69 = tpu.matmul %64, %66, %cst_38 {dimension_numbers = #tpu.dot_dimension_numbers<[1], [1], [0], [0], [0, 0, 1, 0], [], []>} : vector<8x8xbf16>, vector<8x8xbf16>, vector<8x8xf32> -> vector<8x8xf32>
    %cst_39 = arith.constant 0.353553385 : f32
    %70 = vector.broadcast %cst_39 : f32 to vector<8x8xf32>
    %71 = arith.mulf %69, %70 : vector<8x8xf32>
    %cst_40 = arith.constant dense<0xFF800000> : vector<8xf32>
    %72 = vector.multi_reduction <maximumf>, %71, %cst_40 [1] : vector<8x8xf32> to vector<8xf32>
    %73 = vector.shape_cast %72 : vector<8xf32> to vector<8x1xf32>
    %74 = vector.broadcast %73 : vector<8x1xf32> to vector<8x8xf32>
    %75 = arith.subf %71, %74 : vector<8x8xf32>
    %76 = math.exp %75 : vector<8x8xf32>
    %cst_41 = arith.constant dense<0.000000e+00> : vector<8xf32>
    %77 = vector.multi_reduction <add>, %76, %cst_41 [1] : vector<8x8xf32> to vector<8xf32>
    %78 = vector.shape_cast %77 : vector<8xf32> to vector<8x1xf32>
    %79 = tpu.reciprocal %78 {approx = true} : vector<8x1xf32> -> vector<8x1xf32>
    %80 = vector.broadcast %79 : vector<8x1xf32> to vector<8x8xf32>
    %81 = arith.mulf %76, %80 : vector<8x8xf32>
    %82 = arith.truncf %81 : vector<8x8xf32> to vector<8x8xbf16>
    %cst_42 = arith.constant dense<0.000000e+00> : vector<8x8xf32>
    %83 = tpu.matmul %82, %68, %cst_42 {dimension_numbers = #tpu.dot_dimension_numbers<[1], [0], [0], [1], [0, 0, 1, 1], [], []>} : vector<8x8xbf16>, vector<8x8xbf16>, vector<8x8xf32> -> vector<8x8xf32>
    %84 = tpu.concatenate %20, %41, %62, %83 in 1 : vector<8x8xf32>, vector<8x8xf32>, vector<8x8xf32>, vector<8x8xf32> -> vector<8x32xf32>
    %85 = arith.truncf %84 : vector<8x32xf32> to vector<8x32xbf16>
    %c0_43 = arith.constant 0 : index
    %c0_44 = arith.constant 0 : index
    %c0_45 = arith.constant 0 : index
    %86 = vector.load %arg2[%c0_43, %c0_44, %c0_45] : memref<1x8x32xbf16, #tpu.memory_space<vmem>>, vector<1x8x32xbf16>
    %87 = vector.shape_cast %86 : vector<1x8x32xbf16> to vector<8x32xbf16>
    %88 = vector.shape_cast %85 : vector<8x32xbf16> to vector<1x8x32xbf16>
    tpu.vector_store %arg2[%c0_43, %c0_44, %c0_45], %88 {strides = array<i32>} : memref<1x8x32xbf16, #tpu.memory_space<vmem>>, vector<1x8x32xbf16>,
    return
  }
  func.func @transform_0(%arg0: i32) -> (i32, i32, i32) {
    %c0_i32 = arith.constant 0 : i32
    %c0_i32_0 = arith.constant 0 : i32
    %c0_i32_1 = arith.constant 0 : i32
    return %arg0, %c0_i32, %c0_i32_0 : i32, i32, i32
  }
  func.func @transform_1(%arg0: i32) -> (i32, i32, i32) {
    %c0_i32 = arith.constant 0 : i32
    %c0_i32_0 = arith.constant 0 : i32
    %c0_i32_1 = arith.constant 0 : i32
    return %arg0, %c0_i32, %c0_i32_0 : i32, i32, i32
  }
}

module attributes {stable_mosaic.version = 11 : i64} {
  func.func @_linear_kernel(%arg0: i32, %arg1: i32, %arg2: memref<8x16xf32, #tpu.memory_space<vmem>>, %arg3: memref<16x32xbf16, #tpu.memory_space<vmem>>, %arg4: memref<1x32xf32, #tpu.memory_space<vmem>>, %arg5: memref<8x32xf32, #tpu.memory_space<vmem>>, %arg6: memref<8x32xbf16, #tpu.memory_space<vmem>>) attributes {dimension_semantics = [#tpu.dimension_semantics<parallel>, #tpu.dimension_semantics<parallel>], iteration_bounds = array<i64: 2, 1>, scalar_prefetch = 0 : i64, scratch_operands = 0 : i64, tpu.core_type = #tpu.core_type<tc>, window_params = [{transform_indices = @transform_0, window_bounds = array<i64: 8, 16>}, {pipeline_mode = #tpu.pipeline_mode<synchronous>, transform_indices = @transform_1, window_bounds = array<i64: 16, 32>}, {pipeline_mode = #tpu.pipeline_mode<synchronous>, transform_indices = @transform_2, window_bounds = array<i64: 1, 32>}, {transform_indices = @transform_3, window_bounds = array<i64: 8, 32>}, {transform_indices = @transform_4, window_bounds = array<i64: 8, 32>}]} {
    %c0 = arith.constant 0 : index
    %c0_0 = arith.constant 0 : index
    %0 = vector.load %arg2[%c0, %c0_0] : memref<8x16xf32, #tpu.memory_space<vmem>>, vector<8x16xf32>
    %c0_1 = arith.constant 0 : index
    %c0_2 = arith.constant 0 : index
    %1 = vector.load %arg3[%c0_1, %c0_2] : memref<16x32xbf16, #tpu.memory_space<vmem>>, vector<16x32xbf16>
    %2 = arith.truncf %0 : vector<8x16xf32> to vector<8x16xbf16>
    %cst = arith.constant dense<0.000000e+00> : vector<8x32xf32>
    %3 = tpu.matmul %2, %1, %cst {dimension_numbers = #tpu.dot_dimension_numbers<[1], [0], [0], [1], [0, 0, 1, 1], [], []>} : vector<8x16xbf16>, vector<16x32xbf16>, vector<8x32xf32> -> vector<8x32xf32>
    %c0_3 = arith.constant 0 : index
    %c0_4 = arith.constant 0 : index
    %4 = vector.load %arg4[%c0_3, %c0_4] : memref<1x32xf32, #tpu.memory_space<vmem>>, vector<1x32xf32>
    %5 = vector.broadcast %4 : vector<1x32xf32> to vector<8x32xf32>
    %6 = arith.addf %3, %5 : vector<8x32xf32>
    %c0_5 = arith.constant 0 : index
    %c0_6 = arith.constant 0 : index
    %7 = vector.load %arg5[%c0_5, %c0_6] : memref<8x32xf32, #tpu.memory_space<vmem>>, vector<8x32xf32>
    %8 = arith.addf %6, %7 : vector<8x32xf32>
    %9 = arith.truncf %8 : vector<8x32xf32> to vector<8x32xbf16>
    %c0_7 = arith.constant 0 : index
    %c0_8 = arith.constant 0 : index
    %10 = vector.load %arg6[%c0_7, %c0_8] : memref<8x32xbf16, #tpu.memory_space<vmem>>, vector<8x32xbf16>
    tpu.vector_store %arg6[%c0_7, %c0_8], %9 {strides = array<i32>} : memref<8x32xbf16, #tpu.memory_space<vmem>>, vector<8x32xbf16>,
    return
  }
  func.func @transform_0(%arg0: i32, %arg1: i32) -> (i32, i32) {
    %c0_i32 = arith.constant 0 : i32
    %c0_i32_0 = arith.constant 0 : i32
    return %arg0, %c0_i32 : i32, i32
  }
  func.func @transform_1(%arg0: i32, %arg1: i32) -> (i32, i32) {
    %c0_i32 = arith.constant 0 : i32
    %c0_i32_0 = arith.constant 0 : i32
    return %c0_i32, %arg1 : i32, i32
  }
  func.func @transform_2(%arg0: i32, %arg1: i32) -> (i32, i32) {
    %c0_i32 = arith.constant 0 : i32
    %c0_i32_0 = arith.constant 0 : i32
    return %c0_i32, %arg1 : i32, i32
  }
  func.func @transform_3(%arg0: i32, %arg1: i32) -> (i32, i32) {
    %c0_i32 = arith.constant 0 : i32
    return %arg0, %arg1 : i32, i32
  }
  func.func @transform_4(%arg0: i32, %arg1: i32) -> (i32, i32) {
    %c0_i32 = arith.constant 0 : i32
    return %arg0, %arg1 : i32, i32
  }
}

module attributes {stable_mosaic.version = 11 : i64} {
  func.func @_linear_kernel(%arg0: i32, %arg1: i32, %arg2: memref<8x32xbf16, #tpu.memory_space<vmem>>, %arg3: memref<32x32xbf16, #tpu.memory_space<vmem>>, %arg4: memref<1x32xf32, #tpu.memory_space<vmem>>, %arg5: memref<8x32xbf16, #tpu.memory_space<vmem>>, %arg6: memref<1x32xf32, #tpu.memory_space<vmem>>, %arg7: memref<1x32xf32, #tpu.memory_space<vmem>>, %arg8: memref<8x32xbf16, #tpu.memory_space<vmem>>) attributes {dimension_semantics = [#tpu.dimension_semantics<parallel>, #tpu.dimension_semantics<parallel>], iteration_bounds = array<i64: 2, 1>, scalar_prefetch = 0 : i64, scratch_operands = 0 : i64, tpu.core_type = #tpu.core_type<tc>, window_params = [{transform_indices = @transform_0, window_bounds = array<i64: 8, 32>}, {pipeline_mode = #tpu.pipeline_mode<synchronous>, transform_indices = @transform_1, window_bounds = array<i64: 32, 32>}, {pipeline_mode = #tpu.pipeline_mode<synchronous>, transform_indices = @transform_2, window_bounds = array<i64: 1, 32>}, {transform_indices = @transform_3, window_bounds = array<i64: 8, 32>}, {pipeline_mode = #tpu.pipeline_mode<synchronous>, transform_indices = @transform_4, window_bounds = array<i64: 1, 32>}, {pipeline_mode = #tpu.pipeline_mode<synchronous>, transform_indices = @transform_5, window_bounds = array<i64: 1, 32>}, {transform_indices = @transform_6, window_bounds = array<i64: 8, 32>}]} {
    %c0 = arith.constant 0 : index
    %c0_0 = arith.constant 0 : index
    %0 = vector.load %arg2[%c0, %c0_0] : memref<8x32xbf16, #tpu.memory_space<vmem>>, vector<8x32xbf16>
    %c0_1 = arith.constant 0 : index
    %c0_2 = arith.constant 0 : index
    %1 = vector.load %arg3[%c0_1, %c0_2] : memref<32x32xbf16, #tpu.memory_space<vmem>>, vector<32x32xbf16>
    %cst = arith.constant dense<0.000000e+00> : vector<8x32xf32>
    %2 = tpu.matmul %0, %1, %cst {dimension_numbers = #tpu.dot_dimension_numbers<[1], [0], [0], [1], [0, 0, 1, 1], [], []>} : vector<8x32xbf16>, vector<32x32xbf16>, vector<8x32xf32> -> vector<8x32xf32>
    %c0_3 = arith.constant 0 : index
    %c0_4 = arith.constant 0 : index
    %3 = vector.load %arg4[%c0_3, %c0_4] : memref<1x32xf32, #tpu.memory_space<vmem>>, vector<1x32xf32>
    %4 = vector.broadcast %3 : vector<1x32xf32> to vector<8x32xf32>
    %5 = arith.addf %2, %4 : vector<8x32xf32>
    %c0_5 = arith.constant 0 : index
    %c0_6 = arith.constant 0 : index
    %6 = vector.load %arg5[%c0_5, %c0_6] : memref<8x32xbf16, #tpu.memory_space<vmem>>, vector<8x32xbf16>
    %7 = arith.extf %6 : vector<8x32xbf16> to vector<8x32xf32>
    %8 = arith.addf %5, %7 : vector<8x32xf32>
    %c0_7 = arith.constant 0 : index
    %c0_8 = arith.constant 0 : index
    %9 = vector.load %arg6[%c0_7, %c0_8] : memref<1x32xf32, #tpu.memory_space<vmem>>, vector<1x32xf32>
    %c0_9 = arith.constant 0 : index
    %c0_10 = arith.constant 0 : index
    %10 = vector.load %arg7[%c0_9, %c0_10] : memref<1x32xf32, #tpu.memory_space<vmem>>, vector<1x32xf32>
    %cst_11 = arith.constant dense<0.000000e+00> : vector<8xf32>
    %11 = vector.multi_reduction <add>, %8, %cst_11 [1] : vector<8x32xf32> to vector<8xf32>
    %12 = vector.shape_cast %11 : vector<8xf32> to vector<8x1xf32>
    %cst_12 = arith.constant 3.200000e+01 : f32
    %13 = vector.broadcast %cst_12 : f32 to vector<8x1xf32>
    %14 = arith.divf %12, %13 : vector<8x1xf32>
    %15 = vector.broadcast %14 : vector<8x1xf32> to vector<8x32xf32>
    %16 = arith.subf %8, %15 : vector<8x32xf32>
    %17 = arith.mulf %16, %16 : vector<8x32xf32>
    %cst_13 = arith.constant dense<0.000000e+00> : vector<8xf32>
    %18 = vector.multi_reduction <add>, %17, %cst_13 [1] : vector<8x32xf32> to vector<8xf32>
    %19 = vector.shape_cast %18 : vector<8xf32> to vector<8x1xf32>
    %cst_14 = arith.constant 3.200000e+01 : f32
    %20 = vector.broadcast %cst_14 : f32 to vector<8x1xf32>
    %21 = arith.divf %19, %20 : vector<8x1xf32>
    %22 = vector.broadcast %14 : vector<8x1xf32> to vector<8x32xf32>
    %23 = arith.subf %8, %22 : vector<8x32xf32>
    %cst_15 = arith.constant 9.99999974E-6 : f32
    %24 = vector.broadcast %cst_15 : f32 to vector<8x1xf32>
    %25 = arith.addf %21, %24 : vector<8x1xf32>
    %26 = math.rsqrt %25 : vector<8x1xf32>
    %27 = vector.broadcast %26 : vector<8x1xf32> to vector<8x32xf32>
    %28 = arith.mulf %23, %27 : vector<8x32xf32>
    %29 = vector.broadcast %9 : vector<1x32xf32> to vector<8x32xf32>
    %30 = arith.mulf %28, %29 : vector<8x32xf32>
    %31 = vector.broadcast %10 : vector<1x32xf32> to vector<8x32xf32>
    %32 = arith.addf %30, %31 : vector<8x32xf32>
    %33 = arith.truncf %32 : vector<8x32xf32> to vector<8x32xbf16>
    %c0_16 = arith.constant 0 : index
    %c0_17 = arith.constant 0 : index
    %34 = vector.load %arg8[%c0_16, %c0_17] : memref<8x32xbf16, #tpu.memory_space<vmem>>, vector<8x32xbf16>
    tpu.vector_store %arg8[%c0_16, %c0_17], %33 {strides = array<i32>} : memref<8x32xbf16, #tpu.memory_space<vmem>>, vector<8x32xbf16>,
    return
  }
  func.func @transform_0(%arg0: i32, %arg1: i32) -> (i32, i32) {
    %c0_i32 = arith.constant 0 : i32
    %c0_i32_0 = arith.constant 0 : i32
    return %arg0, %c0_i32 : i32, i32
  }
  func.func @transform_1(%arg0: i32, %arg1: i32) -> (i32, i32) {
    %c0_i32 = arith.constant 0 : i32
    %c0_i32_0 = arith.constant 0 : i32
    return %c0_i32, %arg1 : i32, i32
  }
  func.func @transform_2(%arg0: i32, %arg1: i32) -> (i32, i32) {
    %c0_i32 = arith.constant 0 : i32
    %c0_i32_0 = arith.constant 0 : i32
    return %c0_i32, %arg1 : i32, i32
  }
  func.func @transform_3(%arg0: i32, %arg1: i32) -> (i32, i32) {
    %c0_i32 = arith.constant 0 : i32
    return %arg0, %arg1 : i32, i32
  }
  func.func @transform_4(%arg0: i32, %arg1: i32) -> (i32, i32) {
    %c0_i32 = arith.constant 0 : i32
    %c0_i32_0 = arith.constant 0 : i32
    %c0_i32_1 = arith.constant 0 : i32
    return %c0_i32, %c0_i32_0 : i32, i32
  }
  func.func @transform_5(%arg0: i32, %arg1: i32) -> (i32, i32) {
    %c0_i32 = arith.constant 0 : i32
    %c0_i32_0 = arith.constant 0 : i32
    %c0_i32_1 = arith.constant 0 : i32
    return %c0_i32, %c0_i32_0 : i32, i32
  }
  func.func @transform_6(%arg0: i32, %arg1: i32) -> (i32, i32) {
    %c0_i32 = arith.constant 0 : i32
    return %arg0, %arg1 : i32, i32
  }
}

module attributes {stable_mosaic.version = 11 : i64} {
  func.func @_tail_kernel(%arg0: i32, %arg1: memref<2x8x32xbf16, #tpu.memory_space<vmem>>, %arg2: memref<32x32xbf16, #tpu.memory_space<vmem>>, %arg3: memref<1x32xf32, #tpu.memory_space<vmem>>, %arg4: memref<32x64xbf16, #tpu.memory_space<vmem>>, %arg5: memref<1x64xf32, #tpu.memory_space<vmem>>, %arg6: memref<64x128xbf16, #tpu.memory_space<vmem>>, %arg7: memref<1x128xf32, #tpu.memory_space<vmem>>, %arg8: memref<2x128xf32, #tpu.memory_space<vmem>>) attributes {dimension_semantics = [#tpu.dimension_semantics<arbitrary>], iteration_bounds = array<i64: 1>, scalar_prefetch = 0 : i64, scratch_operands = 0 : i64, tpu.core_type = #tpu.core_type<tc>, window_params = [{pipeline_mode = #tpu.pipeline_mode<synchronous>, transform_indices = @transform_0, window_bounds = array<i64: 2, 8, 32>}, {pipeline_mode = #tpu.pipeline_mode<synchronous>, transform_indices = @transform_1, window_bounds = array<i64: 32, 32>}, {pipeline_mode = #tpu.pipeline_mode<synchronous>, transform_indices = @transform_2, window_bounds = array<i64: 1, 32>}, {pipeline_mode = #tpu.pipeline_mode<synchronous>, transform_indices = @transform_3, window_bounds = array<i64: 32, 64>}, {pipeline_mode = #tpu.pipeline_mode<synchronous>, transform_indices = @transform_4, window_bounds = array<i64: 1, 64>}, {pipeline_mode = #tpu.pipeline_mode<synchronous>, transform_indices = @transform_5, window_bounds = array<i64: 64, 128>}, {pipeline_mode = #tpu.pipeline_mode<synchronous>, transform_indices = @transform_6, window_bounds = array<i64: 1, 128>}, {pipeline_mode = #tpu.pipeline_mode<synchronous>, transform_indices = @transform_7, window_bounds = array<i64: 2, 128>}]} {
    %c0 = arith.constant 0 : index
    %c0_0 = arith.constant 0 : index
    %c0_1 = arith.constant 0 : index
    %0 = vector.load %arg1[%c0, %c0_0, %c0_1] : memref<2x8x32xbf16, #tpu.memory_space<vmem>>, vector<2x8x32xbf16>
    %1 = arith.extf %0 : vector<2x8x32xbf16> to vector<2x8x32xf32>
    %cst = arith.constant dense<0.000000e+00> : vector<2x32xf32>
    %2 = vector.multi_reduction <add>, %1, %cst [1] : vector<2x8x32xf32> to vector<2x32xf32>
    %cst_2 = arith.constant 8.000000e+00 : f32
    %3 = vector.broadcast %cst_2 : f32 to vector<2x32xf32>
    %4 = arith.divf %2, %3 : vector<2x32xf32>
    %c0_3 = arith.constant 0 : index
    %c0_4 = arith.constant 0 : index
    %5 = vector.load %arg2[%c0_3, %c0_4] : memref<32x32xbf16, #tpu.memory_space<vmem>>, vector<32x32xbf16>
    %6 = arith.truncf %4 : vector<2x32xf32> to vector<2x32xbf16>
    %cst_5 = arith.constant dense<0.000000e+00> : vector<2x32xf32>
    %7 = tpu.matmul %6, %5, %cst_5 {dimension_numbers = #tpu.dot_dimension_numbers<[1], [0], [0], [1], [0, 0, 1, 1], [], []>} : vector<2x32xbf16>, vector<32x32xbf16>, vector<2x32xf32> -> vector<2x32xf32>
    %c0_6 = arith.constant 0 : index
    %c0_7 = arith.constant 0 : index
    %8 = vector.load %arg3[%c0_6, %c0_7] : memref<1x32xf32, #tpu.memory_space<vmem>>, vector<1x32xf32>
    %9 = vector.broadcast %8 : vector<1x32xf32> to vector<2x32xf32>
    %10 = arith.addf %7, %9 : vector<2x32xf32>
    %c0_8 = arith.constant 0 : index
    %c0_9 = arith.constant 0 : index
    %11 = vector.load %arg4[%c0_8, %c0_9] : memref<32x64xbf16, #tpu.memory_space<vmem>>, vector<32x64xbf16>
    %12 = arith.truncf %10 : vector<2x32xf32> to vector<2x32xbf16>
    %cst_10 = arith.constant dense<0.000000e+00> : vector<2x64xf32>
    %13 = tpu.matmul %12, %11, %cst_10 {dimension_numbers = #tpu.dot_dimension_numbers<[1], [0], [0], [1], [0, 0, 1, 1], [], []>} : vector<2x32xbf16>, vector<32x64xbf16>, vector<2x64xf32> -> vector<2x64xf32>
    %c0_11 = arith.constant 0 : index
    %c0_12 = arith.constant 0 : index
    %14 = vector.load %arg5[%c0_11, %c0_12] : memref<1x64xf32, #tpu.memory_space<vmem>>, vector<1x64xf32>
    %15 = vector.broadcast %14 : vector<1x64xf32> to vector<2x64xf32>
    %16 = arith.addf %13, %15 : vector<2x64xf32>
    %cst_13 = arith.constant 0.000000e+00 : f32
    %17 = vector.broadcast %cst_13 : f32 to vector<2x64xf32>
    %18 = arith.maximumf %16, %17 : vector<2x64xf32>
    %c0_14 = arith.constant 0 : index
    %c0_15 = arith.constant 0 : index
    %19 = vector.load %arg6[%c0_14, %c0_15] : memref<64x128xbf16, #tpu.memory_space<vmem>>, vector<64x128xbf16>
    %20 = arith.truncf %18 : vector<2x64xf32> to vector<2x64xbf16>
    %cst_16 = arith.constant dense<0.000000e+00> : vector<2x128xf32>
    %21 = tpu.matmul %20, %19, %cst_16 {dimension_numbers = #tpu.dot_dimension_numbers<[1], [0], [0], [1], [0, 0, 1, 1], [], []>} : vector<2x64xbf16>, vector<64x128xbf16>, vector<2x128xf32> -> vector<2x128xf32>
    %c0_17 = arith.constant 0 : index
    %c0_18 = arith.constant 0 : index
    %22 = vector.load %arg7[%c0_17, %c0_18] : memref<1x128xf32, #tpu.memory_space<vmem>>, vector<1x128xf32>
    %23 = vector.broadcast %22 : vector<1x128xf32> to vector<2x128xf32>
    %24 = arith.addf %21, %23 : vector<2x128xf32>
    %25 = tpu.iota {dimensions = array<i32: 1>} : vector<2x128xi32>
    %c25_i32 = arith.constant 25 : i32
    %26 = vector.broadcast %c25_i32 : i32 to vector<2x128xi32>
    %27 = arith.cmpi sge, %25, %26 : vector<2x128xi32>
    %c29_i32 = arith.constant 29 : i32
    %28 = vector.broadcast %c29_i32 : i32 to vector<2x128xi32>
    %29 = arith.cmpi slt, %25, %28 : vector<2x128xi32>
    %30 = arith.andi %27, %29 : vector<2x128xi1>
    %cst_19 = arith.constant 0xFF800000 : f32
    %31 = vector.broadcast %cst_19 : f32 to vector<2x128xf32>
    %32 = arith.select %30, %24, %31 : vector<2x128xi1>, vector<2x128xf32>
    %cst_20 = arith.constant dense<0xFF800000> : vector<2xf32>
    %33 = vector.multi_reduction <maximumf>, %32, %cst_20 [1] : vector<2x128xf32> to vector<2xf32>
    %34 = vector.shape_cast %33 : vector<2xf32> to vector<2x1xf32>
    %35 = vector.broadcast %34 : vector<2x1xf32> to vector<2x128xf32>
    %36 = arith.subf %32, %35 : vector<2x128xf32>
    %37 = math.exp %36 : vector<2x128xf32>
    %cst_21 = arith.constant dense<0.000000e+00> : vector<2xf32>
    %38 = vector.multi_reduction <add>, %37, %cst_21 [1] : vector<2x128xf32> to vector<2xf32>
    %39 = vector.shape_cast %38 : vector<2xf32> to vector<2x1xf32>
    %40 = tpu.reciprocal %39 {approx = true} : vector<2x1xf32> -> vector<2x1xf32>
    %41 = vector.broadcast %40 : vector<2x1xf32> to vector<2x128xf32>
    %42 = arith.mulf %37, %41 : vector<2x128xf32>
    %43 = arith.select %30, %42, %24 : vector<2x128xi1>, vector<2x128xf32>
    %c34_i32 = arith.constant 34 : i32
    %44 = vector.broadcast %c34_i32 : i32 to vector<2x128xi32>
    %45 = arith.cmpi sge, %25, %44 : vector<2x128xi32>
    %c37_i32 = arith.constant 37 : i32
    %46 = vector.broadcast %c37_i32 : i32 to vector<2x128xi32>
    %47 = arith.cmpi slt, %25, %46 : vector<2x128xi32>
    %48 = arith.andi %45, %47 : vector<2x128xi1>
    %cst_22 = arith.constant 0xFF800000 : f32
    %49 = vector.broadcast %cst_22 : f32 to vector<2x128xf32>
    %50 = arith.select %48, %43, %49 : vector<2x128xi1>, vector<2x128xf32>
    %cst_23 = arith.constant dense<0xFF800000> : vector<2xf32>
    %51 = vector.multi_reduction <maximumf>, %50, %cst_23 [1] : vector<2x128xf32> to vector<2xf32>
    %52 = vector.shape_cast %51 : vector<2xf32> to vector<2x1xf32>
    %53 = vector.broadcast %52 : vector<2x1xf32> to vector<2x128xf32>
    %54 = arith.subf %50, %53 : vector<2x128xf32>
    %55 = math.exp %54 : vector<2x128xf32>
    %cst_24 = arith.constant dense<0.000000e+00> : vector<2xf32>
    %56 = vector.multi_reduction <add>, %55, %cst_24 [1] : vector<2x128xf32> to vector<2xf32>
    %57 = vector.shape_cast %56 : vector<2xf32> to vector<2x1xf32>
    %58 = tpu.reciprocal %57 {approx = true} : vector<2x1xf32> -> vector<2x1xf32>
    %59 = vector.broadcast %58 : vector<2x1xf32> to vector<2x128xf32>
    %60 = arith.mulf %55, %59 : vector<2x128xf32>
    %61 = arith.select %48, %60, %43 : vector<2x128xi1>, vector<2x128xf32>
    %c29_i32_25 = arith.constant 29 : i32
    %62 = vector.broadcast %c29_i32_25 : i32 to vector<2x128xi32>
    %63 = arith.cmpi sge, %25, %62 : vector<2x128xi32>
    %c34_i32_26 = arith.constant 34 : i32
    %64 = vector.broadcast %c34_i32_26 : i32 to vector<2x128xi32>
    %65 = arith.cmpi slt, %25, %64 : vector<2x128xi32>
    %66 = arith.andi %63, %65 : vector<2x128xi1>
    %cst_27 = arith.constant 0.000000e+00 : f32
    %67 = vector.broadcast %cst_27 : f32 to vector<2x128xf32>
    %68 = arith.maximumf %61, %67 : vector<2x128xf32>
    %69 = arith.select %66, %68, %61 : vector<2x128xi1>, vector<2x128xf32>
    %c38_i32 = arith.constant 38 : i32
    %70 = vector.broadcast %c38_i32 : i32 to vector<2x128xi32>
    %71 = arith.cmpi sge, %25, %70 : vector<2x128xi32>
    %c39_i32 = arith.constant 39 : i32
    %72 = vector.broadcast %c39_i32 : i32 to vector<2x128xi32>
    %73 = arith.cmpi slt, %25, %72 : vector<2x128xi32>
    %74 = arith.andi %71, %73 : vector<2x128xi1>
    %75 = arith.negf %69 : vector<2x128xf32>
    %76 = math.exp %75 : vector<2x128xf32>
    %cst_28 = arith.constant 1.000000e+00 : f32
    %77 = vector.broadcast %cst_28 : f32 to vector<2x128xf32>
    %78 = arith.addf %77, %76 : vector<2x128xf32>
    %79 = arith.divf %77, %78 : vector<2x128xf32>
    %80 = arith.select %74, %79, %69 : vector<2x128xi1>, vector<2x128xf32>
    %c0_29 = arith.constant 0 : index
    %c0_30 = arith.constant 0 : index
    %81 = vector.load %arg8[%c0_29, %c0_30] : memref<2x128xf32, #tpu.memory_space<vmem>>, vector<2x128xf32>
    tpu.vector_store %arg8[%c0_29, %c0_30], %80 {strides = array<i32>} : memref<2x128xf32, #tpu.memory_space<vmem>>, vector<2x128xf32>,
    return
  }
  func.func @transform_0(%arg0: i32) -> (i32, i32, i32) {
    %c0_i32 = arith.constant 0 : i32
    %c0_i32_0 = arith.constant 0 : i32
    %c0_i32_1 = arith.constant 0 : i32
    %c0_i32_2 = arith.constant 0 : i32
    return %c0_i32, %c0_i32_0, %c0_i32_1 : i32, i32, i32
  }
  func.func @transform_1(%arg0: i32) -> (i32, i32) {
    %c0_i32 = arith.constant 0 : i32
    %c0_i32_0 = arith.constant 0 : i32
    %c0_i32_1 = arith.constant 0 : i32
    return %c0_i32, %c0_i32_0 : i32, i32
  }
  func.func @transform_2(%arg0: i32) -> (i32, i32) {
    %c0_i32 = arith.constant 0 : i32
    %c0_i32_0 = arith.constant 0 : i32
    %c0_i32_1 = arith.constant 0 : i32
    return %c0_i32, %c0_i32_0 : i32, i32
  }
  func.func @transform_3(%arg0: i32) -> (i32, i32) {
    %c0_i32 = arith.constant 0 : i32
    %c0_i32_0 = arith.constant 0 : i32
    %c0_i32_1 = arith.constant 0 : i32
    return %c0_i32, %c0_i32_0 : i32, i32
  }
  func.func @transform_4(%arg0: i32) -> (i32, i32) {
    %c0_i32 = arith.constant 0 : i32
    %c0_i32_0 = arith.constant 0 : i32
    %c0_i32_1 = arith.constant 0 : i32
    return %c0_i32, %c0_i32_0 : i32, i32
  }
  func.func @transform_5(%arg0: i32) -> (i32, i32) {
    %c0_i32 = arith.constant 0 : i32
    %c0_i32_0 = arith.constant 0 : i32
    %c0_i32_1 = arith.constant 0 : i32
    return %c0_i32, %c0_i32_0 : i32, i32
  }
  func.func @transform_6(%arg0: i32) -> (i32, i32) {
    %c0_i32 = arith.constant 0 : i32
    %c0_i32_0 = arith.constant 0 : i32
    %c0_i32_1 = arith.constant 0 : i32
    return %c0_i32, %c0_i32_0 : i32, i32
  }
  func.func @transform_7(%arg0: i32) -> (i32, i32) {
    %c0_i32 = arith.constant 0 : i32
    %c0_i32_0 = arith.constant 0 : i32
    %c0_i32_1 = arith.constant 0 : i32
    return %c0_i32, %c0_i32_0 : i32, i32
  }
}

module attributes {stable_mosaic.version = 11 : i64} {
  func.func @_ffn_kernel(%arg0: i32, %arg1: i32, %arg2: memref<8x32xbf16, #tpu.memory_space<vmem>>, %arg3: memref<32x32xbf16, #tpu.memory_space<vmem>>, %arg4: memref<1x32xf32, #tpu.memory_space<vmem>>, %arg5: memref<32x32xbf16, #tpu.memory_space<vmem>>, %arg6: memref<1x32xf32, #tpu.memory_space<vmem>>, %arg7: memref<1x32xf32, #tpu.memory_space<vmem>>, %arg8: memref<1x32xf32, #tpu.memory_space<vmem>>, %arg9: memref<8x32xbf16, #tpu.memory_space<vmem>>, %arg10: memref<8x32xf32, #tpu.memory_space<vmem>>) attributes {dimension_semantics = [#tpu.dimension_semantics<parallel>, #tpu.dimension_semantics<arbitrary>], iteration_bounds = array<i64: 2, 1>, scalar_prefetch = 0 : i64, scratch_operands = 1 : i64, tpu.core_type = #tpu.core_type<tc>, window_params = [{transform_indices = @transform_0, window_bounds = array<i64: 8, 32>}, {pipeline_mode = #tpu.pipeline_mode<synchronous>, transform_indices = @transform_1, window_bounds = array<i64: 32, 32>}, {pipeline_mode = #tpu.pipeline_mode<synchronous>, transform_indices = @transform_2, window_bounds = array<i64: 1, 32>}, {pipeline_mode = #tpu.pipeline_mode<synchronous>, transform_indices = @transform_3, window_bounds = array<i64: 32, 32>}, {pipeline_mode = #tpu.pipeline_mode<synchronous>, transform_indices = @transform_4, window_bounds = array<i64: 1, 32>}, {pipeline_mode = #tpu.pipeline_mode<synchronous>, transform_indices = @transform_5, window_bounds = array<i64: 1, 32>}, {pipeline_mode = #tpu.pipeline_mode<synchronous>, transform_indices = @transform_6, window_bounds = array<i64: 1, 32>}, {transform_indices = @transform_7, window_bounds = array<i64: 8, 32>}]} {
    %c0_i32 = arith.constant 0 : i32
    %0 = arith.cmpi eq, %arg1, %c0_i32 : i32
    %1 = arith.extui %0 : i1 to i32
    %c0_i32_0 = arith.constant 0 : i32
    %2 = arith.cmpi ne, %1, %c0_i32_0 : i32
    scf.if %2 {
      %cst_16 = arith.constant 0.000000e+00 : f32
      %20 = vector.broadcast %cst_16 : f32 to vector<8x32xf32>
      %c0_17 = arith.constant 0 : index
      %c0_18 = arith.constant 0 : index
      %21 = vector.load %arg10[%c0_17, %c0_18] : memref<8x32xf32, #tpu.memory_space<vmem>>, vector<8x32xf32>
      tpu.vector_store %arg10[%c0_17, %c0_18], %20 {strides = array<i32>} : memref<8x32xf32, #tpu.memory_space<vmem>>, vector<8x32xf32>,
    } else {
    }
    %c0 = arith.constant 0 : index
    %c0_1 = arith.constant 0 : index
    %3 = vector.load %arg2[%c0, %c0_1] : memref<8x32xbf16, #tpu.memory_space<vmem>>, vector<8x32xbf16>
    %c0_2 = arith.constant 0 : index
    %c0_3 = arith.constant 0 : index
    %4 = vector.load %arg3[%c0_2, %c0_3] : memref<32x32xbf16, #tpu.memory_space<vmem>>, vector<32x32xbf16>
    %cst = arith.constant dense<0.000000e+00> : vector<8x32xf32>
    %5 = tpu.matmul %3, %4, %cst {dimension_numbers = #tpu.dot_dimension_numbers<[1], [0], [0], [1], [0, 0, 1, 1], [], []>} : vector<8x32xbf16>, vector<32x32xbf16>, vector<8x32xf32> -> vector<8x32xf32>
    %c0_4 = arith.constant 0 : index
    %c0_5 = arith.constant 0 : index
    %6 = vector.load %arg4[%c0_4, %c0_5] : memref<1x32xf32, #tpu.memory_space<vmem>>, vector<1x32xf32>
    %7 = vector.broadcast %6 : vector<1x32xf32> to vector<8x32xf32>
    %8 = arith.addf %5, %7 : vector<8x32xf32>
    %cst_6 = arith.constant 0.000000e+00 : f32
    %9 = vector.broadcast %cst_6 : f32 to vector<8x32xf32>
    %10 = arith.maximumf %8, %9 : vector<8x32xf32>
    %c0_7 = arith.constant 0 : index
    %c0_8 = arith.constant 0 : index
    %11 = vector.load %arg10[%c0_7, %c0_8] : memref<8x32xf32, #tpu.memory_space<vmem>>, vector<8x32xf32>
    %c0_9 = arith.constant 0 : index
    %c0_10 = arith.constant 0 : index
    %12 = vector.load %arg5[%c0_9, %c0_10] : memref<32x32xbf16, #tpu.memory_space<vmem>>, vector<32x32xbf16>
    %13 = arith.truncf %10 : vector<8x32xf32> to vector<8x32xbf16>
    %cst_11 = arith.constant dense<0.000000e+00> : vector<8x32xf32>
    %14 = tpu.matmul %13, %12, %cst_11 {dimension_numbers = #tpu.dot_dimension_numbers<[1], [0], [0], [1], [0, 0, 1, 1], [], []>} : vector<8x32xbf16>, vector<32x32xbf16>, vector<8x32xf32> -> vector<8x32xf32>
    %15 = arith.addf %11, %14 : vector<8x32xf32>
    %c0_12 = arith.constant 0 : index
    %c0_13 = arith.constant 0 : index
    %16 = vector.load %arg10[%c0_12, %c0_13] : memref<8x32xf32, #tpu.memory_space<vmem>>, vector<8x32xf32>
    tpu.vector_store %arg10[%c0_12, %c0_13], %15 {strides = array<i32>} : memref<8x32xf32, #tpu.memory_space<vmem>>, vector<8x32xf32>,
    %c0_i32_14 = arith.constant 0 : i32
    %17 = arith.cmpi eq, %arg1, %c0_i32_14 : i32
    %18 = arith.extui %17 : i1 to i32
    %c0_i32_15 = arith.constant 0 : i32
    %19 = arith.cmpi ne, %18, %c0_i32_15 : i32
    scf.if %19 {
      %c0_16 = arith.constant 0 : index
      %c0_17 = arith.constant 0 : index
      %20 = vector.load %arg10[%c0_16, %c0_17] : memref<8x32xf32, #tpu.memory_space<vmem>>, vector<8x32xf32>
      %c0_18 = arith.constant 0 : index
      %c0_19 = arith.constant 0 : index
      %21 = vector.load %arg6[%c0_18, %c0_19] : memref<1x32xf32, #tpu.memory_space<vmem>>, vector<1x32xf32>
      %22 = vector.broadcast %21 : vector<1x32xf32> to vector<8x32xf32>
      %23 = arith.addf %20, %22 : vector<8x32xf32>
      %c0_20 = arith.constant 0 : index
      %c0_21 = arith.constant 0 : index
      %24 = vector.load %arg2[%c0_20, %c0_21] : memref<8x32xbf16, #tpu.memory_space<vmem>>, vector<8x32xbf16>
      %25 = arith.extf %24 : vector<8x32xbf16> to vector<8x32xf32>
      %26 = arith.addf %23, %25 : vector<8x32xf32>
      %c0_22 = arith.constant 0 : index
      %c0_23 = arith.constant 0 : index
      %27 = vector.load %arg7[%c0_22, %c0_23] : memref<1x32xf32, #tpu.memory_space<vmem>>, vector<1x32xf32>
      %c0_24 = arith.constant 0 : index
      %c0_25 = arith.constant 0 : index
      %28 = vector.load %arg8[%c0_24, %c0_25] : memref<1x32xf32, #tpu.memory_space<vmem>>, vector<1x32xf32>
      %cst_26 = arith.constant dense<0.000000e+00> : vector<8xf32>
      %29 = vector.multi_reduction <add>, %26, %cst_26 [1] : vector<8x32xf32> to vector<8xf32>
      %30 = vector.shape_cast %29 : vector<8xf32> to vector<8x1xf32>
      %cst_27 = arith.constant 3.200000e+01 : f32
      %31 = vector.broadcast %cst_27 : f32 to vector<8x1xf32>
      %32 = arith.divf %30, %31 : vector<8x1xf32>
      %33 = vector.broadcast %32 : vector<8x1xf32> to vector<8x32xf32>
      %34 = arith.subf %26, %33 : vector<8x32xf32>
      %35 = arith.mulf %34, %34 : vector<8x32xf32>
      %cst_28 = arith.constant dense<0.000000e+00> : vector<8xf32>
      %36 = vector.multi_reduction <add>, %35, %cst_28 [1] : vector<8x32xf32> to vector<8xf32>
      %37 = vector.shape_cast %36 : vector<8xf32> to vector<8x1xf32>
      %cst_29 = arith.constant 3.200000e+01 : f32
      %38 = vector.broadcast %cst_29 : f32 to vector<8x1xf32>
      %39 = arith.divf %37, %38 : vector<8x1xf32>
      %40 = vector.broadcast %32 : vector<8x1xf32> to vector<8x32xf32>
      %41 = arith.subf %26, %40 : vector<8x32xf32>
      %cst_30 = arith.constant 9.99999974E-6 : f32
      %42 = vector.broadcast %cst_30 : f32 to vector<8x1xf32>
      %43 = arith.addf %39, %42 : vector<8x1xf32>
      %44 = math.rsqrt %43 : vector<8x1xf32>
      %45 = vector.broadcast %44 : vector<8x1xf32> to vector<8x32xf32>
      %46 = arith.mulf %41, %45 : vector<8x32xf32>
      %47 = vector.broadcast %27 : vector<1x32xf32> to vector<8x32xf32>
      %48 = arith.mulf %46, %47 : vector<8x32xf32>
      %49 = vector.broadcast %28 : vector<1x32xf32> to vector<8x32xf32>
      %50 = arith.addf %48, %49 : vector<8x32xf32>
      %51 = arith.truncf %50 : vector<8x32xf32> to vector<8x32xbf16>
      %c0_31 = arith.constant 0 : index
      %c0_32 = arith.constant 0 : index
      %52 = vector.load %arg9[%c0_31, %c0_32] : memref<8x32xbf16, #tpu.memory_space<vmem>>, vector<8x32xbf16>
      tpu.vector_store %arg9[%c0_31, %c0_32], %51 {strides = array<i32>} : memref<8x32xbf16, #tpu.memory_space<vmem>>, vector<8x32xbf16>,
    } else {
    }
    return
  }
  func.func @transform_0(%arg0: i32, %arg1: i32) -> (i32, i32) {
    %c0_i32 = arith.constant 0 : i32
    %c0_i32_0 = arith.constant 0 : i32
    return %arg0, %c0_i32 : i32, i32
  }
  func.func @transform_1(%arg0: i32, %arg1: i32) -> (i32, i32) {
    %c0_i32 = arith.constant 0 : i32
    %c0_i32_0 = arith.constant 0 : i32
    return %c0_i32, %arg1 : i32, i32
  }
  func.func @transform_2(%arg0: i32, %arg1: i32) -> (i32, i32) {
    %c0_i32 = arith.constant 0 : i32
    %c0_i32_0 = arith.constant 0 : i32
    return %c0_i32, %arg1 : i32, i32
  }
  func.func @transform_3(%arg0: i32, %arg1: i32) -> (i32, i32) {
    %c0_i32 = arith.constant 0 : i32
    %c0_i32_0 = arith.constant 0 : i32
    return %arg1, %c0_i32 : i32, i32
  }
  func.func @transform_4(%arg0: i32, %arg1: i32) -> (i32, i32) {
    %c0_i32 = arith.constant 0 : i32
    %c0_i32_0 = arith.constant 0 : i32
    %c0_i32_1 = arith.constant 0 : i32
    return %c0_i32, %c0_i32_0 : i32, i32
  }
  func.func @transform_5(%arg0: i32, %arg1: i32) -> (i32, i32) {
    %c0_i32 = arith.constant 0 : i32
    %c0_i32_0 = arith.constant 0 : i32
    %c0_i32_1 = arith.constant 0 : i32
    return %c0_i32, %c0_i32_0 : i32, i32
  }
  func.func @transform_6(%arg0: i32, %arg1: i32) -> (i32, i32) {
    %c0_i32 = arith.constant 0 : i32
    %c0_i32_0 = arith.constant 0 : i32
    %c0_i32_1 = arith.constant 0 : i32
    return %c0_i32, %c0_i32_0 : i32, i32
  }
  func.func @transform_7(%arg0: i32, %arg1: i32) -> (i32, i32) {
    %c0_i32 = arith.constant 0 : i32
    %c0_i32_0 = arith.constant 0 : i32
    return %arg0, %c0_i32 : i32, i32
  }
}

</mosaic_0001>

<llo_original>
// kernel: world_model_forward.11
$region0: #{world_model_forward.11}
  #allocation0 [shape = 'u32[]', space=smem, size = 0x4, offset = 0x4, fixed_abs, tag = 'smem constant byte address 0x4 - core index']
  #allocation1 [shape = 'u32[144,128]{1,0:T(1,128)}', space=vmem, size = 0x12000, scoped, tag = 'internal scratch']
  %s0 = inlined_call_operand.vmem [shape: bf16[16,32], index: 0, kind: input, shape index: {}]
  %s1 = inlined_call_operand.vmem [shape: bf16[32,96], index: 1, kind: input, shape index: {}]
  %s2 = inlined_call_operand.vmem [shape: f32[1,96], index: 2, kind: input, shape index: {}]
  %s3 = inlined_call_operand.vmem [shape: bf16[16,96], index: 3, kind: output, shape index: {}]
  %s4 = sld [smem:[#allocation0]]
  $region45: #{world_model_forward.11} parent=0
    _
  %s6 = ssub.s32 1, %s4
  %s7 = scalar_select 0, %s6, %s4
  loop: start=0, step=1, limit=4
  $region2: #{world_model_forward.11} parent=0 // loop_pre_header
    _
  $region3: #{world_model_forward.11} parent=0 // loop_header
    %s9 = sphi 0, %s13
    %p10 = scmp.ge.s32.totalorder %s9, 4
    %s16 = sphi 0, %s28
    %s17 = sphi 0, %s24
    %s18 = sphi 0, %s16
    %s19 = sphi 0, %s17
    %s20 = sphi 0, %s18
    %s21 = sphi 0, %s19
    %s31 = sphi 0, %s33
    %s34 = sphi 0, %s31
    %s35 = sphi 0, %s34
    %s51 = sphi 0, %s35
    %s57 = sphi 0, %s59
    %s60 = sphi 0, %s57
    %s61 = sphi 0, %s60
    %s77 = sphi 0, %s61
    %s83 = sphi 0, %s85
    %s86 = sphi 0, %s83
    %s87 = sphi 0, %s86
    %s103 = sphi 0, %s87
    %s111 = sphi 0, %s113
    %s114 = sphi 0, %s111
    %s115 = sphi 0, %s114
    %s131 = sphi 0, %s115
  $region4: #{world_model_forward.11} parent=0 // loop_header_branch
    %12 = sbr.rel (%p10) target = $region8
  $region5: #{world_model_forward.11} parent=0 // loop_body
    %s14 = ssub.s32 %s9, 1
    %s15 = ssub.s32 %s9, 2
    %s22 = sadd.s32 1, %s17
    %p23 = scmp.ge.s32.totalorder %s22, 1
    %s24 = scalar_select %p23, 0, %s22
    %s25 = sadd.s32 1, %s16
    %s26 = scalar_select %p23, %s25, %s16
    %p27 = scmp.ge.s32.totalorder %s26, 2
    %s28 = scalar_select %p27, 0, %s26
    %s29 = ssub.s32 %s16, %s28
    %p30 = scmp.eq.s32.totalorder %s29, 0
    %s32 = sadd.s32 %s31, 1
    %s33 = scalar_select %p30, %s31, %s32
    %p36 = pneg %p30
    %p37 = scmp.eq.s32.totalorder %s9, 1
    %p38 = por %p36, %p37
    %p39 = scmp.ne.s32.totalorder %s31, %s34
    %p40 = scmp.eq.s32.totalorder %s9, 0
    %p41 = por %p39, %p40
    %p42 = scmp.ne.s32.totalorder %s31, %s34
    %p43 = scmp.eq.s32.totalorder %s14, 1
    %p44 = por %p42, %p43
    %p45 = scmp.ne.s32.totalorder %s34, %s35
    %p46 = scmp.eq.s32.totalorder %s14, 0
    %p47 = por %p45, %p46
    %p48 = scmp.ne.s32.totalorder %s34, %s35
    %p49 = scmp.eq.s32.totalorder %s15, 1
    %p50 = por %p48, %p49
    %p52 = scmp.ne.s32.totalorder %s35, %s51
    %p53 = scmp.eq.s32.totalorder %s15, 0
    %p54 = por %p52, %p53
    %s55 = ssub.s32 %s17, %s24
    %p56 = scmp.eq.s32.totalorder %s55, 0
    %s58 = sadd.s32 %s57, 1
    %s59 = scalar_select %p56, %s57, %s58
    %p62 = pneg %p56
    %p63 = scmp.eq.s32.totalorder %s9, 1
    %p64 = por %p62, %p63
    %p65 = scmp.ne.s32.totalorder %s57, %s60
    %p66 = scmp.eq.s32.totalorder %s9, 0
    %p67 = por %p65, %p66
    %p68 = scmp.ne.s32.totalorder %s57, %s60
    %p69 = scmp.eq.s32.totalorder %s14, 1
    %p70 = por %p68, %p69
    %p71 = scmp.ne.s32.totalorder %s60, %s61
    %p72 = scmp.eq.s32.totalorder %s14, 0
    %p73 = por %p71, %p72
    %p74 = scmp.ne.s32.totalorder %s60, %s61
    %p75 = scmp.eq.s32.totalorder %s15, 1
    %p76 = por %p74, %p75
    %p78 = scmp.ne.s32.totalorder %s61, %s77
    %p79 = scmp.eq.s32.totalorder %s15, 0
    %p80 = por %p78, %p79
    %s81 = ssub.s32 %s17, %s24
    %p82 = scmp.eq.s32.totalorder %s81, 0
    %s84 = sadd.s32 %s83, 1
    %s85 = scalar_select %p82, %s83, %s84
    %p88 = pneg %p82
    %p89 = scmp.eq.s32.totalorder %s9, 1
    %p90 = por %p88, %p89
    %p91 = scmp.ne.s32.totalorder %s83, %s86
    %p92 = scmp.eq.s32.totalorder %s9, 0
    %p93 = por %p91, %p92
    %p94 = scmp.ne.s32.totalorder %s83, %s86
    %p95 = scmp.eq.s32.totalorder %s14, 1
    %p96 = por %p94, %p95
    %p97 = scmp.ne.s32.totalorder %s86, %s87
    %p98 = scmp.eq.s32.totalorder %s14, 0
    %p99 = por %p97, %p98
    %p100 = scmp.ne.s32.totalorder %s86, %s87
    %p101 = scmp.eq.s32.totalorder %s15, 1
    %p102 = por %p100, %p101
    %p104 = scmp.ne.s32.totalorder %s87, %s103
    %p105 = scmp.eq.s32.totalorder %s15, 0
    %p106 = por %p104, %p105
    %s107 = ssub.s32 %s16, %s28
    %s108 = ssub.s32 %s17, %s24
    %s109 = sor.u32 %s107, %s108
    %p110 = scmp.eq.s32.totalorder %s109, 0
    %s112 = sadd.s32 %s111, 1
    %s113 = scalar_select %p110, %s111, %s112
    %p116 = pneg %p110
    %p117 = scmp.eq.s32.totalorder %s9, 1
    %p118 = por %p116, %p117
    %p119 = scmp.ne.s32.totalorder %s111, %s114
    %p120 = scmp.eq.s32.totalorder %s9, 0
    %p121 = por %p119, %p120
    %p122 = scmp.ne.s32.totalorder %s111, %s114
    %p123 = scmp.eq.s32.totalorder %s14, 1
    %p124 = por %p122, %p123
    %p125 = scmp.ne.s32.totalorder %s114, %s115
    %p126 = scmp.eq.s32.totalorder %s14, 0
    %p127 = por %p125, %p126
    %p128 = scmp.ne.s32.totalorder %s114, %s115
    %p129 = scmp.eq.s32.totalorder %s15, 1
    %p130 = por %p128, %p129
    %p132 = scmp.ne.s32.totalorder %s115, %s131
    %p133 = scmp.eq.s32.totalorder %s15, 0
    %p134 = por %p132, %p133
    %p135 = scmp.le.s32.totalorder 1, %s9
    %p136 = scmp.lt.s32.totalorder %s9, 3
    %p137 = pnand %p135, %p136
    %p138 = pneg %p137
    // Predicated region
    $region9: #{world_model_forward.11} parent=5 // pred_check
      _
    $region10: #{world_model_forward.11} parent=5 // pred_check_branch
      %140 = sbr.rel (%p137) target = $region12
    $region11: #{world_model_forward.11} parent=5 // pred_region
      %s141 = ssub.s32 %s9, 1
      // Predicated region
      $region13: #{world_model_forward.11} parent=11 // pred_check
        %p142 = pneg %p73
      $region14: #{world_model_forward.11} parent=11 // pred_check_branch
        %144 = sbr.rel (%p142) target = $region16
      $region15: #{world_model_forward.11} parent=11 // pred_region
        %p145 = scmp.lt.s32.totalorder %s19, 0
        %s146 = scalar_select %p145, %s19, 0
        %s147 = smul.addr %s146, 4
        %s148 = scalar_lea.vmem %s1, %s147
      $region16: #{world_model_forward.11} parent=11 // pred_fallthru
        _
      // Predicated region
      $region17: #{world_model_forward.11} parent=11 // pred_check
        %p149 = pneg %p99
      $region18: #{world_model_forward.11} parent=11 // pred_check_branch
        %151 = sbr.rel (%p149) target = $region20
      $region19: #{world_model_forward.11} parent=11 // pred_region
        %p152 = scmp.lt.s32.totalorder %s19, 0
        %s153 = scalar_select %p152, %s19, 0
        %s154 = scalar_lea.vmem %s2, %s153
      $region20: #{world_model_forward.11} parent=11 // pred_fallthru
        _
    $region12: #{world_model_forward.11} parent=5 // pred_fallthru
      _
    %p155 = scmp.lt.s32.totalorder %s9, 2
    // Predicated region
    $region21: #{world_model_forward.11} parent=5 // pred_check
      %p156 = pneg %p155
    $region22: #{world_model_forward.11} parent=5 // pred_check_branch
      %158 = sbr.rel (%p156) target = $region24
    $region23: #{world_model_forward.11} parent=5 // pred_region
      // Predicated region
      $region25: #{world_model_forward.11} parent=23 // pred_check
        %p159 = pneg %p41
      $region26: #{world_model_forward.11} parent=23 // pred_check_branch
        %161 = sbr.rel (%p159) target = $region28
      $region27: #{world_model_forward.11} parent=23 // pred_region
        %p162 = scmp.lt.s32.totalorder %s16, 1
        %s163 = scalar_select %p162, %s16, 1
        %s164 = smul.addr %s163, 4
        %s165 = scalar_lea.vmem %s0, %s164
      $region28: #{world_model_forward.11} parent=23 // pred_fallthru
        _
    $region24: #{world_model_forward.11} parent=5 // pred_fallthru
      _
    %p166 = scmp.le.s32.totalorder 1, %s9
    %p167 = scmp.lt.s32.totalorder %s9, 3
    %p168 = pnand %p166, %p167
    %p169 = pneg %p168
    // Predicated region
    $region29: #{world_model_forward.11} parent=5 // pred_check
      _
    $region30: #{world_model_forward.11} parent=5 // pred_check_branch
      %171 = sbr.rel (%p168) target = $region32
    $region31: #{world_model_forward.11} parent=5 // pred_region
      %s172 = ssub.s32 %s9, 1
      %p173 = scmp.lt.s32.totalorder %s18, 1
      %s174 = scalar_select %p173, %s18, 1
      %s175 = smul.addr %s174, 4
      %s176 = scalar_lea.vmem %s0, %s175
      %p177 = pneg %p47
      %p178 = pneg %p44
      %p179 = scmp.lt.s32.totalorder %s19, 0
      %s180 = scalar_select %p179, %s19, 0
      %s181 = smul.addr %s180, 4
      %s182 = scalar_lea.vmem %s1, %s181
      %p183 = pneg %p73
      %p184 = pneg %p70
      %p185 = scmp.lt.s32.totalorder %s19, 0
      %s186 = scalar_select %p185, %s19, 0
      %s187 = scalar_lea.vmem %s2, %s186
      %p188 = pneg %p99
      %p189 = pneg %p96
      %p190 = pneg %p127
      %p191 = pneg %p124
      %p192 = scmp.lt.s32.totalorder %s18, 1
      %s193 = scalar_select %p192, %s18, 1
      %p194 = scmp.lt.s32.totalorder %s19, 0
      %s195 = scalar_select %p194, %s19, 0
      %s196 = sadd.s32 %s195, %s193
      %s197 = smul.addr %s196, 4
      %s198 = scalar_lea.vmem %s3, %s197
      %p199 = scmp.lt.s32.totalorder %s18, 1
      %s200 = scalar_select %p199, %s18, 1
      %s201 = smul.addr %s200, 4
      %s202 = scalar_lea.vmem %s0, %s201
      %p203 = scmp.lt.s32.totalorder %s19, 0
      %s204 = scalar_select %p203, %s19, 0
      %s205 = smul.addr %s204, 4
      %s206 = scalar_lea.vmem %s1, %s205
      %p207 = scmp.lt.s32.totalorder %s19, 0
      %s208 = scalar_select %p207, %s19, 0
      %s209 = scalar_lea.vmem %s2, %s208
      %p210 = scmp.lt.s32.totalorder %s18, 1
      %s211 = scalar_select %p210, %s18, 1
      %p212 = scmp.lt.s32.totalorder %s19, 0
      %s213 = scalar_select %p212, %s19, 0
      %s214 = sadd.s32 %s213, %s211
      %s215 = smul.addr %s214, 4
      %s216 = scalar_lea.vmem %s3, %s215
      %v218 = vld [vmem:[%s202] sm:$0xf]
      %v219 = vld [vmem:[%s206] sm:$0xf]
      %v220 = vld [vmem:[%s206 + $0x4] sm:$0xf]
      %v221 = vld [vmem:[%s206 + $0x8] sm:$0xf]
      %v222 = vld [vmem:[%s206 + $0xc] sm:$0xf]
      %v223 = vld [vmem:[%s209] sm:$0x1]
      %v225 = vlaneseq
      %v226 = vshrl.u32 %v225, 7
      %v227 = vsub.s32 0, %v226
      %v228 = vrot.slane %v223, %v227
      %v234 = vunpack.c.l.b16 %v219
      %v235 = vunpack.c.l.b16 %v220
      %v236 = vunpack.c.l.b16 %v221
      %v237 = vunpack.c.l.b16 %v222
      %v238 = vpack.c.b16 %v235, %v234
      %v239 = vpack.c.b16 %v237, %v236
      %vm242 = vcmask 261120
      %v244 = vsel %vm242, %v218, 0
      %246 = vmatprep.subr.bf16.mxu0 0
      %247 = vmatpush1.bf16.msra.mxu0 %v238
      %248 = vmatprep.subr.bf16.mxu0 0
      %249 = vmatpush1.bf16.msra.mxu0 %v239
      %250 = vmatprep.subr.bf16.mxu0 0
      %251 = vmatpush1.bf16.msra.mxu0 0
      %252 = vmatprep.subr.bf16.mxu0 0
      %253 = vmatpush1.bf16.msra.mxu0 0
      %254 = vmatprep.subr.bf16.mxu0 0
      %255 = vmatpush1.bf16.msra.mxu0 0
      %256 = vmatprep.subr.bf16.mxu0 0
      %257 = vmatpush1.bf16.msra.mxu0 0
      %258 = vmatprep.subr.bf16.mxu0 0
      %259 = vmatpush1.bf16.msra.mxu0 0
      %260 = vmatprep.subr.bf16.mxu0 0
      %261 = vmatpush1.bf16.msra.mxu0 0
      %262 = vmatprep.subr.bf16.mxu0 0
      %263 = vmatpush1.bf16.msra.mxu0 0
      %264 = vmatprep.subr.bf16.mxu0 0
      %265 = vmatpush1.bf16.msra.mxu0 0
      %266 = vmatprep.subr.bf16.mxu0 0
      %267 = vmatpush1.bf16.msra.mxu0 0
      %268 = vmatprep.subr.bf16.mxu0 0
      %269 = vmatpush1.bf16.msra.mxu0 0
      %270 = vmatprep.subr.bf16.mxu0 0
      %271 = vmatpush1.bf16.msra.mxu0 0
      %272 = vmatprep.subr.bf16.mxu0 0
      %273 = vmatpush1.bf16.msra.mxu0 0
      %274 = vmatprep.subr.bf16.mxu0 0
      %275 = vmatpush1.bf16.msra.mxu0 0
      %276 = vmatprep.subr.bf16.mxu0 0
      %277 = vmatpush1.bf16.msra.mxu0 0
      %278 = vmatprep.mubr.bf16.mxu0 0
      %279 = vmatmul.mubr.bf16.gmra.mrb[0].mxu0 %v244
      %v280 = vpop.f32.mrb[0].mxu0
      %v281 = vadd.f32 %v228, %v280
      %v282 = vpop.f32.mrb[0].mxu0
      %v283 = vpop.f32.mrb[0].mxu0
      %v284 = vpop.f32.mrb[0].mxu0
      %285 = vdwg.mxu0
      %v286 = vpack.c.bf16 %v281, %v281
      %vm287 = vcmask 781312
      %288 = vst.msk [vmem:[%s216] sm:$0xf] %vm287, %v286
      %p289 = scmp.lt.s32.totalorder %s18, 1
      %s290 = scalar_select %p289, %s18, 1
      %p291 = scmp.lt.s32.totalorder %s19, 0
      %s292 = scalar_select %p291, %s19, 0
      %s293 = sadd.s32 %s292, %s290
      %s294 = smul.addr %s293, 4
      %s295 = scalar_lea.vmem %s3, %s294
      // Predicated region
      $region33: #{world_model_forward.11} parent=31 // pred_check
        %p296 = pneg %p124
      $region34: #{world_model_forward.11} parent=31 // pred_check_branch
        %298 = sbr.rel (%p296) target = $region36
      $region35: #{world_model_forward.11} parent=31 // pred_region
        _
      $region36: #{world_model_forward.11} parent=31 // pred_fallthru
        _
    $region32: #{world_model_forward.11} parent=5 // pred_fallthru
      _
    %p299 = scmp.le.s32.totalorder 2, %s9
    // Predicated region
    $region37: #{world_model_forward.11} parent=5 // pred_check
      %p300 = pneg %p299
    $region38: #{world_model_forward.11} parent=5 // pred_check_branch
      %302 = sbr.rel (%p300) target = $region40
    $region39: #{world_model_forward.11} parent=5 // pred_region
      %s303 = ssub.s32 %s9, 2
      // Predicated region
      $region41: #{world_model_forward.11} parent=39 // pred_check
        %p304 = pneg %p130
      $region42: #{world_model_forward.11} parent=39 // pred_check_branch
        %306 = sbr.rel (%p304) target = $region44
      $region43: #{world_model_forward.11} parent=39 // pred_region
        %p307 = scmp.lt.s32.totalorder %s20, 1
        %s308 = scalar_select %p307, %s20, 1
        %p309 = scmp.lt.s32.totalorder %s21, 0
        %s310 = scalar_select %p309, %s21, 0
        %s311 = sadd.s32 %s310, %s308
        %s312 = smul.addr %s311, 4
        %s313 = scalar_lea.vmem %s3, %s312
      $region44: #{world_model_forward.11} parent=39 // pred_fallthru
        _
    $region40: #{world_model_forward.11} parent=5 // pred_fallthru
      _
  $region6: #{world_model_forward.11} parent=0 // loop_footer
    %s13 = sadd.s32 1, %s9
  $region7: #{world_model_forward.11} parent=0 // loop_footer_branch
    %8 = sbr.rel target = $region3
  $region8: #{world_model_forward.11} parent=0 // loop_exit
    _

// kernel: world_model_forward.13
$region0: #{world_model_forward.13}
  #allocation0 [shape = 'u32[]', space=smem, size = 0x4, offset = 0x4, fixed_abs, tag = 'smem constant byte address 0x4 - core index']
  #allocation1 [shape = 'u32[144,128]{1,0:T(1,128)}', space=vmem, size = 0x12000, scoped, tag = 'internal scratch']
  %s0 = inlined_call_operand.vmem [shape: bf16[16,32], index: 0, kind: input, shape index: {}]
  %s1 = inlined_call_operand.vmem [shape: bf16[32,32], index: 1, kind: input, shape index: {}]
  %s2 = inlined_call_operand.vmem [shape: f32[1,32], index: 2, kind: input, shape index: {}]
  %s3 = inlined_call_operand.vmem [shape: bf16[16,32], index: 3, kind: input, shape index: {}]
  %s4 = inlined_call_operand.vmem [shape: f32[1,32], index: 4, kind: input, shape index: {}]
  %s5 = inlined_call_operand.vmem [shape: f32[1,32], index: 5, kind: input, shape index: {}]
  %s6 = inlined_call_operand.vmem [shape: bf16[16,32], index: 6, kind: output, shape index: {}]
  %s7 = sld [smem:[#allocation0]]
  $region57: #{world_model_forward.13} parent=0
    _
  %s9 = ssub.s32 1, %s7
  %s10 = scalar_select 0, %s9, %s7
  loop: start=0, step=1, limit=4
  $region2: #{world_model_forward.13} parent=0 // loop_pre_header
    _
  $region3: #{world_model_forward.13} parent=0 // loop_header
    %s12 = sphi 0, %s16
    %p13 = scmp.ge.s32.totalorder %s12, 4
    %s19 = sphi 0, %s31
    %s20 = sphi 0, %s27
    %s21 = sphi 0, %s19
    %s22 = sphi 0, %s20
    %s23 = sphi 0, %s21
    %s24 = sphi 0, %s22
    %s34 = sphi 0, %s36
    %s37 = sphi 0, %s34
    %s38 = sphi 0, %s37
    %s54 = sphi 0, %s38
    %s60 = sphi 0, %s62
    %s63 = sphi 0, %s60
    %s64 = sphi 0, %s63
    %s80 = sphi 0, %s64
    %s86 = sphi 0, %s88
    %s89 = sphi 0, %s86
    %s90 = sphi 0, %s89
    %s106 = sphi 0, %s90
    %s114 = sphi 0, %s116
    %s117 = sphi 0, %s114
    %s118 = sphi 0, %s117
    %s134 = sphi 0, %s118
    %s138 = sphi 0, %s138
    %s140 = sphi 0, %s138
    %s141 = sphi 0, %s140
    %s155 = sphi 0, %s141
    %s159 = sphi 0, %s159
    %s161 = sphi 0, %s159
    %s162 = sphi 0, %s161
    %s176 = sphi 0, %s162
    %s184 = sphi 0, %s186
    %s187 = sphi 0, %s184
    %s188 = sphi 0, %s187
    %s204 = sphi 0, %s188
  $region4: #{world_model_forward.13} parent=0 // loop_header_branch
    %15 = sbr.rel (%p13) target = $region8
  $region5: #{world_model_forward.13} parent=0 // loop_body
    %s17 = ssub.s32 %s12, 1
    %s18 = ssub.s32 %s12, 2
    %s25 = sadd.s32 1, %s20
    %p26 = scmp.ge.s32.totalorder %s25, 1
    %s27 = scalar_select %p26, 0, %s25
    %s28 = sadd.s32 1, %s19
    %s29 = scalar_select %p26, %s28, %s19
    %p30 = scmp.ge.s32.totalorder %s29, 2
    %s31 = scalar_select %p30, 0, %s29
    %s32 = ssub.s32 %s19, %s31
    %p33 = scmp.eq.s32.totalorder %s32, 0
    %s35 = sadd.s32 %s34, 1
    %s36 = scalar_select %p33, %s34, %s35
    %p39 = pneg %p33
    %p40 = scmp.eq.s32.totalorder %s12, 1
    %p41 = por %p39, %p40
    %p42 = scmp.ne.s32.totalorder %s34, %s37
    %p43 = scmp.eq.s32.totalorder %s12, 0
    %p44 = por %p42, %p43
    %p45 = scmp.ne.s32.totalorder %s34, %s37
    %p46 = scmp.eq.s32.totalorder %s17, 1
    %p47 = por %p45, %p46
    %p48 = scmp.ne.s32.totalorder %s37, %s38
    %p49 = scmp.eq.s32.totalorder %s17, 0
    %p50 = por %p48, %p49
    %p51 = scmp.ne.s32.totalorder %s37, %s38
    %p52 = scmp.eq.s32.totalorder %s18, 1
    %p53 = por %p51, %p52
    %p55 = scmp.ne.s32.totalorder %s38, %s54
    %p56 = scmp.eq.s32.totalorder %s18, 0
    %p57 = por %p55, %p56
    %s58 = ssub.s32 %s20, %s27
    %p59 = scmp.eq.s32.totalorder %s58, 0
    %s61 = sadd.s32 %s60, 1
    %s62 = scalar_select %p59, %s60, %s61
    %p65 = pneg %p59
    %p66 = scmp.eq.s32.totalorder %s12, 1
    %p67 = por %p65, %p66
    %p68 = scmp.ne.s32.totalorder %s60, %s63
    %p69 = scmp.eq.s32.totalorder %s12, 0
    %p70 = por %p68, %p69
    %p71 = scmp.ne.s32.totalorder %s60, %s63
    %p72 = scmp.eq.s32.totalorder %s17, 1
    %p73 = por %p71, %p72
    %p74 = scmp.ne.s32.totalorder %s63, %s64
    %p75 = scmp.eq.s32.totalorder %s17, 0
    %p76 = por %p74, %p75
    %p77 = scmp.ne.s32.totalorder %s63, %s64
    %p78 = scmp.eq.s32.totalorder %s18, 1
    %p79 = por %p77, %p78
    %p81 = scmp.ne.s32.totalorder %s64, %s80
    %p82 = scmp.eq.s32.totalorder %s18, 0
    %p83 = por %p81, %p82
    %s84 = ssub.s32 %s20, %s27
    %p85 = scmp.eq.s32.totalorder %s84, 0
    %s87 = sadd.s32 %s86, 1
    %s88 = scalar_select %p85, %s86, %s87
    %p91 = pneg %p85
    %p92 = scmp.eq.s32.totalorder %s12, 1
    %p93 = por %p91, %p92
    %p94 = scmp.ne.s32.totalorder %s86, %s89
    %p95 = scmp.eq.s32.totalorder %s12, 0
    %p96 = por %p94, %p95
    %p97 = scmp.ne.s32.totalorder %s86, %s89
    %p98 = scmp.eq.s32.totalorder %s17, 1
    %p99 = por %p97, %p98
    %p100 = scmp.ne.s32.totalorder %s89, %s90
    %p101 = scmp.eq.s32.totalorder %s17, 0
    %p102 = por %p100, %p101
    %p103 = scmp.ne.s32.totalorder %s89, %s90
    %p104 = scmp.eq.s32.totalorder %s18, 1
    %p105 = por %p103, %p104
    %p107 = scmp.ne.s32.totalorder %s90, %s106
    %p108 = scmp.eq.s32.totalorder %s18, 0
    %p109 = por %p107, %p108
    %s110 = ssub.s32 %s19, %s31
    %s111 = ssub.s32 %s20, %s27
    %s112 = sor.u32 %s110, %s111
    %p113 = scmp.eq.s32.totalorder %s112, 0
    %s115 = sadd.s32 %s114, 1
    %s116 = scalar_select %p113, %s114, %s115
    %p119 = pneg %p113
    %p120 = scmp.eq.s32.totalorder %s12, 1
    %p121 = por %p119, %p120
    %p122 = scmp.ne.s32.totalorder %s114, %s117
    %p123 = scmp.eq.s32.totalorder %s12, 0
    %p124 = por %p122, %p123
    %p125 = scmp.ne.s32.totalorder %s114, %s117
    %p126 = scmp.eq.s32.totalorder %s17, 1
    %p127 = por %p125, %p126
    %p128 = scmp.ne.s32.totalorder %s117, %s118
    %p129 = scmp.eq.s32.totalorder %s17, 0
    %p130 = por %p128, %p129
    %p131 = scmp.ne.s32.totalorder %s117, %s118
    %p132 = scmp.eq.s32.totalorder %s18, 1
    %p133 = por %p131, %p132
    %p135 = scmp.ne.s32.totalorder %s118, %s134
    %p136 = scmp.eq.s32.totalorder %s18, 0
    %p137 = por %p135, %p136
    %s139 = sadd.s32 %s138, 1
    %p142 = scmp.eq.s32.totalorder %s12, 1
    %p143 = scmp.ne.s32.totalorder %s138, %s140
    %p144 = scmp.eq.s32.totalorder %s12, 0
    %p145 = por %p143, %p144
    %p146 = scmp.ne.s32.totalorder %s138, %s140
    %p147 = scmp.eq.s32.totalorder %s17, 1
    %p148 = por %p146, %p147
    %p149 = scmp.ne.s32.totalorder %s140, %s141
    %p150 = scmp.eq.s32.totalorder %s17, 0
    %p151 = por %p149, %p150
    %p152 = scmp.ne.s32.totalorder %s140, %s141
    %p153 = scmp.eq.s32.totalorder %s18, 1
    %p154 = por %p152, %p153
    %p156 = scmp.ne.s32.totalorder %s141, %s155
    %p157 = scmp.eq.s32.totalorder %s18, 0
    %p158 = por %p156, %p157
    %s160 = sadd.s32 %s159, 1
    %p163 = scmp.eq.s32.totalorder %s12, 1
    %p164 = scmp.ne.s32.totalorder %s159, %s161
    %p165 = scmp.eq.s32.totalorder %s12, 0
    %p166 = por %p164, %p165
    %p167 = scmp.ne.s32.totalorder %s159, %s161
    %p168 = scmp.eq.s32.totalorder %s17, 1
    %p169 = por %p167, %p168
    %p170 = scmp.ne.s32.totalorder %s161, %s162
    %p171 = scmp.eq.s32.totalorder %s17, 0
    %p172 = por %p170, %p171
    %p173 = scmp.ne.s32.totalorder %s161, %s162
    %p174 = scmp.eq.s32.totalorder %s18, 1
    %p175 = por %p173, %p174
    %p177 = scmp.ne.s32.totalorder %s162, %s176
    %p178 = scmp.eq.s32.totalorder %s18, 0
    %p179 = por %p177, %p178
    %s180 = ssub.s32 %s19, %s31
    %s181 = ssub.s32 %s20, %s27
    %s182 = sor.u32 %s180, %s181
    %p183 = scmp.eq.s32.totalorder %s182, 0
    %s185 = sadd.s32 %s184, 1
    %s186 = scalar_select %p183, %s184, %s185
    %p189 = pneg %p183
    %p190 = scmp.eq.s32.totalorder %s12, 1
    %p191 = por %p189, %p190
    %p192 = scmp.ne.s32.totalorder %s184, %s187
    %p193 = scmp.eq.s32.totalorder %s12, 0
    %p194 = por %p192, %p193
    %p195 = scmp.ne.s32.totalorder %s184, %s187
    %p196 = scmp.eq.s32.totalorder %s17, 1
    %p197 = por %p195, %p196
    %p198 = scmp.ne.s32.totalorder %s187, %s188
    %p199 = scmp.eq.s32.totalorder %s17, 0
    %p200 = por %p198, %p199
    %p201 = scmp.ne.s32.totalorder %s187, %s188
    %p202 = scmp.eq.s32.totalorder %s18, 1
    %p203 = por %p201, %p202
    %p205 = scmp.ne.s32.totalorder %s188, %s204
    %p206 = scmp.eq.s32.totalorder %s18, 0
    %p207 = por %p205, %p206
    %p208 = scmp.le.s32.totalorder 1, %s12
    %p209 = scmp.lt.s32.totalorder %s12, 3
    %p210 = pnand %p208, %p209
    %p211 = pneg %p210
    // Predicated region
    $region9: #{world_model_forward.13} parent=5 // pred_check
      _
    $region10: #{world_model_forward.13} parent=5 // pred_check_branch
      %213 = sbr.rel (%p210) target = $region12
    $region11: #{world_model_forward.13} parent=5 // pred_region
      %s214 = ssub.s32 %s12, 1
      // Predicated region
      $region13: #{world_model_forward.13} parent=11 // pred_check
        %p215 = pneg %p76
      $region14: #{world_model_forward.13} parent=11 // pred_check_branch
        %217 = sbr.rel (%p215) target = $region16
      $region15: #{world_model_forward.13} parent=11 // pred_region
        %p218 = scmp.lt.s32.totalorder %s22, 0
        %s219 = scalar_select %p218, %s22, 0
        %s220 = smul.addr %s219, 4
        %s221 = scalar_lea.vmem %s1, %s220
      $region16: #{world_model_forward.13} parent=11 // pred_fallthru
        _
      // Predicated region
      $region17: #{world_model_forward.13} parent=11 // pred_check
        %p222 = pneg %p102
      $region18: #{world_model_forward.13} parent=11 // pred_check_branch
        %224 = sbr.rel (%p222) target = $region20
      $region19: #{world_model_forward.13} parent=11 // pred_region
        %p225 = scmp.lt.s32.totalorder %s22, 0
        %s226 = scalar_select %p225, %s22, 0
        %s227 = scalar_lea.vmem %s2, %s226
      $region20: #{world_model_forward.13} parent=11 // pred_fallthru
        _
      // Predicated region
      $region21: #{world_model_forward.13} parent=11 // pred_check
        %p228 = pneg %p151
      $region22: #{world_model_forward.13} parent=11 // pred_check_branch
        %230 = sbr.rel (%p228) target = $region24
      $region23: #{world_model_forward.13} parent=11 // pred_region
        _
      $region24: #{world_model_forward.13} parent=11 // pred_fallthru
        _
      // Predicated region
      $region25: #{world_model_forward.13} parent=11 // pred_check
        %p231 = pneg %p172
      $region26: #{world_model_forward.13} parent=11 // pred_check_branch
        %233 = sbr.rel (%p231) target = $region28
      $region27: #{world_model_forward.13} parent=11 // pred_region
        _
      $region28: #{world_model_forward.13} parent=11 // pred_fallthru
        _
    $region12: #{world_model_forward.13} parent=5 // pred_fallthru
      _
    %p234 = scmp.lt.s32.totalorder %s12, 2
    // Predicated region
    $region29: #{world_model_forward.13} parent=5 // pred_check
      %p235 = pneg %p234
    $region30: #{world_model_forward.13} parent=5 // pred_check_branch
      %237 = sbr.rel (%p235) target = $region32
    $region31: #{world_model_forward.13} parent=5 // pred_region
      // Predicated region
      $region33: #{world_model_forward.13} parent=31 // pred_check
        %p238 = pneg %p44
      $region34: #{world_model_forward.13} parent=31 // pred_check_branch
        %240 = sbr.rel (%p238) target = $region36
      $region35: #{world_model_forward.13} parent=31 // pred_region
        %p241 = scmp.lt.s32.totalorder %s19, 1
        %s242 = scalar_select %p241, %s19, 1
        %s243 = smul.addr %s242, 4
        %s244 = scalar_lea.vmem %s0, %s243
      $region36: #{world_model_forward.13} parent=31 // pred_fallthru
        _
      // Predicated region
      $region37: #{world_model_forward.13} parent=31 // pred_check
        %p245 = pneg %p124
      $region38: #{world_model_forward.13} parent=31 // pred_check_branch
        %247 = sbr.rel (%p245) target = $region40
      $region39: #{world_model_forward.13} parent=31 // pred_region
        %p248 = scmp.lt.s32.totalorder %s19, 1
        %s249 = scalar_select %p248, %s19, 1
        %p250 = scmp.lt.s32.totalorder %s20, 0
        %s251 = scalar_select %p250, %s20, 0
        %s252 = sadd.s32 %s251, %s249
        %s253 = smul.addr %s252, 4
        %s254 = scalar_lea.vmem %s3, %s253
      $region40: #{world_model_forward.13} parent=31 // pred_fallthru
        _
    $region32: #{world_model_forward.13} parent=5 // pred_fallthru
      _
    %p255 = scmp.le.s32.totalorder 1, %s12
    %p256 = scmp.lt.s32.totalorder %s12, 3
    %p257 = pnand %p255, %p256
    %p258 = pneg %p257
    // Predicated region
    $region41: #{world_model_forward.13} parent=5 // pred_check
      _
    $region42: #{world_model_forward.13} parent=5 // pred_check_branch
      %260 = sbr.rel (%p257) target = $region44
    $region43: #{world_model_forward.13} parent=5 // pred_region
      %s261 = ssub.s32 %s12, 1
      %p262 = scmp.lt.s32.totalorder %s21, 1
      %s263 = scalar_select %p262, %s21, 1
      %s264 = smul.addr %s263, 4
      %s265 = scalar_lea.vmem %s0, %s264
      %p266 = pneg %p50
      %p267 = pneg %p47
      %p268 = scmp.lt.s32.totalorder %s22, 0
      %s269 = scalar_select %p268, %s22, 0
      %s270 = smul.addr %s269, 4
      %s271 = scalar_lea.vmem %s1, %s270
      %p272 = pneg %p76
      %p273 = pneg %p73
      %p274 = scmp.lt.s32.totalorder %s22, 0
      %s275 = scalar_select %p274, %s22, 0
      %s276 = scalar_lea.vmem %s2, %s275
      %p277 = pneg %p102
      %p278 = pneg %p99
      %p279 = scmp.lt.s32.totalorder %s21, 1
      %s280 = scalar_select %p279, %s21, 1
      %p281 = scmp.lt.s32.totalorder %s22, 0
      %s282 = scalar_select %p281, %s22, 0
      %s283 = sadd.s32 %s282, %s280
      %s284 = smul.addr %s283, 4
      %s285 = scalar_lea.vmem %s3, %s284
      %p286 = pneg %p130
      %p287 = pneg %p127
      %p288 = pneg %p151
      %p289 = pneg %p148
      %p290 = pneg %p172
      %p291 = pneg %p169
      %p292 = pneg %p200
      %p293 = pneg %p197
      %p294 = scmp.lt.s32.totalorder %s21, 1
      %s295 = scalar_select %p294, %s21, 1
      %p296 = scmp.lt.s32.totalorder %s22, 0
      %s297 = scalar_select %p296, %s22, 0
      %s298 = sadd.s32 %s297, %s295
      %s299 = smul.addr %s298, 4
      %s300 = scalar_lea.vmem %s6, %s299
      %p301 = scmp.lt.s32.totalorder %s21, 1
      %s302 = scalar_select %p301, %s21, 1
      %s303 = smul.addr %s302, 4
      %s304 = scalar_lea.vmem %s0, %s303
      %p305 = scmp.lt.s32.totalorder %s22, 0
      %s306 = scalar_select %p305, %s22, 0
      %s307 = smul.addr %s306, 4
      %s308 = scalar_lea.vmem %s1, %s307
      %p309 = scmp.lt.s32.totalorder %s22, 0
      %s310 = scalar_select %p309, %s22, 0
      %s311 = scalar_lea.vmem %s2, %s310
      %p312 = scmp.lt.s32.totalorder %s21, 1
      %s313 = scalar_select %p312, %s21, 1
      %p314 = scmp.lt.s32.totalorder %s22, 0
      %s315 = scalar_select %p314, %s22, 0
      %s316 = sadd.s32 %s315, %s313
      %s317 = smul.addr %s316, 4
      %s318 = scalar_lea.vmem %s3, %s317
      %p319 = scmp.lt.s32.totalorder %s21, 1
      %s320 = scalar_select %p319, %s21, 1
      %p321 = scmp.lt.s32.totalorder %s22, 0
      %s322 = scalar_select %p321, %s22, 0
      %s323 = sadd.s32 %s322, %s320
      %s324 = smul.addr %s323, 4
      %s325 = scalar_lea.vmem %s6, %s324
      %v327 = vld [vmem:[%s304] sm:$0xf]
      %v328 = vld [vmem:[%s308] sm:$0xf]
      %v329 = vld [vmem:[%s308 + $0x4] sm:$0xf]
      %v330 = vld [vmem:[%s308 + $0x8] sm:$0xf]
      %v331 = vld [vmem:[%s308 + $0xc] sm:$0xf]
      %v332 = vld [vmem:[%s311] sm:$0x1]
      %v334 = vlaneseq
      %v335 = vshrl.u32 %v334, 7
      %v336 = vsub.s32 0, %v335
      %v337 = vrot.slane %v332, %v336
      %v343 = vunpack.c.l.b16 %v328
      %v344 = vunpack.c.l.b16 %v329
      %v345 = vunpack.c.l.b16 %v330
      %v346 = vunpack.c.l.b16 %v331
      %v347 = vpack.c.b16 %v344, %v343
      %v348 = vpack.c.b16 %v346, %v345
      %vm351 = vcmask 261120
      %v353 = vsel %vm351, %v327, 0
      %355 = vmatprep.subr.bf16.mxu0 0
      %356 = vmatpush1.bf16.msra.mxu0 %v347
      %357 = vmatprep.subr.bf16.mxu0 0
      %358 = vmatpush1.bf16.msra.mxu0 %v348
      %359 = vmatprep.subr.bf16.mxu0 0
      %360 = vmatpush1.bf16.msra.mxu0 0
      %361 = vmatprep.subr.bf16.mxu0 0
      %362 = vmatpush1.bf16.msra.mxu0 0
      %363 = vmatprep.subr.bf16.mxu0 0
      %364 = vmatpush1.bf16.msra.mxu0 0
      %365 = vmatprep.subr.bf16.mxu0 0
      %366 = vmatpush1.bf16.msra.mxu0 0
      %367 = vmatprep.subr.bf16.mxu0 0
      %368 = vmatpush1.bf16.msra.mxu0 0
      %369 = vmatprep.subr.bf16.mxu0 0
      %370 = vmatpush1.bf16.msra.mxu0 0
      %371 = vmatprep.subr.bf16.mxu0 0
      %372 = vmatpush1.bf16.msra.mxu0 0
      %373 = vmatprep.subr.bf16.mxu0 0
      %374 = vmatpush1.bf16.msra.mxu0 0
      %375 = vmatprep.subr.bf16.mxu0 0
      %376 = vmatpush1.bf16.msra.mxu0 0
      %377 = vmatprep.subr.bf16.mxu0 0
      %378 = vmatpush1.bf16.msra.mxu0 0
      %379 = vmatprep.subr.bf16.mxu0 0
      %380 = vmatpush1.bf16.msra.mxu0 0
      %381 = vmatprep.subr.bf16.mxu0 0
      %382 = vmatpush1.bf16.msra.mxu0 0
      %383 = vmatprep.subr.bf16.mxu0 0
      %384 = vmatpush1.bf16.msra.mxu0 0
      %385 = vmatprep.subr.bf16.mxu0 0
      %386 = vmatpush1.bf16.msra.mxu0 0
      %387 = vmatprep.mubr.bf16.mxu0 0
      %388 = vmatmul.mubr.bf16.gmra.mrb[0].mxu0 %v353
      %v389 = vpop.f32.mrb[0].mxu0
      %v390 = vadd.f32 %v337, %v389
      %v391 = vpop.f32.mrb[0].mxu0
      %v392 = vpop.f32.mrb[0].mxu0
      %v393 = vpop.f32.mrb[0].mxu0
      %394 = vdwg.mxu0
      %v395 = vld [vmem:[%s318] sm:$0xf]
      %v396 = vunpack.c.l.bf16 %v395
      %v397 = vadd.f32 %v390, %v396
      %v398 = vld [vmem:[%s4] sm:$0x1]
      %v399 = vld [vmem:[%s5] sm:$0x1]
      %v400 = vsel %vm351, %v397, 0.0
      %401 = vadd.xlane.f32.xlu0 %v400
      %v402 = vpop.xlane.xlu0 %401
      %v403 = vrcp.pop 32.0
      %v404 = vmul.f32 %v402, %v403
      %v405 = vsub.f32 %v397, %v404
      %v406 = vmul.f32 %v405, %v405
      %v407 = vsel %vm351, %v406, 0.0
      %408 = vadd.xlane.f32.xlu0 %v407
      %v409 = vpop.xlane.xlu0 %408
      %v410 = vmul.f32 %v409, %v403
      %v411 = vadd.f32 %v410, 1e-05
      %v412 = vrsqrt.pop %v411
      %v413 = vmul.f32 %v405, %v412
      %v415 = vlaneseq
      %v416 = vshrl.u32 %v415, 7
      %v417 = vsub.s32 0, %v416
      %v418 = vrot.slane %v398, %v417
      %v420 = vmul.f32 %v413, %v418
      %v422 = vlaneseq
      %v423 = vshrl.u32 %v422, 7
      %v424 = vsub.s32 0, %v423
      %v425 = vrot.slane %v399, %v424
      %v427 = vadd.f32 %v420, %v425
      %v428 = vpack.c.bf16 %v427, %v427
      %vm429 = vcmask 257024
      %430 = vst.msk [vmem:[%s325] sm:$0xf] %vm429, %v428
      %p431 = scmp.lt.s32.totalorder %s21, 1
      %s432 = scalar_select %p431, %s21, 1
      %p433 = scmp.lt.s32.totalorder %s22, 0
      %s434 = scalar_select %p433, %s22, 0
      %s435 = sadd.s32 %s434, %s432
      %s436 = smul.addr %s435, 4
      %s437 = scalar_lea.vmem %s6, %s436
      // Predicated region
      $region45: #{world_model_forward.13} parent=43 // pred_check
        %p438 = pneg %p197
      $region46: #{world_model_forward.13} parent=43 // pred_check_branch
        %440 = sbr.rel (%p438) target = $region48
      $region47: #{world_model_forward.13} parent=43 // pred_region
        _
      $region48: #{world_model_forward.13} parent=43 // pred_fallthru
        _
    $region44: #{world_model_forward.13} parent=5 // pred_fallthru
      _
    %p441 = scmp.le.s32.totalorder 2, %s12
    // Predicated region
    $region49: #{world_model_forward.13} parent=5 // pred_check
      %p442 = pneg %p441
    $region50: #{world_model_forward.13} parent=5 // pred_check_branch
      %444 = sbr.rel (%p442) target = $region52
    $region51: #{world_model_forward.13} parent=5 // pred_region
      %s445 = ssub.s32 %s12, 2
      // Predicated region
      $region53: #{world_model_forward.13} parent=51 // pred_check
        %p446 = pneg %p203
      $region54: #{world_model_forward.13} parent=51 // pred_check_branch
        %448 = sbr.rel (%p446) target = $region56
      $region55: #{world_model_forward.13} parent=51 // pred_region
        %p449 = scmp.lt.s32.totalorder %s23, 1
        %s450 = scalar_select %p449, %s23, 1
        %p451 = scmp.lt.s32.totalorder %s24, 0
        %s452 = scalar_select %p451, %s24, 0
        %s453 = sadd.s32 %s452, %s450
        %s454 = smul.addr %s453, 4
        %s455 = scalar_lea.vmem %s6, %s454
      $region56: #{world_model_forward.13} parent=51 // pred_fallthru
        _
    $region52: #{world_model_forward.13} parent=5 // pred_fallthru
      _
  $region6: #{world_model_forward.13} parent=0 // loop_footer
    %s16 = sadd.s32 1, %s12
  $region7: #{world_model_forward.13} parent=0 // loop_footer_branch
    %11 = sbr.rel target = $region3
  $region8: #{world_model_forward.13} parent=0 // loop_exit
    _

// kernel: world_model_forward.10
$region0: #{world_model_forward.10}
  #allocation0 [shape = 'u32[]', space=smem, size = 0x4, offset = 0x4, fixed_abs, tag = 'smem constant byte address 0x4 - core index']
  #allocation1 [shape = 'u32[144,128]{1,0:T(1,128)}', space=vmem, size = 0x12000, scoped, tag = 'internal scratch']
  %s0 = inlined_call_operand.vmem [shape: f32[16,16], index: 0, kind: input, shape index: {}]
  %s1 = inlined_call_operand.vmem [shape: bf16[16,32], index: 1, kind: input, shape index: {}]
  %s2 = inlined_call_operand.vmem [shape: f32[1,32], index: 2, kind: input, shape index: {}]
  %s3 = inlined_call_operand.vmem [shape: f32[16,32], index: 3, kind: input, shape index: {}]
  %s4 = inlined_call_operand.vmem [shape: bf16[16,32], index: 4, kind: output, shape index: {}]
  %s5 = sld [smem:[#allocation0]]
  $region49: #{world_model_forward.10} parent=0
    _
  %s7 = ssub.s32 1, %s5
  %s8 = scalar_select 0, %s7, %s5
  loop: start=0, step=1, limit=4
  $region2: #{world_model_forward.10} parent=0 // loop_pre_header
    _
  $region3: #{world_model_forward.10} parent=0 // loop_header
    %s10 = sphi 0, %s14
    %p11 = scmp.ge.s32.totalorder %s10, 4
    %s17 = sphi 0, %s29
    %s18 = sphi 0, %s25
    %s19 = sphi 0, %s17
    %s20 = sphi 0, %s18
    %s21 = sphi 0, %s19
    %s22 = sphi 0, %s20
    %s32 = sphi 0, %s34
    %s35 = sphi 0, %s32
    %s36 = sphi 0, %s35
    %s52 = sphi 0, %s36
    %s58 = sphi 0, %s60
    %s61 = sphi 0, %s58
    %s62 = sphi 0, %s61
    %s78 = sphi 0, %s62
    %s84 = sphi 0, %s86
    %s87 = sphi 0, %s84
    %s88 = sphi 0, %s87
    %s104 = sphi 0, %s88
    %s112 = sphi 0, %s114
    %s115 = sphi 0, %s112
    %s116 = sphi 0, %s115
    %s132 = sphi 0, %s116
    %s140 = sphi 0, %s142
    %s143 = sphi 0, %s140
    %s144 = sphi 0, %s143
    %s160 = sphi 0, %s144
  $region4: #{world_model_forward.10} parent=0 // loop_header_branch
    %13 = sbr.rel (%p11) target = $region8
  $region5: #{world_model_forward.10} parent=0 // loop_body
    %s15 = ssub.s32 %s10, 1
    %s16 = ssub.s32 %s10, 2
    %s23 = sadd.s32 1, %s18
    %p24 = scmp.ge.s32.totalorder %s23, 1
    %s25 = scalar_select %p24, 0, %s23
    %s26 = sadd.s32 1, %s17
    %s27 = scalar_select %p24, %s26, %s17
    %p28 = scmp.ge.s32.totalorder %s27, 2
    %s29 = scalar_select %p28, 0, %s27
    %s30 = ssub.s32 %s17, %s29
    %p31 = scmp.eq.s32.totalorder %s30, 0
    %s33 = sadd.s32 %s32, 1
    %s34 = scalar_select %p31, %s32, %s33
    %p37 = pneg %p31
    %p38 = scmp.eq.s32.totalorder %s10, 1
    %p39 = por %p37, %p38
    %p40 = scmp.ne.s32.totalorder %s32, %s35
    %p41 = scmp.eq.s32.totalorder %s10, 0
    %p42 = por %p40, %p41
    %p43 = scmp.ne.s32.totalorder %s32, %s35
    %p44 = scmp.eq.s32.totalorder %s15, 1
    %p45 = por %p43, %p44
    %p46 = scmp.ne.s32.totalorder %s35, %s36
    %p47 = scmp.eq.s32.totalorder %s15, 0
    %p48 = por %p46, %p47
    %p49 = scmp.ne.s32.totalorder %s35, %s36
    %p50 = scmp.eq.s32.totalorder %s16, 1
    %p51 = por %p49, %p50
    %p53 = scmp.ne.s32.totalorder %s36, %s52
    %p54 = scmp.eq.s32.totalorder %s16, 0
    %p55 = por %p53, %p54
    %s56 = ssub.s32 %s18, %s25
    %p57 = scmp.eq.s32.totalorder %s56, 0
    %s59 = sadd.s32 %s58, 1
    %s60 = scalar_select %p57, %s58, %s59
    %p63 = pneg %p57
    %p64 = scmp.eq.s32.totalorder %s10, 1
    %p65 = por %p63, %p64
    %p66 = scmp.ne.s32.totalorder %s58, %s61
    %p67 = scmp.eq.s32.totalorder %s10, 0
    %p68 = por %p66, %p67
    %p69 = scmp.ne.s32.totalorder %s58, %s61
    %p70 = scmp.eq.s32.totalorder %s15, 1
    %p71 = por %p69, %p70
    %p72 = scmp.ne.s32.totalorder %s61, %s62
    %p73 = scmp.eq.s32.totalorder %s15, 0
    %p74 = por %p72, %p73
    %p75 = scmp.ne.s32.totalorder %s61, %s62
    %p76 = scmp.eq.s32.totalorder %s16, 1
    %p77 = por %p75, %p76
    %p79 = scmp.ne.s32.totalorder %s62, %s78
    %p80 = scmp.eq.s32.totalorder %s16, 0
    %p81 = por %p79, %p80
    %s82 = ssub.s32 %s18, %s25
    %p83 = scmp.eq.s32.totalorder %s82, 0
    %s85 = sadd.s32 %s84, 1
    %s86 = scalar_select %p83, %s84, %s85
    %p89 = pneg %p83
    %p90 = scmp.eq.s32.totalorder %s10, 1
    %p91 = por %p89, %p90
    %p92 = scmp.ne.s32.totalorder %s84, %s87
    %p93 = scmp.eq.s32.totalorder %s10, 0
    %p94 = por %p92, %p93
    %p95 = scmp.ne.s32.totalorder %s84, %s87
    %p96 = scmp.eq.s32.totalorder %s15, 1
    %p97 = por %p95, %p96
    %p98 = scmp.ne.s32.totalorder %s87, %s88
    %p99 = scmp.eq.s32.totalorder %s15, 0
    %p100 = por %p98, %p99
    %p101 = scmp.ne.s32.totalorder %s87, %s88
    %p102 = scmp.eq.s32.totalorder %s16, 1
    %p103 = por %p101, %p102
    %p105 = scmp.ne.s32.totalorder %s88, %s104
    %p106 = scmp.eq.s32.totalorder %s16, 0
    %p107 = por %p105, %p106
    %s108 = ssub.s32 %s17, %s29
    %s109 = ssub.s32 %s18, %s25
    %s110 = sor.u32 %s108, %s109
    %p111 = scmp.eq.s32.totalorder %s110, 0
    %s113 = sadd.s32 %s112, 1
    %s114 = scalar_select %p111, %s112, %s113
    %p117 = pneg %p111
    %p118 = scmp.eq.s32.totalorder %s10, 1
    %p119 = por %p117, %p118
    %p120 = scmp.ne.s32.totalorder %s112, %s115
    %p121 = scmp.eq.s32.totalorder %s10, 0
    %p122 = por %p120, %p121
    %p123 = scmp.ne.s32.totalorder %s112, %s115
    %p124 = scmp.eq.s32.totalorder %s15, 1
    %p125 = por %p123, %p124
    %p126 = scmp.ne.s32.totalorder %s115, %s116
    %p127 = scmp.eq.s32.totalorder %s15, 0
    %p128 = por %p126, %p127
    %p129 = scmp.ne.s32.totalorder %s115, %s116
    %p130 = scmp.eq.s32.totalorder %s16, 1
    %p131 = por %p129, %p130
    %p133 = scmp.ne.s32.totalorder %s116, %s132
    %p134 = scmp.eq.s32.totalorder %s16, 0
    %p135 = por %p133, %p134
    %s136 = ssub.s32 %s17, %s29
    %s137 = ssub.s32 %s18, %s25
    %s138 = sor.u32 %s136, %s137
    %p139 = scmp.eq.s32.totalorder %s138, 0
    %s141 = sadd.s32 %s140, 1
    %s142 = scalar_select %p139, %s140, %s141
    %p145 = pneg %p139
    %p146 = scmp.eq.s32.totalorder %s10, 1
    %p147 = por %p145, %p146
    %p148 = scmp.ne.s32.totalorder %s140, %s143
    %p149 = scmp.eq.s32.totalorder %s10, 0
    %p150 = por %p148, %p149
    %p151 = scmp.ne.s32.totalorder %s140, %s143
    %p152 = scmp.eq.s32.totalorder %s15, 1
    %p153 = por %p151, %p152
    %p154 = scmp.ne.s32.totalorder %s143, %s144
    %p155 = scmp.eq.s32.totalorder %s15, 0
    %p156 = por %p154, %p155
    %p157 = scmp.ne.s32.totalorder %s143, %s144
    %p158 = scmp.eq.s32.totalorder %s16, 1
    %p159 = por %p157, %p158
    %p161 = scmp.ne.s32.totalorder %s144, %s160
    %p162 = scmp.eq.s32.totalorder %s16, 0
    %p163 = por %p161, %p162
    %p164 = scmp.le.s32.totalorder 1, %s10
    %p165 = scmp.lt.s32.totalorder %s10, 3
    %p166 = pnand %p164, %p165
    %p167 = pneg %p166
    // Predicated region
    $region9: #{world_model_forward.10} parent=5 // pred_check
      _
    $region10: #{world_model_forward.10} parent=5 // pred_check_branch
      %169 = sbr.rel (%p166) target = $region12
    $region11: #{world_model_forward.10} parent=5 // pred_region
      %s170 = ssub.s32 %s10, 1
      // Predicated region
      $region13: #{world_model_forward.10} parent=11 // pred_check
        %p171 = pneg %p74
      $region14: #{world_model_forward.10} parent=11 // pred_check_branch
        %173 = sbr.rel (%p171) target = $region16
      $region15: #{world_model_forward.10} parent=11 // pred_region
        %p174 = scmp.lt.s32.totalorder %s20, 0
        %s175 = scalar_select %p174, %s20, 0
        %s176 = smul.addr %s175, 4
        %s177 = scalar_lea.vmem %s1, %s176
      $region16: #{world_model_forward.10} parent=11 // pred_fallthru
        _
      // Predicated region
      $region17: #{world_model_forward.10} parent=11 // pred_check
        %p178 = pneg %p100
      $region18: #{world_model_forward.10} parent=11 // pred_check_branch
        %180 = sbr.rel (%p178) target = $region20
      $region19: #{world_model_forward.10} parent=11 // pred_region
        %p181 = scmp.lt.s32.totalorder %s20, 0
        %s182 = scalar_select %p181, %s20, 0
        %s183 = scalar_lea.vmem %s2, %s182
      $region20: #{world_model_forward.10} parent=11 // pred_fallthru
        _
    $region12: #{world_model_forward.10} parent=5 // pred_fallthru
      _
    %p184 = scmp.lt.s32.totalorder %s10, 2
    // Predicated region
    $region21: #{world_model_forward.10} parent=5 // pred_check
      %p185 = pneg %p184
    $region22: #{world_model_forward.10} parent=5 // pred_check_branch
      %187 = sbr.rel (%p185) target = $region24
    $region23: #{world_model_forward.10} parent=5 // pred_region
      // Predicated region
      $region25: #{world_model_forward.10} parent=23 // pred_check
        %p188 = pneg %p42
      $region26: #{world_model_forward.10} parent=23 // pred_check_branch
        %190 = sbr.rel (%p188) target = $region28
      $region27: #{world_model_forward.10} parent=23 // pred_region
        %p191 = scmp.lt.s32.totalorder %s17, 1
        %s192 = scalar_select %p191, %s17, 1
        %s193 = smul.addr %s192, 8
        %s194 = scalar_lea.vmem %s0, %s193
      $region28: #{world_model_forward.10} parent=23 // pred_fallthru
        _
      // Predicated region
      $region29: #{world_model_forward.10} parent=23 // pred_check
        %p195 = pneg %p122
      $region30: #{world_model_forward.10} parent=23 // pred_check_branch
        %197 = sbr.rel (%p195) target = $region32
      $region31: #{world_model_forward.10} parent=23 // pred_region
        %p198 = scmp.lt.s32.totalorder %s17, 1
        %s199 = scalar_select %p198, %s17, 1
        %p200 = scmp.lt.s32.totalorder %s18, 0
        %s201 = scalar_select %p200, %s18, 0
        %s202 = sadd.s32 %s201, %s199
        %s203 = smul.addr %s202, 8
        %s204 = scalar_lea.vmem %s3, %s203
      $region32: #{world_model_forward.10} parent=23 // pred_fallthru
        _
    $region24: #{world_model_forward.10} parent=5 // pred_fallthru
      _
    %p205 = scmp.le.s32.totalorder 1, %s10
    %p206 = scmp.lt.s32.totalorder %s10, 3
    %p207 = pnand %p205, %p206
    %p208 = pneg %p207
    // Predicated region
    $region33: #{world_model_forward.10} parent=5 // pred_check
      _
    $region34: #{world_model_forward.10} parent=5 // pred_check_branch
      %210 = sbr.rel (%p207) target = $region36
    $region35: #{world_model_forward.10} parent=5 // pred_region
      %s211 = ssub.s32 %s10, 1
      %p212 = scmp.lt.s32.totalorder %s19, 1
      %s213 = scalar_select %p212, %s19, 1
      %s214 = smul.addr %s213, 8
      %s215 = scalar_lea.vmem %s0, %s214
      %p216 = pneg %p48
      %p217 = pneg %p45
      %p218 = scmp.lt.s32.totalorder %s20, 0
      %s219 = scalar_select %p218, %s20, 0
      %s220 = smul.addr %s219, 4
      %s221 = scalar_lea.vmem %s1, %s220
      %p222 = pneg %p74
      %p223 = pneg %p71
      %p224 = scmp.lt.s32.totalorder %s20, 0
      %s225 = scalar_select %p224, %s20, 0
      %s226 = scalar_lea.vmem %s2, %s225
      %p227 = pneg %p100
      %p228 = pneg %p97
      %p229 = scmp.lt.s32.totalorder %s19, 1
      %s230 = scalar_select %p229, %s19, 1
      %p231 = scmp.lt.s32.totalorder %s20, 0
      %s232 = scalar_select %p231, %s20, 0
      %s233 = sadd.s32 %s232, %s230
      %s234 = smul.addr %s233, 8
      %s235 = scalar_lea.vmem %s3, %s234
      %p236 = pneg %p128
      %p237 = pneg %p125
      %p238 = pneg %p156
      %p239 = pneg %p153
      %p240 = scmp.lt.s32.totalorder %s19, 1
      %s241 = scalar_select %p240, %s19, 1
      %p242 = scmp.lt.s32.totalorder %s20, 0
      %s243 = scalar_select %p242, %s20, 0
      %s244 = sadd.s32 %s243, %s241
      %s245 = smul.addr %s244, 4
      %s246 = scalar_lea.vmem %s4, %s245
      %p247 = scmp.lt.s32.totalorder %s19, 1
      %s248 = scalar_select %p247, %s19, 1
      %s249 = smul.addr %s248, 8
      %s250 = scalar_lea.vmem %s0, %s249
      %p251 = scmp.lt.s32.totalorder %s20, 0
      %s252 = scalar_select %p251, %s20, 0
      %s253 = smul.addr %s252, 4
      %s254 = scalar_lea.vmem %s1, %s253
      %p255 = scmp.lt.s32.totalorder %s20, 0
      %s256 = scalar_select %p255, %s20, 0
      %s257 = scalar_lea.vmem %s2, %s256
      %p258 = scmp.lt.s32.totalorder %s19, 1
      %s259 = scalar_select %p258, %s19, 1
      %p260 = scmp.lt.s32.totalorder %s20, 0
      %s261 = scalar_select %p260, %s20, 0
      %s262 = sadd.s32 %s261, %s259
      %s263 = smul.addr %s262, 8
      %s264 = scalar_lea.vmem %s3, %s263
      %p265 = scmp.lt.s32.totalorder %s19, 1
      %s266 = scalar_select %p265, %s19, 1
      %p267 = scmp.lt.s32.totalorder %s20, 0
      %s268 = scalar_select %p267, %s20, 0
      %s269 = sadd.s32 %s268, %s266
      %s270 = smul.addr %s269, 4
      %s271 = scalar_lea.vmem %s4, %s270
      %v273 = vld [vmem:[%s250] sm:$0xff]
      %v274 = vld [vmem:[%s254] sm:$0xf]
      %v275 = vld [vmem:[%s254 + $0x4] sm:$0xf]
      %v276 = vpack.c.bf16 %v273, %v273
      %v277 = vld [vmem:[%s257] sm:$0x1]
      %v279 = vlaneseq
      %v280 = vshrl.u32 %v279, 7
      %v281 = vsub.s32 0, %v280
      %v282 = vrot.slane %v277, %v281
      %v286 = vunpack.c.l.b16 %v274
      %v287 = vunpack.c.l.b16 %v275
      %v288 = vpack.c.b16 %v287, %v286
      %vm290 = vcmask 130048
      %v292 = vsel %vm290, %v276, 0
      %294 = vmatprep.subr.bf16.mxu0 0
      %295 = vmatpush1.bf16.msra.mxu0 %v288
      %296 = vmatprep.subr.bf16.mxu0 0
      %297 = vmatpush1.bf16.msra.mxu0 0
      %298 = vmatprep.subr.bf16.mxu0 0
      %299 = vmatpush1.bf16.msra.mxu0 0
      %300 = vmatprep.subr.bf16.mxu0 0
      %301 = vmatpush1.bf16.msra.mxu0 0
      %302 = vmatprep.subr.bf16.mxu0 0
      %303 = vmatpush1.bf16.msra.mxu0 0
      %304 = vmatprep.subr.bf16.mxu0 0
      %305 = vmatpush1.bf16.msra.mxu0 0
      %306 = vmatprep.subr.bf16.mxu0 0
      %307 = vmatpush1.bf16.msra.mxu0 0
      %308 = vmatprep.subr.bf16.mxu0 0
      %309 = vmatpush1.bf16.msra.mxu0 0
      %310 = vmatprep.subr.bf16.mxu0 0
      %311 = vmatpush1.bf16.msra.mxu0 0
      %312 = vmatprep.subr.bf16.mxu0 0
      %313 = vmatpush1.bf16.msra.mxu0 0
      %314 = vmatprep.subr.bf16.mxu0 0
      %315 = vmatpush1.bf16.msra.mxu0 0
      %316 = vmatprep.subr.bf16.mxu0 0
      %317 = vmatpush1.bf16.msra.mxu0 0
      %318 = vmatprep.subr.bf16.mxu0 0
      %319 = vmatpush1.bf16.msra.mxu0 0
      %320 = vmatprep.subr.bf16.mxu0 0
      %321 = vmatpush1.bf16.msra.mxu0 0
      %322 = vmatprep.subr.bf16.mxu0 0
      %323 = vmatpush1.bf16.msra.mxu0 0
      %324 = vmatprep.subr.bf16.mxu0 0
      %325 = vmatpush1.bf16.msra.mxu0 0
      %326 = vmatprep.mubr.bf16.mxu0 0
      %327 = vmatmul.mubr.bf16.gmra.mrb[0].mxu0 %v292
      %v328 = vpop.f32.mrb[0].mxu0
      %v329 = vadd.f32 %v282, %v328
      %v330 = vpop.f32.mrb[0].mxu0
      %v331 = vpop.f32.mrb[0].mxu0
      %v332 = vpop.f32.mrb[0].mxu0
      %333 = vdwg.mxu0
      %v334 = vld [vmem:[%s264] sm:$0xff]
      %v335 = vadd.f32 %v329, %v334
      %v336 = vpack.c.bf16 %v335, %v335
      %vm337 = vcmask 257024
      %338 = vst.msk [vmem:[%s271] sm:$0xf] %vm337, %v336
      %p339 = scmp.lt.s32.totalorder %s19, 1
      %s340 = scalar_select %p339, %s19, 1
      %p341 = scmp.lt.s32.totalorder %s20, 0
      %s342 = scalar_select %p341, %s20, 0
      %s343 = sadd.s32 %s342, %s340
      %s344 = smul.addr %s343, 4
      %s345 = scalar_lea.vmem %s4, %s344
      // Predicated region
      $region37: #{world_model_forward.10} parent=35 // pred_check
        %p346 = pneg %p153
      $region38: #{world_model_forward.10} parent=35 // pred_check_branch
        %348 = sbr.rel (%p346) target = $region40
      $region39: #{world_model_forward.10} parent=35 // pred_region
        _
      $region40: #{world_model_forward.10} parent=35 // pred_fallthru
        _
    $region36: #{world_model_forward.10} parent=5 // pred_fallthru
      _
    %p349 = scmp.le.s32.totalorder 2, %s10
    // Predicated region
    $region41: #{world_model_forward.10} parent=5 // pred_check
      %p350 = pneg %p349
    $region42: #{world_model_forward.10} parent=5 // pred_check_branch
      %352 = sbr.rel (%p350) target = $region44
    $region43: #{world_model_forward.10} parent=5 // pred_region
      %s353 = ssub.s32 %s10, 2
      // Predicated region
      $region45: #{world_model_forward.10} parent=43 // pred_check
        %p354 = pneg %p159
      $region46: #{world_model_forward.10} parent=43 // pred_check_branch
        %356 = sbr.rel (%p354) target = $region48
      $region47: #{world_model_forward.10} parent=43 // pred_region
        %p357 = scmp.lt.s32.totalorder %s21, 1
        %s358 = scalar_select %p357, %s21, 1
        %p359 = scmp.lt.s32.totalorder %s22, 0
        %s360 = scalar_select %p359, %s22, 0
        %s361 = sadd.s32 %s360, %s358
        %s362 = smul.addr %s361, 4
        %s363 = scalar_lea.vmem %s4, %s362
      $region48: #{world_model_forward.10} parent=43 // pred_fallthru
        _
    $region44: #{world_model_forward.10} parent=5 // pred_fallthru
      _
  $region6: #{world_model_forward.10} parent=0 // loop_footer
    %s14 = sadd.s32 1, %s10
  $region7: #{world_model_forward.10} parent=0 // loop_footer_branch
    %9 = sbr.rel target = $region3
  $region8: #{world_model_forward.10} parent=0 // loop_exit
    _

// kernel: world_model_forward.12
$region0: #{world_model_forward.12}
  #allocation0 [shape = 'u32[]', space=smem, size = 0x4, offset = 0x4, fixed_abs, tag = 'smem constant byte address 0x4 - core index']
  #allocation1 [shape = 'u32[144,128]{1,0:T(1,128)}', space=vmem, size = 0x12000, scoped, tag = 'internal scratch']
  %s0 = inlined_call_operand.vmem [shape: bf16[2,8,96], index: 0, kind: input, shape index: {}]
  %s1 = inlined_call_operand.vmem [shape: bf16[2,8,32], index: 1, kind: output, shape index: {}]
  %s2 = sld [smem:[#allocation0]]
  $region37: #{world_model_forward.12} parent=0
    _
  %s4 = ssub.s32 1, %s2
  %s5 = scalar_select 0, %s4, %s2
  loop: start=0, step=1, limit=4
  $region2: #{world_model_forward.12} parent=0 // loop_pre_header
    _
  $region3: #{world_model_forward.12} parent=0 // loop_header
    %s7 = sphi 0, %s11
    %p8 = scmp.ge.s32.totalorder %s7, 4
    %s17 = sphi 0, %s19
    %s20 = sphi 0, %s17
    %s21 = sphi 0, %s20
    %s37 = sphi 0, %s21
    %s43 = sphi 0, %s45
    %s46 = sphi 0, %s43
    %s47 = sphi 0, %s46
    %s63 = sphi 0, %s47
  $region4: #{world_model_forward.12} parent=0 // loop_header_branch
    %10 = sbr.rel (%p8) target = $region8
  $region5: #{world_model_forward.12} parent=0 // loop_body
    %s12 = ssub.s32 %s7, 1
    %s13 = ssub.s32 %s7, 2
    %s14 = sadd.s32 %s7, 1
    %s15 = ssub.s32 %s7, %s14
    %p16 = scmp.eq.s32.totalorder %s15, 0
    %s18 = sadd.s32 %s17, 1
    %s19 = scalar_select %p16, %s17, %s18
    %p22 = pneg %p16
    %p23 = scmp.eq.s32.totalorder %s7, 1
    %p24 = por %p22, %p23
    %p25 = scmp.ne.s32.totalorder %s17, %s20
    %p26 = scmp.eq.s32.totalorder %s7, 0
    %p27 = por %p25, %p26
    %p28 = scmp.ne.s32.totalorder %s17, %s20
    %p29 = scmp.eq.s32.totalorder %s12, 1
    %p30 = por %p28, %p29
    %p31 = scmp.ne.s32.totalorder %s20, %s21
    %p32 = scmp.eq.s32.totalorder %s12, 0
    %p33 = por %p31, %p32
    %p34 = scmp.ne.s32.totalorder %s20, %s21
    %p35 = scmp.eq.s32.totalorder %s13, 1
    %p36 = por %p34, %p35
    %p38 = scmp.ne.s32.totalorder %s21, %s37
    %p39 = scmp.eq.s32.totalorder %s13, 0
    %p40 = por %p38, %p39
    %s41 = ssub.s32 %s7, %s14
    %p42 = scmp.eq.s32.totalorder %s41, 0
    %s44 = sadd.s32 %s43, 1
    %s45 = scalar_select %p42, %s43, %s44
    %p48 = pneg %p42
    %p49 = scmp.eq.s32.totalorder %s7, 1
    %p50 = por %p48, %p49
    %p51 = scmp.ne.s32.totalorder %s43, %s46
    %p52 = scmp.eq.s32.totalorder %s7, 0
    %p53 = por %p51, %p52
    %p54 = scmp.ne.s32.totalorder %s43, %s46
    %p55 = scmp.eq.s32.totalorder %s12, 1
    %p56 = por %p54, %p55
    %p57 = scmp.ne.s32.totalorder %s46, %s47
    %p58 = scmp.eq.s32.totalorder %s12, 0
    %p59 = por %p57, %p58
    %p60 = scmp.ne.s32.totalorder %s46, %s47
    %p61 = scmp.eq.s32.totalorder %s13, 1
    %p62 = por %p60, %p61
    %p64 = scmp.ne.s32.totalorder %s47, %s63
    %p65 = scmp.eq.s32.totalorder %s13, 0
    %p66 = por %p64, %p65
    %p67 = scmp.le.s32.totalorder 1, %s7
    %p68 = scmp.lt.s32.totalorder %s7, 3
    %p69 = pnand %p67, %p68
    %p70 = pneg %p69
    // Predicated region
    $region9: #{world_model_forward.12} parent=5 // pred_check
      _
    $region10: #{world_model_forward.12} parent=5 // pred_check_branch
      %72 = sbr.rel (%p69) target = $region12
    $region11: #{world_model_forward.12} parent=5 // pred_region
      %s73 = ssub.s32 %s7, 1
    $region12: #{world_model_forward.12} parent=5 // pred_fallthru
      _
    %p74 = scmp.lt.s32.totalorder %s7, 2
    // Predicated region
    $region13: #{world_model_forward.12} parent=5 // pred_check
      %p75 = pneg %p74
    $region14: #{world_model_forward.12} parent=5 // pred_check_branch
      %77 = sbr.rel (%p75) target = $region16
    $region15: #{world_model_forward.12} parent=5 // pred_region
      // Predicated region
      $region17: #{world_model_forward.12} parent=15 // pred_check
        %p78 = pneg %p27
      $region18: #{world_model_forward.12} parent=15 // pred_check_branch
        %80 = sbr.rel (%p78) target = $region20
      $region19: #{world_model_forward.12} parent=15 // pred_region
        %p81 = scmp.lt.s32.totalorder %s7, 1
        %s82 = scalar_select %p81, %s7, 1
        %s83 = smul.addr %s82, 4
        %s84 = scalar_lea.vmem %s0, %s83
      $region20: #{world_model_forward.12} parent=15 // pred_fallthru
        _
    $region16: #{world_model_forward.12} parent=5 // pred_fallthru
      _
    %p85 = scmp.le.s32.totalorder 1, %s7
    %p86 = scmp.lt.s32.totalorder %s7, 3
    %p87 = pnand %p85, %p86
    %p88 = pneg %p87
    // Predicated region
    $region21: #{world_model_forward.12} parent=5 // pred_check
      _
    $region22: #{world_model_forward.12} parent=5 // pred_check_branch
      %90 = sbr.rel (%p87) target = $region24
    $region23: #{world_model_forward.12} parent=5 // pred_region
      %s91 = ssub.s32 %s7, 1
      %p92 = scmp.lt.s32.totalorder %s12, 1
      %s93 = scalar_select %p92, %s12, 1
      %s94 = smul.addr %s93, 4
      %s95 = scalar_lea.vmem %s0, %s94
      %p96 = pneg %p33
      %p97 = pneg %p30
      %p98 = pneg %p59
      %p99 = pneg %p56
      %p100 = scmp.lt.s32.totalorder %s12, 1
      %s101 = scalar_select %p100, %s12, 1
      %s102 = smul.addr %s101, 4
      %s103 = scalar_lea.vmem %s1, %s102
      %p104 = scmp.lt.s32.totalorder %s12, 1
      %s105 = scalar_select %p104, %s12, 1
      %s106 = smul.addr %s105, 4
      %s107 = scalar_lea.vmem %s0, %s106
      %p108 = scmp.lt.s32.totalorder %s12, 1
      %s109 = scalar_select %p108, %s12, 1
      %s110 = smul.addr %s109, 4
      %s111 = scalar_lea.vmem %s1, %s110
      %v113 = vld [vmem:[%s107] sm:$0xf]
      %v115 = vunpack.c.l.b16 %v113
      %v116 = vpack.c.b16 %v115, %v115
      %117 = vrot.lane.b32.xlu0 %v116, 96
      %v118 = vpop.permute.xlu0 %117
      %vm119 = vcmask 64512
      %v121 = vsel %vm119, %v113, 0
      %v124 = vsel %vm119, %v118, 0
      %126 = vmatprep.subr.bf16.mxu0 0
      %127 = vmatpush1.bf16.xpose.msra.mxu0 %v124
      %128 = vmatprep.subr.bf16.mxu0 0
      %129 = vmatpush1.bf16.xpose.msra.mxu0 0
      %130 = vmatprep.subr.bf16.mxu0 0
      %131 = vmatpush1.bf16.xpose.msra.mxu0 0
      %132 = vmatprep.subr.bf16.mxu0 0
      %133 = vmatpush1.bf16.xpose.msra.mxu0 0
      %134 = vmatprep.subr.bf16.mxu0 0
      %135 = vmatpush1.bf16.xpose.msra.mxu0 0
      %136 = vmatprep.subr.bf16.mxu0 0
      %137 = vmatpush1.bf16.xpose.msra.mxu0 0
      %138 = vmatprep.subr.bf16.mxu0 0
      %139 = vmatpush1.bf16.xpose.msra.mxu0 0
      %140 = vmatprep.subr.bf16.mxu0 0
      %141 = vmatpush1.bf16.xpose.msra.mxu0 0
      %142 = vmatprep.subr.bf16.mxu0 0
      %143 = vmatpush1.bf16.xpose.msra.mxu0 0
      %144 = vmatprep.subr.bf16.mxu0 0
      %145 = vmatpush1.bf16.xpose.msra.mxu0 0
      %146 = vmatprep.subr.bf16.mxu0 0
      %147 = vmatpush1.bf16.xpose.msra.mxu0 0
      %148 = vmatprep.subr.bf16.mxu0 0
      %149 = vmatpush1.bf16.xpose.msra.mxu0 0
      %150 = vmatprep.subr.bf16.mxu0 0
      %151 = vmatpush1.bf16.xpose.msra.mxu0 0
      %152 = vmatprep.subr.bf16.mxu0 0
      %153 = vmatpush1.bf16.xpose.msra.mxu0 0
      %154 = vmatprep.subr.bf16.mxu0 0
      %155 = vmatpush1.bf16.xpose.msra.mxu0 0
      %156 = vmatprep.subr.bf16.mxu0 0
      %157 = vmatpush1.bf16.xpose.msra.mxu0 0
      %158 = vmatprep.mubr.bf16.mxu0 0
      %159 = vmatmul.mubr.bf16.gmra.mrb[0].mxu0 %v121
      %v160 = vpop.f32.mrb[0].mxu0
      %v161 = vadd.f32 0.0, %v160
      %v162 = vpop.f32.mrb[0].mxu0
      %v163 = vpop.f32.mrb[0].mxu0
      %v164 = vpop.f32.mrb[0].mxu0
      %165 = vdwg.mxu0
      %v166 = vmul.f32 %v161, 0.35355338
      %v167 = vsel %vm119, %v166, -inf
      %168 = vmax.xlane.f32.xlu0 %v167
      %v169 = vpop.xlane.xlu0 %168
      %v170 = vsub.f32 %v166, %v169
      %v171 = vmul.f32 %v170, 1.442695
      %v172 = vpow.pop %v171
      %v173 = vsel %vm119, %v172, 0.0
      %174 = vadd.xlane.f32.xlu0 %v173
      %v175 = vpop.xlane.xlu0 %174
      %v176 = vrcp.pop %v175
      %v177 = vmul.f32 %v172, %v176
      %v178 = vpack.c.bf16 %v177, %v177
      %179 = vrot.lane.b32.xlu0 %v116, 64
      %v180 = vpop.permute.xlu0 %179
      %v182 = vsel %vm119, %v178, 0
      %vm184 = vcmask 1043456
      %v186 = vsel %vm184, %v180, 0
      %188 = vmatprep.subr.bf16.mxu0 0
      %189 = vmatpush1.bf16.msra.mxu0 %v186
      %190 = vmatprep.subr.bf16.mxu0 0
      %191 = vmatpush1.bf16.msra.mxu0 0
      %192 = vmatprep.subr.bf16.mxu0 0
      %193 = vmatpush1.bf16.msra.mxu0 0
      %194 = vmatprep.subr.bf16.mxu0 0
      %195 = vmatpush1.bf16.msra.mxu0 0
      %196 = vmatprep.subr.bf16.mxu0 0
      %197 = vmatpush1.bf16.msra.mxu0 0
      %198 = vmatprep.subr.bf16.mxu0 0
      %199 = vmatpush1.bf16.msra.mxu0 0
      %200 = vmatprep.subr.bf16.mxu0 0
      %201 = vmatpush1.bf16.msra.mxu0 0
      %202 = vmatprep.subr.bf16.mxu0 0
      %203 = vmatpush1.bf16.msra.mxu0 0
      %204 = vmatprep.subr.bf16.mxu0 0
      %205 = vmatpush1.bf16.msra.mxu0 0
      %206 = vmatprep.subr.bf16.mxu0 0
      %207 = vmatpush1.bf16.msra.mxu0 0
      %208 = vmatprep.subr.bf16.mxu0 0
      %209 = vmatpush1.bf16.msra.mxu0 0
      %210 = vmatprep.subr.bf16.mxu0 0
      %211 = vmatpush1.bf16.msra.mxu0 0
      %212 = vmatprep.subr.bf16.mxu0 0
      %213 = vmatpush1.bf16.msra.mxu0 0
      %214 = vmatprep.subr.bf16.mxu0 0
      %215 = vmatpush1.bf16.msra.mxu0 0
      %216 = vmatprep.subr.bf16.mxu0 0
      %217 = vmatpush1.bf16.msra.mxu0 0
      %218 = vmatprep.subr.bf16.mxu0 0
      %219 = vmatpush1.bf16.msra.mxu0 0
      %220 = vmatprep.mubr.bf16.mxu0 0
      %221 = vmatmul.mubr.bf16.gmra.mrb[0].mxu0 %v182
      %v222 = vpop.f32.mrb[0].mxu0
      %v223 = vadd.f32 0.0, %v222
      %v224 = vpop.f32.mrb[0].mxu0
      %v225 = vpop.f32.mrb[0].mxu0
      %v226 = vpop.f32.mrb[0].mxu0
      %227 = vdwg.mxu0
      %228 = vrot.lane.b32.xlu0 %v116, 120
      %v229 = vpop.permute.xlu0 %228
      %230 = vrot.lane.b32.xlu0 %v116, 88
      %v231 = vpop.permute.xlu0 %230
      %v233 = vsel %vm119, %v229, 0
      %v236 = vsel %vm119, %v231, 0
      %238 = vmatprep.subr.bf16.mxu0 0
      %239 = vmatpush1.bf16.xpose.msra.mxu0 %v236
      %240 = vmatprep.subr.bf16.mxu0 0
      %241 = vmatpush1.bf16.xpose.msra.mxu0 0
      %242 = vmatprep.subr.bf16.mxu0 0
      %243 = vmatpush1.bf16.xpose.msra.mxu0 0
      %244 = vmatprep.subr.bf16.mxu0 0
      %245 = vmatpush1.bf16.xpose.msra.mxu0 0
      %246 = vmatprep.subr.bf16.mxu0 0
      %247 = vmatpush1.bf16.xpose.msra.mxu0 0
      %248 = vmatprep.subr.bf16.mxu0 0
      %249 = vmatpush1.bf16.xpose.msra.mxu0 0
      %250 = vmatprep.subr.bf16.mxu0 0
      %251 = vmatpush1.bf16.xpose.msra.mxu0 0
      %252 = vmatprep.subr.bf16.mxu0 0
      %253 = vmatpush1.bf16.xpose.msra.mxu0 0
      %254 = vmatprep.subr.bf16.mxu0 0
      %255 = vmatpush1.bf16.xpose.msra.mxu0 0
      %256 = vmatprep.subr.bf16.mxu0 0
      %257 = vmatpush1.bf16.xpose.msra.mxu0 0
      %258 = vmatprep.subr.bf16.mxu0 0
      %259 = vmatpush1.bf16.xpose.msra.mxu0 0
      %260 = vmatprep.subr.bf16.mxu0 0
      %261 = vmatpush1.bf16.xpose.msra.mxu0 0
      %262 = vmatprep.subr.bf16.mxu0 0
      %263 = vmatpush1.bf16.xpose.msra.mxu0 0
      %264 = vmatprep.subr.bf16.mxu0 0
      %265 = vmatpush1.bf16.xpose.msra.mxu0 0
      %266 = vmatprep.subr.bf16.mxu0 0
      %267 = vmatpush1.bf16.xpose.msra.mxu0 0
      %268 = vmatprep.subr.bf16.mxu0 0
      %269 = vmatpush1.bf16.xpose.msra.mxu0 0
      %270 = vmatprep.mubr.bf16.mxu0 0
      %271 = vmatmul.mubr.bf16.gmra.mrb[0].mxu0 %v233
      %v272 = vpop.f32.mrb[0].mxu0
      %v273 = vadd.f32 0.0, %v272
      %v274 = vpop.f32.mrb[0].mxu0
      %v275 = vpop.f32.mrb[0].mxu0
      %v276 = vpop.f32.mrb[0].mxu0
      %277 = vdwg.mxu0
      %v278 = vmul.f32 %v273, 0.35355338
      %v279 = vsel %vm119, %v278, -inf
      %280 = vmax.xlane.f32.xlu0 %v279
      %v281 = vpop.xlane.xlu0 %280
      %v282 = vsub.f32 %v278, %v281
      %v283 = vmul.f32 %v282, 1.442695
      %v284 = vpow.pop %v283
      %v285 = vsel %vm119, %v284, 0.0
      %286 = vadd.xlane.f32.xlu0 %v285
      %v287 = vpop.xlane.xlu0 %286
      %v288 = vrcp.pop %v287
      %v289 = vmul.f32 %v284, %v288
      %v290 = vpack.c.bf16 %v289, %v289
      %291 = vrot.lane.b32.xlu0 %v116, 56
      %v292 = vpop.permute.xlu0 %291
      %v294 = vsel %vm119, %v290, 0
      %v297 = vsel %vm184, %v292, 0
      %299 = vmatprep.subr.bf16.mxu0 0
      %300 = vmatpush1.bf16.msra.mxu0 %v297
      %301 = vmatprep.subr.bf16.mxu0 0
      %302 = vmatpush1.bf16.msra.mxu0 0
      %303 = vmatprep.subr.bf16.mxu0 0
      %304 = vmatpush1.bf16.msra.mxu0 0
      %305 = vmatprep.subr.bf16.mxu0 0
      %306 = vmatpush1.bf16.msra.mxu0 0
      %307 = vmatprep.subr.bf16.mxu0 0
      %308 = vmatpush1.bf16.msra.mxu0 0
      %309 = vmatprep.subr.bf16.mxu0 0
      %310 = vmatpush1.bf16.msra.mxu0 0
      %311 = vmatprep.subr.bf16.mxu0 0
      %312 = vmatpush1.bf16.msra.mxu0 0
      %313 = vmatprep.subr.bf16.mxu0 0
      %314 = vmatpush1.bf16.msra.mxu0 0
      %315 = vmatprep.subr.bf16.mxu0 0
      %316 = vmatpush1.bf16.msra.mxu0 0
      %317 = vmatprep.subr.bf16.mxu0 0
      %318 = vmatpush1.bf16.msra.mxu0 0
      %319 = vmatprep.subr.bf16.mxu0 0
      %320 = vmatpush1.bf16.msra.mxu0 0
      %321 = vmatprep.subr.bf16.mxu0 0
      %322 = vmatpush1.bf16.msra.mxu0 0
      %323 = vmatprep.subr.bf16.mxu0 0
      %324 = vmatpush1.bf16.msra.mxu0 0
      %325 = vmatprep.subr.bf16.mxu0 0
      %326 = vmatpush1.bf16.msra.mxu0 0
      %327 = vmatprep.subr.bf16.mxu0 0
      %328 = vmatpush1.bf16.msra.mxu0 0
      %329 = vmatprep.subr.bf16.mxu0 0
      %330 = vmatpush1.bf16.msra.mxu0 0
      %331 = vmatprep.mubr.bf16.mxu0 0
      %332 = vmatmul.mubr.bf16.gmra.mrb[0].mxu0 %v294
      %v333 = vpop.f32.mrb[0].mxu0
      %v334 = vadd.f32 0.0, %v333
      %v335 = vpop.f32.mrb[0].mxu0
      %v336 = vpop.f32.mrb[0].mxu0
      %v337 = vpop.f32.mrb[0].mxu0
      %338 = vdwg.mxu0
      %339 = vrot.lane.b32.xlu0 %v116, 112
      %v340 = vpop.permute.xlu0 %339
      %341 = vrot.lane.b32.xlu0 %v116, 80
      %v342 = vpop.permute.xlu0 %341
      %v344 = vsel %vm119, %v340, 0
      %v347 = vsel %vm119, %v342, 0
      %349 = vmatprep.subr.bf16.mxu0 0
      %350 = vmatpush1.bf16.xpose.msra.mxu0 %v347
      %351 = vmatprep.subr.bf16.mxu0 0
      %352 = vmatpush1.bf16.xpose.msra.mxu0 0
      %353 = vmatprep.subr.bf16.mxu0 0
      %354 = vmatpush1.bf16.xpose.msra.mxu0 0
      %355 = vmatprep.subr.bf16.mxu0 0
      %356 = vmatpush1.bf16.xpose.msra.mxu0 0
      %357 = vmatprep.subr.bf16.mxu0 0
      %358 = vmatpush1.bf16.xpose.msra.mxu0 0
      %359 = vmatprep.subr.bf16.mxu0 0
      %360 = vmatpush1.bf16.xpose.msra.mxu0 0
      %361 = vmatprep.subr.bf16.mxu0 0
      %362 = vmatpush1.bf16.xpose.msra.mxu0 0
      %363 = vmatprep.subr.bf16.mxu0 0
      %364 = vmatpush1.bf16.xpose.msra.mxu0 0
      %365 = vmatprep.subr.bf16.mxu0 0
      %366 = vmatpush1.bf16.xpose.msra.mxu0 0
      %367 = vmatprep.subr.bf16.mxu0 0
      %368 = vmatpush1.bf16.xpose.msra.mxu0 0
      %369 = vmatprep.subr.bf16.mxu0 0
      %370 = vmatpush1.bf16.xpose.msra.mxu0 0
      %371 = vmatprep.subr.bf16.mxu0 0
      %372 = vmatpush1.bf16.xpose.msra.mxu0 0
      %373 = vmatprep.subr.bf16.mxu0 0
      %374 = vmatpush1.bf16.xpose.msra.mxu0 0
      %375 = vmatprep.subr.bf16.mxu0 0
      %376 = vmatpush1.bf16.xpose.msra.mxu0 0
      %377 = vmatprep.subr.bf16.mxu0 0
      %378 = vmatpush1.bf16.xpose.msra.mxu0 0
      %379 = vmatprep.subr.bf16.mxu0 0
      %380 = vmatpush1.bf16.xpose.msra.mxu0 0
      %381 = vmatprep.mubr.bf16.mxu0 0
      %382 = vmatmul.mubr.bf16.gmra.mrb[0].mxu0 %v344
      %v383 = vpop.f32.mrb[0].mxu0
      %v384 = vadd.f32 0.0, %v383
      %v385 = vpop.f32.mrb[0].mxu0
      %v386 = vpop.f32.mrb[0].mxu0
      %v387 = vpop.f32.mrb[0].mxu0
      %388 = vdwg.mxu0
      %v389 = vmul.f32 %v384, 0.35355338
      %v390 = vsel %vm119, %v389, -inf
      %391 = vmax.xlane.f32.xlu0 %v390
      %v392 = vpop.xlane.xlu0 %391
      %v393 = vsub.f32 %v389, %v392
      %v394 = vmul.f32 %v393, 1.442695
      %v395 = vpow.pop %v394
      %v396 = vsel %vm119, %v395, 0.0
      %397 = vadd.xlane.f32.xlu0 %v396
      %v398 = vpop.xlane.xlu0 %397
      %v399 = vrcp.pop %v398
      %v400 = vmul.f32 %v395, %v399
      %v401 = vpack.c.bf16 %v400, %v400
      %402 = vrot.lane.b32.xlu0 %v116, 48
      %v403 = vpop.permute.xlu0 %402
      %v405 = vsel %vm119, %v401, 0
      %v408 = vsel %vm184, %v403, 0
      %410 = vmatprep.subr.bf16.mxu0 0
      %411 = vmatpush1.bf16.msra.mxu0 %v408
      %412 = vmatprep.subr.bf16.mxu0 0
      %413 = vmatpush1.bf16.msra.mxu0 0
      %414 = vmatprep.subr.bf16.mxu0 0
      %415 = vmatpush1.bf16.msra.mxu0 0
      %416 = vmatprep.subr.bf16.mxu0 0
      %417 = vmatpush1.bf16.msra.mxu0 0
      %418 = vmatprep.subr.bf16.mxu0 0
      %419 = vmatpush1.bf16.msra.mxu0 0
      %420 = vmatprep.subr.bf16.mxu0 0
      %421 = vmatpush1.bf16.msra.mxu0 0
      %422 = vmatprep.subr.bf16.mxu0 0
      %423 = vmatpush1.bf16.msra.mxu0 0
      %424 = vmatprep.subr.bf16.mxu0 0
      %425 = vmatpush1.bf16.msra.mxu0 0
      %426 = vmatprep.subr.bf16.mxu0 0
      %427 = vmatpush1.bf16.msra.mxu0 0
      %428 = vmatprep.subr.bf16.mxu0 0
      %429 = vmatpush1.bf16.msra.mxu0 0
      %430 = vmatprep.subr.bf16.mxu0 0
      %431 = vmatpush1.bf16.msra.mxu0 0
      %432 = vmatprep.subr.bf16.mxu0 0
      %433 = vmatpush1.bf16.msra.mxu0 0
      %434 = vmatprep.subr.bf16.mxu0 0
      %435 = vmatpush1.bf16.msra.mxu0 0
      %436 = vmatprep.subr.bf16.mxu0 0
      %437 = vmatpush1.bf16.msra.mxu0 0
      %438 = vmatprep.subr.bf16.mxu0 0
      %439 = vmatpush1.bf16.msra.mxu0 0
      %440 = vmatprep.subr.bf16.mxu0 0
      %441 = vmatpush1.bf16.msra.mxu0 0
      %442 = vmatprep.mubr.bf16.mxu0 0
      %443 = vmatmul.mubr.bf16.gmra.mrb[0].mxu0 %v405
      %v444 = vpop.f32.mrb[0].mxu0
      %v445 = vadd.f32 0.0, %v444
      %v446 = vpop.f32.mrb[0].mxu0
      %v447 = vpop.f32.mrb[0].mxu0
      %v448 = vpop.f32.mrb[0].mxu0
      %449 = vdwg.mxu0
      %450 = vrot.lane.b32.xlu0 %v116, 104
      %v451 = vpop.permute.xlu0 %450
      %452 = vrot.lane.b32.xlu0 %v116, 72
      %v453 = vpop.permute.xlu0 %452
      %v455 = vsel %vm119, %v451, 0
      %v458 = vsel %vm119, %v453, 0
      %460 = vmatprep.subr.bf16.mxu0 0
      %461 = vmatpush1.bf16.xpose.msra.mxu0 %v458
      %462 = vmatprep.subr.bf16.mxu0 0
      %463 = vmatpush1.bf16.xpose.msra.mxu0 0
      %464 = vmatprep.subr.bf16.mxu0 0
      %465 = vmatpush1.bf16.xpose.msra.mxu0 0
      %466 = vmatprep.subr.bf16.mxu0 0
      %467 = vmatpush1.bf16.xpose.msra.mxu0 0
      %468 = vmatprep.subr.bf16.mxu0 0
      %469 = vmatpush1.bf16.xpose.msra.mxu0 0
      %470 = vmatprep.subr.bf16.mxu0 0
      %471 = vmatpush1.bf16.xpose.msra.mxu0 0
      %472 = vmatprep.subr.bf16.mxu0 0
      %473 = vmatpush1.bf16.xpose.msra.mxu0 0
      %474 = vmatprep.subr.bf16.mxu0 0
      %475 = vmatpush1.bf16.xpose.msra.mxu0 0
      %476 = vmatprep.subr.bf16.mxu0 0
      %477 = vmatpush1.bf16.xpose.msra.mxu0 0
      %478 = vmatprep.subr.bf16.mxu0 0
      %479 = vmatpush1.bf16.xpose.msra.mxu0 0
      %480 = vmatprep.subr.bf16.mxu0 0
      %481 = vmatpush1.bf16.xpose.msra.mxu0 0
      %482 = vmatprep.subr.bf16.mxu0 0
      %483 = vmatpush1.bf16.xpose.msra.mxu0 0
      %484 = vmatprep.subr.bf16.mxu0 0
      %485 = vmatpush1.bf16.xpose.msra.mxu0 0
      %486 = vmatprep.subr.bf16.mxu0 0
      %487 = vmatpush1.bf16.xpose.msra.mxu0 0
      %488 = vmatprep.subr.bf16.mxu0 0
      %489 = vmatpush1.bf16.xpose.msra.mxu0 0
      %490 = vmatprep.subr.bf16.mxu0 0
      %491 = vmatpush1.bf16.xpose.msra.mxu0 0
      %492 = vmatprep.mubr.bf16.mxu0 0
      %493 = vmatmul.mubr.bf16.gmra.mrb[0].mxu0 %v455
      %v494 = vpop.f32.mrb[0].mxu0
      %v495 = vadd.f32 0.0, %v494
      %v496 = vpop.f32.mrb[0].mxu0
      %v497 = vpop.f32.mrb[0].mxu0
      %v498 = vpop.f32.mrb[0].mxu0
      %499 = vdwg.mxu0
      %v500 = vmul.f32 %v495, 0.35355338
      %v501 = vsel %vm119, %v500, -inf
      %502 = vmax.xlane.f32.xlu0 %v501
      %v503 = vpop.xlane.xlu0 %502
      %v504 = vsub.f32 %v500, %v503
      %v505 = vmul.f32 %v504, 1.442695
      %v506 = vpow.pop %v505
      %v507 = vsel %vm119, %v506, 0.0
      %508 = vadd.xlane.f32.xlu0 %v507
      %v509 = vpop.xlane.xlu0 %508
      %v510 = vrcp.pop %v509
      %v511 = vmul.f32 %v506, %v510
      %v512 = vpack.c.bf16 %v511, %v511
      %513 = vrot.lane.b32.xlu0 %v116, 40
      %v514 = vpop.permute.xlu0 %513
      %v516 = vsel %vm119, %v512, 0
      %v519 = vsel %vm184, %v514, 0
      %521 = vmatprep.subr.bf16.mxu0 0
      %522 = vmatpush1.bf16.msra.mxu0 %v519
      %523 = vmatprep.subr.bf16.mxu0 0
      %524 = vmatpush1.bf16.msra.mxu0 0
      %525 = vmatprep.subr.bf16.mxu0 0
      %526 = vmatpush1.bf16.msra.mxu0 0
      %527 = vmatprep.subr.bf16.mxu0 0
      %528 = vmatpush1.bf16.msra.mxu0 0
      %529 = vmatprep.subr.bf16.mxu0 0
      %530 = vmatpush1.bf16.msra.mxu0 0
      %531 = vmatprep.subr.bf16.mxu0 0
      %532 = vmatpush1.bf16.msra.mxu0 0
      %533 = vmatprep.subr.bf16.mxu0 0
      %534 = vmatpush1.bf16.msra.mxu0 0
      %535 = vmatprep.subr.bf16.mxu0 0
      %536 = vmatpush1.bf16.msra.mxu0 0
      %537 = vmatprep.subr.bf16.mxu0 0
      %538 = vmatpush1.bf16.msra.mxu0 0
      %539 = vmatprep.subr.bf16.mxu0 0
      %540 = vmatpush1.bf16.msra.mxu0 0
      %541 = vmatprep.subr.bf16.mxu0 0
      %542 = vmatpush1.bf16.msra.mxu0 0
      %543 = vmatprep.subr.bf16.mxu0 0
      %544 = vmatpush1.bf16.msra.mxu0 0
      %545 = vmatprep.subr.bf16.mxu0 0
      %546 = vmatpush1.bf16.msra.mxu0 0
      %547 = vmatprep.subr.bf16.mxu0 0
      %548 = vmatpush1.bf16.msra.mxu0 0
      %549 = vmatprep.subr.bf16.mxu0 0
      %550 = vmatpush1.bf16.msra.mxu0 0
      %551 = vmatprep.subr.bf16.mxu0 0
      %552 = vmatpush1.bf16.msra.mxu0 0
      %553 = vmatprep.mubr.bf16.mxu0 0
      %554 = vmatmul.mubr.bf16.gmra.mrb[0].mxu0 %v516
      %v555 = vpop.f32.mrb[0].mxu0
      %v556 = vadd.f32 0.0, %v555
      %v557 = vpop.f32.mrb[0].mxu0
      %v558 = vpop.f32.mrb[0].mxu0
      %v559 = vpop.f32.mrb[0].mxu0
      %560 = vdwg.mxu0
      %562 = vrot.lane.b32.xlu0 %v334, 8
      %v563 = vpop.permute.xlu0 %562
      %566 = vrot.lane.b32.xlu0 %v445, 16
      %v567 = vpop.permute.xlu0 %566
      %570 = vrot.lane.b32.xlu0 %v556, 24
      %v571 = vpop.permute.xlu0 %570
      %v573 = vsel %vm119, %v223, %v563
      %vm574 = vcmask 130048
      %v575 = vsel %vm574, %v573, %v567
      %vm576 = vcmask 195584
      %v577 = vsel %vm576, %v575, %v571
      %v578 = vpack.c.bf16 %v577, %v577
      %vm579 = vcmask 257024
      %580 = vst.msk [vmem:[%s111] sm:$0xf] %vm579, %v578
      %p581 = scmp.lt.s32.totalorder %s12, 1
      %s582 = scalar_select %p581, %s12, 1
      %s583 = smul.addr %s582, 4
      %s584 = scalar_lea.vmem %s1, %s583
      // Predicated region
      $region25: #{world_model_forward.12} parent=23 // pred_check
        %p585 = pneg %p56
      $region26: #{world_model_forward.12} parent=23 // pred_check_branch
        %587 = sbr.rel (%p585) target = $region28
      $region27: #{world_model_forward.12} parent=23 // pred_region
        _
      $region28: #{world_model_forward.12} parent=23 // pred_fallthru
        _
    $region24: #{world_model_forward.12} parent=5 // pred_fallthru
      _
    %p588 = scmp.le.s32.totalorder 2, %s7
    // Predicated region
    $region29: #{world_model_forward.12} parent=5 // pred_check
      %p589 = pneg %p588
    $region30: #{world_model_forward.12} parent=5 // pred_check_branch
      %591 = sbr.rel (%p589) target = $region32
    $region31: #{world_model_forward.12} parent=5 // pred_region
      %s592 = ssub.s32 %s7, 2
      // Predicated region
      $region33: #{world_model_forward.12} parent=31 // pred_check
        %p593 = pneg %p62
      $region34: #{world_model_forward.12} parent=31 // pred_check_branch
        %595 = sbr.rel (%p593) target = $region36
      $region35: #{world_model_forward.12} parent=31 // pred_region
        %p596 = scmp.lt.s32.totalorder %s13, 1
        %s597 = scalar_select %p596, %s13, 1
        %s598 = smul.addr %s597, 4
        %s599 = scalar_lea.vmem %s1, %s598
      $region36: #{world_model_forward.12} parent=31 // pred_fallthru
        _
    $region32: #{world_model_forward.12} parent=5 // pred_fallthru
      _
  $region6: #{world_model_forward.12} parent=0 // loop_footer
    %s11 = sadd.s32 1, %s7
  $region7: #{world_model_forward.12} parent=0 // loop_footer_branch
    %6 = sbr.rel target = $region3
  $region8: #{world_model_forward.12} parent=0 // loop_exit
    _

// kernel: world_model_forward.14
$region0: #{world_model_forward.14}
  #allocation0 [shape = 'u32[]', space=smem, size = 0x4, offset = 0x4, fixed_abs, tag = 'smem constant byte address 0x4 - core index']
  #allocation1 [shape = 'u32[144,128]{1,0:T(1,128)}', space=vmem, size = 0x12000, scoped, tag = 'internal scratch']
  #allocation2 [shape = 'f32[8,32]{1,0:T(8,128)}', space=vmem, size = 0x1000, scoped, tag = 'scratch operand']
  %s0 = inlined_call_operand.vmem [shape: bf16[16,32], index: 0, kind: input, shape index: {}]
  %s1 = inlined_call_operand.vmem [shape: bf16[32,32], index: 1, kind: input, shape index: {}]
  %s2 = inlined_call_operand.vmem [shape: f32[1,32], index: 2, kind: input, shape index: {}]
  %s3 = inlined_call_operand.vmem [shape: bf16[32,32], index: 3, kind: input, shape index: {}]
  %s4 = inlined_call_operand.vmem [shape: f32[1,32], index: 4, kind: input, shape index: {}]
  %s5 = inlined_call_operand.vmem [shape: f32[1,32], index: 5, kind: input, shape index: {}]
  %s6 = inlined_call_operand.vmem [shape: f32[1,32], index: 6, kind: input, shape index: {}]
  %s7 = inlined_call_operand.vmem [shape: bf16[16,32], index: 7, kind: output, shape index: {}]
  %s8 = sld [smem:[#allocation0]]
  $region69: #{world_model_forward.14} parent=0
    _
  %s10 = ssub.s32 1, %s8
  %s11 = scalar_select 0, %s10, %s8
  loop: start=0, step=1, limit=4
  $region2: #{world_model_forward.14} parent=0 // loop_pre_header
    _
  $region3: #{world_model_forward.14} parent=0 // loop_header
    %s13 = sphi 0, %s17
    %p14 = scmp.ge.s32.totalorder %s13, 4
    %s20 = sphi 0, %s32
    %s21 = sphi 0, %s28
    %s22 = sphi 0, %s20
    %s23 = sphi 0, %s21
    %s24 = sphi 0, %s22
    %s25 = sphi 0, %s23
    %s35 = sphi 0, %s37
    %s38 = sphi 0, %s35
    %s39 = sphi 0, %s38
    %s55 = sphi 0, %s39
    %s61 = sphi 0, %s63
    %s64 = sphi 0, %s61
    %s65 = sphi 0, %s64
    %s81 = sphi 0, %s65
    %s87 = sphi 0, %s89
    %s90 = sphi 0, %s87
    %s91 = sphi 0, %s90
    %s107 = sphi 0, %s91
    %s113 = sphi 0, %s115
    %s116 = sphi 0, %s113
    %s117 = sphi 0, %s116
    %s133 = sphi 0, %s117
    %s137 = sphi 0, %s137
    %s139 = sphi 0, %s137
    %s140 = sphi 0, %s139
    %s154 = sphi 0, %s140
    %s158 = sphi 0, %s158
    %s160 = sphi 0, %s158
    %s161 = sphi 0, %s160
    %s175 = sphi 0, %s161
    %s179 = sphi 0, %s179
    %s181 = sphi 0, %s179
    %s182 = sphi 0, %s181
    %s196 = sphi 0, %s182
    %s202 = sphi 0, %s204
    %s205 = sphi 0, %s202
    %s206 = sphi 0, %s205
    %s222 = sphi 0, %s206
  $region4: #{world_model_forward.14} parent=0 // loop_header_branch
    %16 = sbr.rel (%p14) target = $region8
  $region5: #{world_model_forward.14} parent=0 // loop_body
    %s18 = ssub.s32 %s13, 1
    %s19 = ssub.s32 %s13, 2
    %s26 = sadd.s32 1, %s21
    %p27 = scmp.ge.s32.totalorder %s26, 1
    %s28 = scalar_select %p27, 0, %s26
    %s29 = sadd.s32 1, %s20
    %s30 = scalar_select %p27, %s29, %s20
    %p31 = scmp.ge.s32.totalorder %s30, 2
    %s32 = scalar_select %p31, 0, %s30
    %s33 = ssub.s32 %s20, %s32
    %p34 = scmp.eq.s32.totalorder %s33, 0
    %s36 = sadd.s32 %s35, 1
    %s37 = scalar_select %p34, %s35, %s36
    %p40 = pneg %p34
    %p41 = scmp.eq.s32.totalorder %s13, 1
    %p42 = por %p40, %p41
    %p43 = scmp.ne.s32.totalorder %s35, %s38
    %p44 = scmp.eq.s32.totalorder %s13, 0
    %p45 = por %p43, %p44
    %p46 = scmp.ne.s32.totalorder %s35, %s38
    %p47 = scmp.eq.s32.totalorder %s18, 1
    %p48 = por %p46, %p47
    %p49 = scmp.ne.s32.totalorder %s38, %s39
    %p50 = scmp.eq.s32.totalorder %s18, 0
    %p51 = por %p49, %p50
    %p52 = scmp.ne.s32.totalorder %s38, %s39
    %p53 = scmp.eq.s32.totalorder %s19, 1
    %p54 = por %p52, %p53
    %p56 = scmp.ne.s32.totalorder %s39, %s55
    %p57 = scmp.eq.s32.totalorder %s19, 0
    %p58 = por %p56, %p57
    %s59 = ssub.s32 %s21, %s28
    %p60 = scmp.eq.s32.totalorder %s59, 0
    %s62 = sadd.s32 %s61, 1
    %s63 = scalar_select %p60, %s61, %s62
    %p66 = pneg %p60
    %p67 = scmp.eq.s32.totalorder %s13, 1
    %p68 = por %p66, %p67
    %p69 = scmp.ne.s32.totalorder %s61, %s64
    %p70 = scmp.eq.s32.totalorder %s13, 0
    %p71 = por %p69, %p70
    %p72 = scmp.ne.s32.totalorder %s61, %s64
    %p73 = scmp.eq.s32.totalorder %s18, 1
    %p74 = por %p72, %p73
    %p75 = scmp.ne.s32.totalorder %s64, %s65
    %p76 = scmp.eq.s32.totalorder %s18, 0
    %p77 = por %p75, %p76
    %p78 = scmp.ne.s32.totalorder %s64, %s65
    %p79 = scmp.eq.s32.totalorder %s19, 1
    %p80 = por %p78, %p79
    %p82 = scmp.ne.s32.totalorder %s65, %s81
    %p83 = scmp.eq.s32.totalorder %s19, 0
    %p84 = por %p82, %p83
    %s85 = ssub.s32 %s21, %s28
    %p86 = scmp.eq.s32.totalorder %s85, 0
    %s88 = sadd.s32 %s87, 1
    %s89 = scalar_select %p86, %s87, %s88
    %p92 = pneg %p86
    %p93 = scmp.eq.s32.totalorder %s13, 1
    %p94 = por %p92, %p93
    %p95 = scmp.ne.s32.totalorder %s87, %s90
    %p96 = scmp.eq.s32.totalorder %s13, 0
    %p97 = por %p95, %p96
    %p98 = scmp.ne.s32.totalorder %s87, %s90
    %p99 = scmp.eq.s32.totalorder %s18, 1
    %p100 = por %p98, %p99
    %p101 = scmp.ne.s32.totalorder %s90, %s91
    %p102 = scmp.eq.s32.totalorder %s18, 0
    %p103 = por %p101, %p102
    %p104 = scmp.ne.s32.totalorder %s90, %s91
    %p105 = scmp.eq.s32.totalorder %s19, 1
    %p106 = por %p104, %p105
    %p108 = scmp.ne.s32.totalorder %s91, %s107
    %p109 = scmp.eq.s32.totalorder %s19, 0
    %p110 = por %p108, %p109
    %s111 = ssub.s32 %s21, %s28
    %p112 = scmp.eq.s32.totalorder %s111, 0
    %s114 = sadd.s32 %s113, 1
    %s115 = scalar_select %p112, %s113, %s114
    %p118 = pneg %p112
    %p119 = scmp.eq.s32.totalorder %s13, 1
    %p120 = por %p118, %p119
    %p121 = scmp.ne.s32.totalorder %s113, %s116
    %p122 = scmp.eq.s32.totalorder %s13, 0
    %p123 = por %p121, %p122
    %p124 = scmp.ne.s32.totalorder %s113, %s116
    %p125 = scmp.eq.s32.totalorder %s18, 1
    %p126 = por %p124, %p125
    %p127 = scmp.ne.s32.totalorder %s116, %s117
    %p128 = scmp.eq.s32.totalorder %s18, 0
    %p129 = por %p127, %p128
    %p130 = scmp.ne.s32.totalorder %s116, %s117
    %p131 = scmp.eq.s32.totalorder %s19, 1
    %p132 = por %p130, %p131
    %p134 = scmp.ne.s32.totalorder %s117, %s133
    %p135 = scmp.eq.s32.totalorder %s19, 0
    %p136 = por %p134, %p135
    %s138 = sadd.s32 %s137, 1
    %p141 = scmp.eq.s32.totalorder %s13, 1
    %p142 = scmp.ne.s32.totalorder %s137, %s139
    %p143 = scmp.eq.s32.totalorder %s13, 0
    %p144 = por %p142, %p143
    %p145 = scmp.ne.s32.totalorder %s137, %s139
    %p146 = scmp.eq.s32.totalorder %s18, 1
    %p147 = por %p145, %p146
    %p148 = scmp.ne.s32.totalorder %s139, %s140
    %p149 = scmp.eq.s32.totalorder %s18, 0
    %p150 = por %p148, %p149
    %p151 = scmp.ne.s32.totalorder %s139, %s140
    %p152 = scmp.eq.s32.totalorder %s19, 1
    %p153 = por %p151, %p152
    %p155 = scmp.ne.s32.totalorder %s140, %s154
    %p156 = scmp.eq.s32.totalorder %s19, 0
    %p157 = por %p155, %p156
    %s159 = sadd.s32 %s158, 1
    %p162 = scmp.eq.s32.totalorder %s13, 1
    %p163 = scmp.ne.s32.totalorder %s158, %s160
    %p164 = scmp.eq.s32.totalorder %s13, 0
    %p165 = por %p163, %p164
    %p166 = scmp.ne.s32.totalorder %s158, %s160
    %p167 = scmp.eq.s32.totalorder %s18, 1
    %p168 = por %p166, %p167
    %p169 = scmp.ne.s32.totalorder %s160, %s161
    %p170 = scmp.eq.s32.totalorder %s18, 0
    %p171 = por %p169, %p170
    %p172 = scmp.ne.s32.totalorder %s160, %s161
    %p173 = scmp.eq.s32.totalorder %s19, 1
    %p174 = por %p172, %p173
    %p176 = scmp.ne.s32.totalorder %s161, %s175
    %p177 = scmp.eq.s32.totalorder %s19, 0
    %p178 = por %p176, %p177
    %s180 = sadd.s32 %s179, 1
    %p183 = scmp.eq.s32.totalorder %s13, 1
    %p184 = scmp.ne.s32.totalorder %s179, %s181
    %p185 = scmp.eq.s32.totalorder %s13, 0
    %p186 = por %p184, %p185
    %p187 = scmp.ne.s32.totalorder %s179, %s181
    %p188 = scmp.eq.s32.totalorder %s18, 1
    %p189 = por %p187, %p188
    %p190 = scmp.ne.s32.totalorder %s181, %s182
    %p191 = scmp.eq.s32.totalorder %s18, 0
    %p192 = por %p190, %p191
    %p193 = scmp.ne.s32.totalorder %s181, %s182
    %p194 = scmp.eq.s32.totalorder %s19, 1
    %p195 = por %p193, %p194
    %p197 = scmp.ne.s32.totalorder %s182, %s196
    %p198 = scmp.eq.s32.totalorder %s19, 0
    %p199 = por %p197, %p198
    %s200 = ssub.s32 %s20, %s32
    %p201 = scmp.eq.s32.totalorder %s200, 0
    %s203 = sadd.s32 %s202, 1
    %s204 = scalar_select %p201, %s202, %s203
    %p207 = pneg %p201
    %p208 = scmp.eq.s32.totalorder %s13, 1
    %p209 = por %p207, %p208
    %p210 = scmp.ne.s32.totalorder %s202, %s205
    %p211 = scmp.eq.s32.totalorder %s13, 0
    %p212 = por %p210, %p211
    %p213 = scmp.ne.s32.totalorder %s202, %s205
    %p214 = scmp.eq.s32.totalorder %s18, 1
    %p215 = por %p213, %p214
    %p216 = scmp.ne.s32.totalorder %s205, %s206
    %p217 = scmp.eq.s32.totalorder %s18, 0
    %p218 = por %p216, %p217
    %p219 = scmp.ne.s32.totalorder %s205, %s206
    %p220 = scmp.eq.s32.totalorder %s19, 1
    %p221 = por %p219, %p220
    %p223 = scmp.ne.s32.totalorder %s206, %s222
    %p224 = scmp.eq.s32.totalorder %s19, 0
    %p225 = por %p223, %p224
    %p226 = scmp.le.s32.totalorder 1, %s13
    %p227 = scmp.lt.s32.totalorder %s13, 3
    %p228 = pnand %p226, %p227
    %p229 = pneg %p228
    // Predicated region
    $region9: #{world_model_forward.14} parent=5 // pred_check
      _
    $region10: #{world_model_forward.14} parent=5 // pred_check_branch
      %231 = sbr.rel (%p228) target = $region12
    $region11: #{world_model_forward.14} parent=5 // pred_region
      %s232 = ssub.s32 %s13, 1
      // Predicated region
      $region13: #{world_model_forward.14} parent=11 // pred_check
        %p233 = pneg %p77
      $region14: #{world_model_forward.14} parent=11 // pred_check_branch
        %235 = sbr.rel (%p233) target = $region16
      $region15: #{world_model_forward.14} parent=11 // pred_region
        %p236 = scmp.lt.s32.totalorder %s23, 0
        %s237 = scalar_select %p236, %s23, 0
        %s238 = smul.addr %s237, 4
        %s239 = scalar_lea.vmem %s1, %s238
      $region16: #{world_model_forward.14} parent=11 // pred_fallthru
        _
      // Predicated region
      $region17: #{world_model_forward.14} parent=11 // pred_check
        %p240 = pneg %p103
      $region18: #{world_model_forward.14} parent=11 // pred_check_branch
        %242 = sbr.rel (%p240) target = $region20
      $region19: #{world_model_forward.14} parent=11 // pred_region
        %p243 = scmp.lt.s32.totalorder %s23, 0
        %s244 = scalar_select %p243, %s23, 0
        %s245 = scalar_lea.vmem %s2, %s244
      $region20: #{world_model_forward.14} parent=11 // pred_fallthru
        _
      // Predicated region
      $region21: #{world_model_forward.14} parent=11 // pred_check
        %p246 = pneg %p129
      $region22: #{world_model_forward.14} parent=11 // pred_check_branch
        %248 = sbr.rel (%p246) target = $region24
      $region23: #{world_model_forward.14} parent=11 // pred_region
        %s249 = smul.u32 4, %s23
        %p250 = scmp.lt.s32.totalorder %s249, 3
        %s251 = scalar_select %p250, %s249, 3
        %s252 = smul.addr %s251, 4
        %s253 = scalar_lea.vmem %s3, %s252
        %s254 = smul.u32 4, %s23
      $region24: #{world_model_forward.14} parent=11 // pred_fallthru
        _
      // Predicated region
      $region25: #{world_model_forward.14} parent=11 // pred_check
        %p255 = pneg %p150
      $region26: #{world_model_forward.14} parent=11 // pred_check_branch
        %257 = sbr.rel (%p255) target = $region28
      $region27: #{world_model_forward.14} parent=11 // pred_region
        _
      $region28: #{world_model_forward.14} parent=11 // pred_fallthru
        _
      // Predicated region
      $region29: #{world_model_forward.14} parent=11 // pred_check
        %p258 = pneg %p171
      $region30: #{world_model_forward.14} parent=11 // pred_check_branch
        %260 = sbr.rel (%p258) target = $region32
      $region31: #{world_model_forward.14} parent=11 // pred_region
        _
      $region32: #{world_model_forward.14} parent=11 // pred_fallthru
        _
      // Predicated region
      $region33: #{world_model_forward.14} parent=11 // pred_check
        %p261 = pneg %p192
      $region34: #{world_model_forward.14} parent=11 // pred_check_branch
        %263 = sbr.rel (%p261) target = $region36
      $region35: #{world_model_forward.14} parent=11 // pred_region
        _
      $region36: #{world_model_forward.14} parent=11 // pred_fallthru
        _
    $region12: #{world_model_forward.14} parent=5 // pred_fallthru
      _
    %p264 = scmp.lt.s32.totalorder %s13, 2
    // Predicated region
    $region37: #{world_model_forward.14} parent=5 // pred_check
      %p265 = pneg %p264
    $region38: #{world_model_forward.14} parent=5 // pred_check_branch
      %267 = sbr.rel (%p265) target = $region40
    $region39: #{world_model_forward.14} parent=5 // pred_region
      // Predicated region
      $region41: #{world_model_forward.14} parent=39 // pred_check
        %p268 = pneg %p45
      $region42: #{world_model_forward.14} parent=39 // pred_check_branch
        %270 = sbr.rel (%p268) target = $region44
      $region43: #{world_model_forward.14} parent=39 // pred_region
        %p271 = scmp.lt.s32.totalorder %s20, 1
        %s272 = scalar_select %p271, %s20, 1
        %s273 = smul.addr %s272, 4
        %s274 = scalar_lea.vmem %s0, %s273
      $region44: #{world_model_forward.14} parent=39 // pred_fallthru
        _
    $region40: #{world_model_forward.14} parent=5 // pred_fallthru
      _
    %p275 = scmp.le.s32.totalorder 1, %s13
    %p276 = scmp.lt.s32.totalorder %s13, 3
    %p277 = pnand %p275, %p276
    %p278 = pneg %p277
    // Predicated region
    $region45: #{world_model_forward.14} parent=5 // pred_check
      _
    $region46: #{world_model_forward.14} parent=5 // pred_check_branch
      %280 = sbr.rel (%p277) target = $region48
    $region47: #{world_model_forward.14} parent=5 // pred_region
      %s281 = ssub.s32 %s13, 1
      %p282 = scmp.lt.s32.totalorder %s22, 1
      %s283 = scalar_select %p282, %s22, 1
      %s284 = smul.addr %s283, 4
      %s285 = scalar_lea.vmem %s0, %s284
      %p286 = pneg %p51
      %p287 = pneg %p48
      %p288 = scmp.lt.s32.totalorder %s23, 0
      %s289 = scalar_select %p288, %s23, 0
      %s290 = smul.addr %s289, 4
      %s291 = scalar_lea.vmem %s1, %s290
      %p292 = pneg %p77
      %p293 = pneg %p74
      %p294 = scmp.lt.s32.totalorder %s23, 0
      %s295 = scalar_select %p294, %s23, 0
      %s296 = scalar_lea.vmem %s2, %s295
      %p297 = pneg %p103
      %p298 = pneg %p100
      %s299 = smul.u32 4, %s23
      %p300 = scmp.lt.s32.totalorder %s299, 3
      %s301 = scalar_select %p300, %s299, 3
      %s302 = smul.addr %s301, 4
      %s303 = scalar_lea.vmem %s3, %s302
      %p304 = pneg %p129
      %p305 = pneg %p126
      %p306 = pneg %p150
      %p307 = pneg %p147
      %p308 = pneg %p171
      %p309 = pneg %p168
      %p310 = pneg %p192
      %p311 = pneg %p189
      %p312 = pneg %p218
      %p313 = pneg %p215
      %p314 = scmp.lt.s32.totalorder %s22, 1
      %s315 = scalar_select %p314, %s22, 1
      %s316 = smul.addr %s315, 4
      %s317 = scalar_lea.vmem %s7, %s316
      %p318 = scmp.lt.s32.totalorder %s22, 1
      %s319 = scalar_select %p318, %s22, 1
      %s320 = smul.addr %s319, 4
      %s321 = scalar_lea.vmem %s0, %s320
      %p322 = scmp.lt.s32.totalorder %s23, 0
      %s323 = scalar_select %p322, %s23, 0
      %s324 = smul.addr %s323, 4
      %s325 = scalar_lea.vmem %s1, %s324
      %p326 = scmp.lt.s32.totalorder %s23, 0
      %s327 = scalar_select %p326, %s23, 0
      %s328 = scalar_lea.vmem %s2, %s327
      %s329 = smul.u32 4, %s23
      %p330 = scmp.lt.s32.totalorder %s329, 3
      %s331 = scalar_select %p330, %s329, 3
      %s332 = smul.addr %s331, 4
      %s333 = scalar_lea.vmem %s3, %s332
      %s334 = smul.u32 4, %s23
      %p335 = scmp.lt.s32.totalorder %s22, 1
      %s336 = scalar_select %p335, %s22, 1
      %s337 = smul.addr %s336, 4
      %s338 = scalar_lea.vmem %s7, %s337
      %p340 = scmp.eq.s32.totalorder %s23, 0
      // Predicated region
      $region49: #{world_model_forward.14} parent=47 // pred_check
        %p341 = pneg %p340
      $region50: #{world_model_forward.14} parent=47 // pred_check_branch
        %343 = sbr.rel (%p341) target = $region52
      $region51: #{world_model_forward.14} parent=47 // pred_region
        %vm344 = vcmask 261120
        %345 = vst.msk [vmem:[#allocation2] sm:$0xff] %vm344, 0.0
      $region52: #{world_model_forward.14} parent=47 // pred_fallthru
        _
      %v346 = vld [vmem:[%s321] sm:$0xf]
      %v347 = vld [vmem:[%s325] sm:$0xf]
      %v348 = vld [vmem:[%s325 + $0x4] sm:$0xf]
      %v349 = vld [vmem:[%s325 + $0x8] sm:$0xf]
      %v350 = vld [vmem:[%s325 + $0xc] sm:$0xf]
      %v351 = vld [vmem:[%s328] sm:$0x1]
      %v353 = vlaneseq
      %v354 = vshrl.u32 %v353, 7
      %v355 = vsub.s32 0, %v354
      %v356 = vrot.slane %v351, %v355
      %v362 = vunpack.c.l.b16 %v347
      %v363 = vunpack.c.l.b16 %v348
      %v364 = vunpack.c.l.b16 %v349
      %v365 = vunpack.c.l.b16 %v350
      %v366 = vpack.c.b16 %v363, %v362
      %v367 = vpack.c.b16 %v365, %v364
      %vm370 = vcmask 261120
      %v372 = vsel %vm370, %v346, 0
      %374 = vmatprep.subr.bf16.mxu0 0
      %375 = vmatpush1.bf16.msra.mxu0 %v366
      %376 = vmatprep.subr.bf16.mxu0 0
      %377 = vmatpush1.bf16.msra.mxu0 %v367
      %378 = vmatprep.subr.bf16.mxu0 0
      %379 = vmatpush1.bf16.msra.mxu0 0
      %380 = vmatprep.subr.bf16.mxu0 0
      %381 = vmatpush1.bf16.msra.mxu0 0
      %382 = vmatprep.subr.bf16.mxu0 0
      %383 = vmatpush1.bf16.msra.mxu0 0
      %384 = vmatprep.subr.bf16.mxu0 0
      %385 = vmatpush1.bf16.msra.mxu0 0
      %386 = vmatprep.subr.bf16.mxu0 0
      %387 = vmatpush1.bf16.msra.mxu0 0
      %388 = vmatprep.subr.bf16.mxu0 0
      %389 = vmatpush1.bf16.msra.mxu0 0
      %390 = vmatprep.subr.bf16.mxu0 0
      %391 = vmatpush1.bf16.msra.mxu0 0
      %392 = vmatprep.subr.bf16.mxu0 0
      %393 = vmatpush1.bf16.msra.mxu0 0
      %394 = vmatprep.subr.bf16.mxu0 0
      %395 = vmatpush1.bf16.msra.mxu0 0
      %396 = vmatprep.subr.bf16.mxu0 0
      %397 = vmatpush1.bf16.msra.mxu0 0
      %398 = vmatprep.subr.bf16.mxu0 0
      %399 = vmatpush1.bf16.msra.mxu0 0
      %400 = vmatprep.subr.bf16.mxu0 0
      %401 = vmatpush1.bf16.msra.mxu0 0
      %402 = vmatprep.subr.bf16.mxu0 0
      %403 = vmatpush1.bf16.msra.mxu0 0
      %404 = vmatprep.subr.bf16.mxu0 0
      %405 = vmatpush1.bf16.msra.mxu0 0
      %406 = vmatprep.mubr.bf16.mxu0 0
      %407 = vmatmul.mubr.bf16.gmra.mrb[0].mxu0 %v372
      %v408 = vpop.f32.mrb[0].mxu0
      %v409 = vadd.f32 %v356, %v408
      %v410 = vpop.f32.mrb[0].mxu0
      %v411 = vpop.f32.mrb[0].mxu0
      %v412 = vpop.f32.mrb[0].mxu0
      %413 = vdwg.mxu0
      %v414 = vmax.f32 %v409, 0.0
      %v415 = vld [vmem:[#allocation2] sm:$0xff]
      %v416 = vld [vmem:[%s333] sm:$0xf]
      %v417 = vld [vmem:[%s333 + $0x4] sm:$0xf]
      %v418 = vld [vmem:[%s333 + $0x8] sm:$0xf]
      %v419 = vld [vmem:[%s333 + $0xc] sm:$0xf]
      %v420 = vpack.c.bf16 %v414, %v414
      %v425 = vunpack.c.l.b16 %v416
      %v426 = vunpack.c.l.b16 %v417
      %v427 = vunpack.c.l.b16 %v418
      %v428 = vunpack.c.l.b16 %v419
      %v429 = vpack.c.b16 %v426, %v425
      %v430 = vpack.c.b16 %v428, %v427
      %v434 = vsel %vm370, %v420, 0
      %436 = vmatprep.subr.bf16.mxu0 0
      %437 = vmatpush1.bf16.msra.mxu0 %v429
      %438 = vmatprep.subr.bf16.mxu0 0
      %439 = vmatpush1.bf16.msra.mxu0 %v430
      %440 = vmatprep.subr.bf16.mxu0 0
      %441 = vmatpush1.bf16.msra.mxu0 0
      %442 = vmatprep.subr.bf16.mxu0 0
      %443 = vmatpush1.bf16.msra.mxu0 0
      %444 = vmatprep.subr.bf16.mxu0 0
      %445 = vmatpush1.bf16.msra.mxu0 0
      %446 = vmatprep.subr.bf16.mxu0 0
      %447 = vmatpush1.bf16.msra.mxu0 0
      %448 = vmatprep.subr.bf16.mxu0 0
      %449 = vmatpush1.bf16.msra.mxu0 0
      %450 = vmatprep.subr.bf16.mxu0 0
      %451 = vmatpush1.bf16.msra.mxu0 0
      %452 = vmatprep.subr.bf16.mxu0 0
      %453 = vmatpush1.bf16.msra.mxu0 0
      %454 = vmatprep.subr.bf16.mxu0 0
      %455 = vmatpush1.bf16.msra.mxu0 0
      %456 = vmatprep.subr.bf16.mxu0 0
      %457 = vmatpush1.bf16.msra.mxu0 0
      %458 = vmatprep.subr.bf16.mxu0 0
      %459 = vmatpush1.bf16.msra.mxu0 0
      %460 = vmatprep.subr.bf16.mxu0 0
      %461 = vmatpush1.bf16.msra.mxu0 0
      %462 = vmatprep.subr.bf16.mxu0 0
      %463 = vmatpush1.bf16.msra.mxu0 0
      %464 = vmatprep.subr.bf16.mxu0 0
      %465 = vmatpush1.bf16.msra.mxu0 0
      %466 = vmatprep.subr.bf16.mxu0 0
      %467 = vmatpush1.bf16.msra.mxu0 0
      %468 = vmatprep.mubr.bf16.mxu0 0
      %469 = vmatmul.mubr.bf16.gmra.mrb[0].mxu0 %v434
      %v470 = vpop.f32.mrb[0].mxu0
      %v471 = vadd.f32 0.0, %v470
      %v472 = vpop.f32.mrb[0].mxu0
      %v473 = vpop.f32.mrb[0].mxu0
      %v474 = vpop.f32.mrb[0].mxu0
      %475 = vdwg.mxu0
      %v476 = vadd.f32 %v415, %v471
      %477 = vst.msk [vmem:[#allocation2] sm:$0xff] %vm370, %v476
      // Predicated region
      $region53: #{world_model_forward.14} parent=47 // pred_check
        %p478 = pneg %p340
      $region54: #{world_model_forward.14} parent=47 // pred_check_branch
        %480 = sbr.rel (%p478) target = $region56
      $region55: #{world_model_forward.14} parent=47 // pred_region
        %v481 = vld [vmem:[#allocation2] sm:$0xff]
        %v482 = vld [vmem:[%s4] sm:$0x1]
        %v484 = vlaneseq
        %v485 = vshrl.u32 %v484, 7
        %v486 = vsub.s32 0, %v485
        %v487 = vrot.slane %v482, %v486
        %v489 = vadd.f32 %v481, %v487
        %v490 = vld [vmem:[%s321] sm:$0xf]
        %v491 = vunpack.c.l.bf16 %v490
        %v492 = vadd.f32 %v489, %v491
        %v493 = vld [vmem:[%s5] sm:$0x1]
        %v494 = vld [vmem:[%s6] sm:$0x1]
        %v495 = vsel %vm370, %v492, 0.0
        %496 = vadd.xlane.f32.xlu0 %v495
        %v497 = vpop.xlane.xlu0 %496
        %v498 = vrcp.pop 32.0
        %v499 = vmul.f32 %v497, %v498
        %v500 = vsub.f32 %v492, %v499
        %v501 = vmul.f32 %v500, %v500
        %v502 = vsel %vm370, %v501, 0.0
        %503 = vadd.xlane.f32.xlu0 %v502
        %v504 = vpop.xlane.xlu0 %503
        %v505 = vmul.f32 %v504, %v498
        %v506 = vadd.f32 %v505, 1e-05
        %v507 = vrsqrt.pop %v506
        %v508 = vmul.f32 %v500, %v507
        %v510 = vlaneseq
        %v511 = vshrl.u32 %v510, 7
        %v512 = vsub.s32 0, %v511
        %v513 = vrot.slane %v493, %v512
        %v515 = vmul.f32 %v508, %v513
        %v517 = vlaneseq
        %v518 = vshrl.u32 %v517, 7
        %v519 = vsub.s32 0, %v518
        %v520 = vrot.slane %v494, %v519
        %v522 = vadd.f32 %v515, %v520
        %v523 = vpack.c.bf16 %v522, %v522
        %vm524 = vcmask 257024
        %525 = vst.msk [vmem:[%s338] sm:$0xf] %vm524, %v523
      $region56: #{world_model_forward.14} parent=47 // pred_fallthru
        _
      %p526 = scmp.lt.s32.totalorder %s22, 1
      %s527 = scalar_select %p526, %s22, 1
      %s528 = smul.addr %s527, 4
      %s529 = scalar_lea.vmem %s7, %s528
      // Predicated region
      $region57: #{world_model_forward.14} parent=47 // pred_check
        %p530 = pneg %p215
      $region58: #{world_model_forward.14} parent=47 // pred_check_branch
        %532 = sbr.rel (%p530) target = $region60
      $region59: #{world_model_forward.14} parent=47 // pred_region
        _
      $region60: #{world_model_forward.14} parent=47 // pred_fallthru
        _
    $region48: #{world_model_forward.14} parent=5 // pred_fallthru
      _
    %p533 = scmp.le.s32.totalorder 2, %s13
    // Predicated region
    $region61: #{world_model_forward.14} parent=5 // pred_check
      %p534 = pneg %p533
    $region62: #{world_model_forward.14} parent=5 // pred_check_branch
      %536 = sbr.rel (%p534) target = $region64
    $region63: #{world_model_forward.14} parent=5 // pred_region
      %s537 = ssub.s32 %s13, 2
      // Predicated region
      $region65: #{world_model_forward.14} parent=63 // pred_check
        %p538 = pneg %p221
      $region66: #{world_model_forward.14} parent=63 // pred_check_branch
        %540 = sbr.rel (%p538) target = $region68
      $region67: #{world_model_forward.14} parent=63 // pred_region
        %p541 = scmp.lt.s32.totalorder %s24, 1
        %s542 = scalar_select %p541, %s24, 1
        %s543 = smul.addr %s542, 4
        %s544 = scalar_lea.vmem %s7, %s543
      $region68: #{world_model_forward.14} parent=63 // pred_fallthru
        _
    $region64: #{world_model_forward.14} parent=5 // pred_fallthru
      _
  $region6: #{world_model_forward.14} parent=0 // loop_footer
    %s17 = sadd.s32 1, %s13
  $region7: #{world_model_forward.14} parent=0 // loop_footer_branch
    %12 = sbr.rel target = $region3
  $region8: #{world_model_forward.14} parent=0 // loop_exit
    _

// kernel: world_model_forward.19
$region0: #{world_model_forward.19}
  #allocation0 [shape = 'u32[]', space=smem, size = 0x4, offset = 0x4, fixed_abs, tag = 'smem constant byte address 0x4 - core index']
  #allocation1 [shape = 'u32[144,128]{1,0:T(1,128)}', space=vmem, size = 0x12000, scoped, tag = 'internal scratch']
  %s0 = inlined_call_operand.vmem [shape: bf16[2,8,32], index: 0, kind: input, shape index: {}]
  %s1 = inlined_call_operand.vmem [shape: bf16[32,32], index: 1, kind: input, shape index: {}]
  %s2 = inlined_call_operand.vmem [shape: f32[1,32], index: 2, kind: input, shape index: {}]
  %s3 = inlined_call_operand.vmem [shape: bf16[32,64], index: 3, kind: input, shape index: {}]
  %s4 = inlined_call_operand.vmem [shape: f32[1,64], index: 4, kind: input, shape index: {}]
  %s5 = inlined_call_operand.vmem [shape: bf16[64,128], index: 5, kind: input, shape index: {}]
  %s6 = inlined_call_operand.vmem [shape: f32[1,128], index: 6, kind: input, shape index: {}]
  %s7 = inlined_call_operand.vmem [shape: f32[2,128], index: 7, kind: output, shape index: {}]
  %s8 = sld [smem:[#allocation0]]
  $region38: #{world_model_forward.19} parent=0
    _
  %s10 = ssub.s32 1, %s8
  %s11 = scalar_select 0, %s10, %s8
  // Predicated region
  $region2: #{world_model_forward.19} parent=0 // pred_check
    _
  $region3: #{world_model_forward.19} parent=0 // pred_check_branch
    %13 = sbr.rel (0) target = $region5
  $region4: #{world_model_forward.19} parent=0 // pred_region
    _
  $region5: #{world_model_forward.19} parent=0 // pred_fallthru
    _
  // Predicated region
  $region6: #{world_model_forward.19} parent=0 // pred_check
    _
  $region7: #{world_model_forward.19} parent=0 // pred_check_branch
    %15 = sbr.rel (0) target = $region9
  $region8: #{world_model_forward.19} parent=0 // pred_region
    _
  $region9: #{world_model_forward.19} parent=0 // pred_fallthru
    _
  // Predicated region
  $region10: #{world_model_forward.19} parent=0 // pred_check
    _
  $region11: #{world_model_forward.19} parent=0 // pred_check_branch
    %17 = sbr.rel (0) target = $region13
  $region12: #{world_model_forward.19} parent=0 // pred_region
    _
  $region13: #{world_model_forward.19} parent=0 // pred_fallthru
    _
  // Predicated region
  $region14: #{world_model_forward.19} parent=0 // pred_check
    _
  $region15: #{world_model_forward.19} parent=0 // pred_check_branch
    %19 = sbr.rel (0) target = $region17
  $region16: #{world_model_forward.19} parent=0 // pred_region
    _
  $region17: #{world_model_forward.19} parent=0 // pred_fallthru
    _
  // Predicated region
  $region18: #{world_model_forward.19} parent=0 // pred_check
    _
  $region19: #{world_model_forward.19} parent=0 // pred_check_branch
    %21 = sbr.rel (0) target = $region21
  $region20: #{world_model_forward.19} parent=0 // pred_region
    _
  $region21: #{world_model_forward.19} parent=0 // pred_fallthru
    _
  // Predicated region
  $region22: #{world_model_forward.19} parent=0 // pred_check
    _
  $region23: #{world_model_forward.19} parent=0 // pred_check_branch
    %23 = sbr.rel (0) target = $region25
  $region24: #{world_model_forward.19} parent=0 // pred_region
    _
  $region25: #{world_model_forward.19} parent=0 // pred_fallthru
    _
  // Predicated region
  $region26: #{world_model_forward.19} parent=0 // pred_check
    _
  $region27: #{world_model_forward.19} parent=0 // pred_check_branch
    %25 = sbr.rel (0) target = $region29
  $region28: #{world_model_forward.19} parent=0 // pred_region
    _
  $region29: #{world_model_forward.19} parent=0 // pred_fallthru
    _
  %v27 = vld [vmem:[%s0] sm:$0xf]
  %v28 = vld [vmem:[%s0 + $0x4] sm:$0xf]
  %v29 = vunpack.c.l.bf16 %v27
  %v30 = vunpack.c.l.bf16 %v28
  %vm31 = vcmask 261120
  %v32 = vsel %vm31, %v29, 0.0
  %v33 = vrot.slane %v32, 4
  %v34 = vadd.f32 %v32, %v33
  %v35 = vrot.slane %v34, 2
  %v36 = vadd.f32 %v34, %v35
  %v37 = vrot.slane %v36, 1
  %v38 = vadd.f32 %v36, %v37
  %v39 = vsel %vm31, %v30, 0.0
  %v40 = vrot.slane %v39, 4
  %v41 = vadd.f32 %v39, %v40
  %v42 = vrot.slane %v41, 2
  %v43 = vadd.f32 %v41, %v42
  %v44 = vrot.slane %v43, 1
  %v45 = vadd.f32 %v43, %v44
  %v46 = vrcp.pop 8.0
  %v47 = vmul.f32 %v38, %v46
  %v48 = vmul.f32 %v45, %v46
  %v49 = vld [vmem:[%s1] sm:$0xf]
  %v50 = vld [vmem:[%s1 + $0x4] sm:$0xf]
  %v51 = vld [vmem:[%s1 + $0x8] sm:$0xf]
  %v52 = vld [vmem:[%s1 + $0xc] sm:$0xf]
  %v53 = vpack.c.bf16 %v47, %v47
  %v54 = vpack.c.bf16 %v48, %v48
  %v55 = vld [vmem:[%s2] sm:$0x1]
  %v57 = vlaneseq
  %v58 = vshrl.u32 %v57, 7
  %v59 = vsub.s32 0, %v58
  %v60 = vrot.slane %v55, %v59
  %v64 = vunpack.c.l.b16 %v53
  %v65 = vunpack.c.l.b16 %v54
  %vm66 = vcmask 1041409
  %v67 = vsel %vm66, %v65, %v64
  %v68 = vpack.c.b16 %v67, %v67
  %v73 = vunpack.c.l.b16 %v49
  %v74 = vunpack.c.l.b16 %v50
  %v75 = vunpack.c.l.b16 %v51
  %v76 = vunpack.c.l.b16 %v52
  %v77 = vpack.c.b16 %v74, %v73
  %v78 = vpack.c.b16 %v76, %v75
  %v82 = vsel %vm31, %v68, 0
  %84 = vmatprep.subr.bf16.mxu0 0
  %85 = vmatpush1.bf16.msra.mxu0 %v77
  %86 = vmatprep.subr.bf16.mxu0 0
  %87 = vmatpush1.bf16.msra.mxu0 %v78
  %88 = vmatprep.subr.bf16.mxu0 0
  %89 = vmatpush1.bf16.msra.mxu0 0
  %90 = vmatprep.subr.bf16.mxu0 0
  %91 = vmatpush1.bf16.msra.mxu0 0
  %92 = vmatprep.subr.bf16.mxu0 0
  %93 = vmatpush1.bf16.msra.mxu0 0
  %94 = vmatprep.subr.bf16.mxu0 0
  %95 = vmatpush1.bf16.msra.mxu0 0
  %96 = vmatprep.subr.bf16.mxu0 0
  %97 = vmatpush1.bf16.msra.mxu0 0
  %98 = vmatprep.subr.bf16.mxu0 0
  %99 = vmatpush1.bf16.msra.mxu0 0
  %100 = vmatprep.subr.bf16.mxu0 0
  %101 = vmatpush1.bf16.msra.mxu0 0
  %102 = vmatprep.subr.bf16.mxu0 0
  %103 = vmatpush1.bf16.msra.mxu0 0
  %104 = vmatprep.subr.bf16.mxu0 0
  %105 = vmatpush1.bf16.msra.mxu0 0
  %106 = vmatprep.subr.bf16.mxu0 0
  %107 = vmatpush1.bf16.msra.mxu0 0
  %108 = vmatprep.subr.bf16.mxu0 0
  %109 = vmatpush1.bf16.msra.mxu0 0
  %110 = vmatprep.subr.bf16.mxu0 0
  %111 = vmatpush1.bf16.msra.mxu0 0
  %112 = vmatprep.subr.bf16.mxu0 0
  %113 = vmatpush1.bf16.msra.mxu0 0
  %114 = vmatprep.subr.bf16.mxu0 0
  %115 = vmatpush1.bf16.msra.mxu0 0
  %116 = vmatprep.mubr.bf16.mxu0 0
  %117 = vmatmul.mubr.bf16.gmra.mrb[0].mxu0 %v82
  %v118 = vpop.f32.mrb[0].mxu0
  %v119 = vadd.f32 %v60, %v118
  %v120 = vpop.f32.mrb[0].mxu0
  %v121 = vpop.f32.mrb[0].mxu0
  %v122 = vpop.f32.mrb[0].mxu0
  %123 = vdwg.mxu0
  %v124 = vld [vmem:[%s3] sm:$0xf]
  %v125 = vld [vmem:[%s3 + $0x4] sm:$0xf]
  %v126 = vld [vmem:[%s3 + $0x8] sm:$0xf]
  %v127 = vld [vmem:[%s3 + $0xc] sm:$0xf]
  %v128 = vpack.c.bf16 %v119, %v119
  %v129 = vld [vmem:[%s4] sm:$0x1]
  %v131 = vlaneseq
  %v132 = vshrl.u32 %v131, 7
  %v133 = vsub.s32 0, %v132
  %v134 = vrot.slane %v129, %v133
  %v140 = vunpack.c.l.b16 %v124
  %v141 = vunpack.c.l.b16 %v125
  %v142 = vunpack.c.l.b16 %v126
  %v143 = vunpack.c.l.b16 %v127
  %v144 = vpack.c.b16 %v141, %v140
  %v145 = vpack.c.b16 %v143, %v142
  %v149 = vsel %vm31, %v128, 0
  %151 = vmatprep.subr.bf16.mxu0 0
  %152 = vmatpush1.bf16.msra.mxu0 %v144
  %153 = vmatprep.subr.bf16.mxu0 0
  %154 = vmatpush1.bf16.msra.mxu0 %v145
  %155 = vmatprep.subr.bf16.mxu0 0
  %156 = vmatpush1.bf16.msra.mxu0 0
  %157 = vmatprep.subr.bf16.mxu0 0
  %158 = vmatpush1.bf16.msra.mxu0 0
  %159 = vmatprep.subr.bf16.mxu0 0
  %160 = vmatpush1.bf16.msra.mxu0 0
  %161 = vmatprep.subr.bf16.mxu0 0
  %162 = vmatpush1.bf16.msra.mxu0 0
  %163 = vmatprep.subr.bf16.mxu0 0
  %164 = vmatpush1.bf16.msra.mxu0 0
  %165 = vmatprep.subr.bf16.mxu0 0
  %166 = vmatpush1.bf16.msra.mxu0 0
  %167 = vmatprep.subr.bf16.mxu0 0
  %168 = vmatpush1.bf16.msra.mxu0 0
  %169 = vmatprep.subr.bf16.mxu0 0
  %170 = vmatpush1.bf16.msra.mxu0 0
  %171 = vmatprep.subr.bf16.mxu0 0
  %172 = vmatpush1.bf16.msra.mxu0 0
  %173 = vmatprep.subr.bf16.mxu0 0
  %174 = vmatpush1.bf16.msra.mxu0 0
  %175 = vmatprep.subr.bf16.mxu0 0
  %176 = vmatpush1.bf16.msra.mxu0 0
  %177 = vmatprep.subr.bf16.mxu0 0
  %178 = vmatpush1.bf16.msra.mxu0 0
  %179 = vmatprep.subr.bf16.mxu0 0
  %180 = vmatpush1.bf16.msra.mxu0 0
  %181 = vmatprep.subr.bf16.mxu0 0
  %182 = vmatpush1.bf16.msra.mxu0 0
  %183 = vmatprep.mubr.bf16.mxu0 0
  %184 = vmatmul.mubr.bf16.gmra.mrb[0].mxu0 %v149
  %v185 = vpop.f32.mrb[0].mxu0
  %v186 = vadd.f32 %v134, %v185
  %v187 = vpop.f32.mrb[0].mxu0
  %v188 = vpop.f32.mrb[0].mxu0
  %v189 = vpop.f32.mrb[0].mxu0
  %190 = vdwg.mxu0
  %v191 = vmax.f32 %v186, 0.0
  %v192 = vld [vmem:[%s5] sm:$0xf]
  %v193 = vld [vmem:[%s5 + $0x4] sm:$0xf]
  %v194 = vld [vmem:[%s5 + $0x8] sm:$0xf]
  %v195 = vld [vmem:[%s5 + $0xc] sm:$0xf]
  %v196 = vld [vmem:[%s5 + $0x10] sm:$0xf]
  %v197 = vld [vmem:[%s5 + $0x14] sm:$0xf]
  %v198 = vld [vmem:[%s5 + $0x18] sm:$0xf]
  %v199 = vld [vmem:[%s5 + $0x1c] sm:$0xf]
  %v200 = vpack.c.bf16 %v191, %v191
  %v201 = vld [vmem:[%s6] sm:$0x1]
  %v203 = vlaneseq
  %v204 = vshrl.u32 %v203, 7
  %v205 = vsub.s32 0, %v204
  %v206 = vrot.slane %v201, %v205
  %v216 = vunpack.c.l.b16 %v192
  %v217 = vunpack.c.l.b16 %v193
  %v218 = vunpack.c.l.b16 %v194
  %v219 = vunpack.c.l.b16 %v195
  %v220 = vunpack.c.l.b16 %v196
  %v221 = vunpack.c.l.b16 %v197
  %v222 = vunpack.c.l.b16 %v198
  %v223 = vunpack.c.l.b16 %v199
  %v224 = vpack.c.b16 %v217, %v216
  %v225 = vpack.c.b16 %v219, %v218
  %v226 = vpack.c.b16 %v221, %v220
  %v227 = vpack.c.b16 %v223, %v222
  %vm232 = vcmask 523264
  %v234 = vsel %vm232, %v200, 0
  %236 = vmatprep.subr.bf16.mxu0 0
  %237 = vmatpush1.bf16.msra.mxu0 %v224
  %238 = vmatprep.subr.bf16.mxu0 0
  %239 = vmatpush1.bf16.msra.mxu0 %v225
  %240 = vmatprep.subr.bf16.mxu0 0
  %241 = vmatpush1.bf16.msra.mxu0 %v226
  %242 = vmatprep.subr.bf16.mxu0 0
  %243 = vmatpush1.bf16.msra.mxu0 %v227
  %244 = vmatprep.subr.bf16.mxu0 0
  %245 = vmatpush1.bf16.msra.mxu0 0
  %246 = vmatprep.subr.bf16.mxu0 0
  %247 = vmatpush1.bf16.msra.mxu0 0
  %248 = vmatprep.subr.bf16.mxu0 0
  %249 = vmatpush1.bf16.msra.mxu0 0
  %250 = vmatprep.subr.bf16.mxu0 0
  %251 = vmatpush1.bf16.msra.mxu0 0
  %252 = vmatprep.subr.bf16.mxu0 0
  %253 = vmatpush1.bf16.msra.mxu0 0
  %254 = vmatprep.subr.bf16.mxu0 0
  %255 = vmatpush1.bf16.msra.mxu0 0
  %256 = vmatprep.subr.bf16.mxu0 0
  %257 = vmatpush1.bf16.msra.mxu0 0
  %258 = vmatprep.subr.bf16.mxu0 0
  %259 = vmatpush1.bf16.msra.mxu0 0
  %260 = vmatprep.subr.bf16.mxu0 0
  %261 = vmatpush1.bf16.msra.mxu0 0
  %262 = vmatprep.subr.bf16.mxu0 0
  %263 = vmatpush1.bf16.msra.mxu0 0
  %264 = vmatprep.subr.bf16.mxu0 0
  %265 = vmatpush1.bf16.msra.mxu0 0
  %266 = vmatprep.subr.bf16.mxu0 0
  %267 = vmatpush1.bf16.msra.mxu0 0
  %268 = vmatprep.mubr.bf16.mxu0 0
  %269 = vmatmul.mubr.bf16.gmra.mrb[0].mxu0 %v234
  %v270 = vpop.f32.mrb[0].mxu0
  %v271 = vadd.f32 %v206, %v270
  %v272 = vpop.f32.mrb[0].mxu0
  %v273 = vpop.f32.mrb[0].mxu0
  %v274 = vpop.f32.mrb[0].mxu0
  %275 = vdwg.mxu0
  %v276 = vlaneseq
  %v277 = vand.u32 %v276, 127
  %vm278 = vcmp.ge.s32.totalorder %v277, 25
  %vm279 = vcmp.lt.s32.totalorder %v277, 29
  %vm280 = vmand %vm278, %vm279
  %v281 = vsel %vm280, %v271, -inf
  %vm282 = vcmask 1041408
  %v283 = vsel %vm282, %v281, -inf
  %284 = vmax.xlane.f32.xlu0 %v283
  %v285 = vpop.xlane.xlu0 %284
  %v286 = vsub.f32 %v281, %v285
  %v287 = vmul.f32 %v286, 1.442695
  %v288 = vpow.pop %v287
  %v289 = vsel %vm282, %v288, 0.0
  %290 = vadd.xlane.f32.xlu0 %v289
  %v291 = vpop.xlane.xlu0 %290
  %v292 = vrcp.pop %v291
  %v293 = vmul.f32 %v288, %v292
  %v294 = vsel %vm280, %v293, %v271
  %vm295 = vcmp.ge.s32.totalorder %v277, 34
  %vm296 = vcmp.lt.s32.totalorder %v277, 37
  %vm297 = vmand %vm295, %vm296
  %v298 = vsel %vm297, %v294, -inf
  %v299 = vsel %vm282, %v298, -inf
  %300 = vmax.xlane.f32.xlu0 %v299
  %v301 = vpop.xlane.xlu0 %300
  %v302 = vsub.f32 %v298, %v301
  %v303 = vmul.f32 %v302, 1.442695
  %v304 = vpow.pop %v303
  %v305 = vsel %vm282, %v304, 0.0
  %306 = vadd.xlane.f32.xlu0 %v305
  %v307 = vpop.xlane.xlu0 %306
  %v308 = vrcp.pop %v307
  %v309 = vmul.f32 %v304, %v308
  %v310 = vsel %vm297, %v309, %v294
  %vm311 = vcmp.ge.s32.totalorder %v277, 29
  %vm312 = vcmp.lt.s32.totalorder %v277, 34
  %vm313 = vmand %vm311, %vm312
  %v314 = vmax.f32 %v310, 0.0
  %v315 = vsel %vm313, %v314, %v310
  %vm316 = vcmp.ge.s32.totalorder %v277, 38
  %vm317 = vcmp.lt.s32.totalorder %v277, 39
  %vm318 = vmand %vm316, %vm317
  %v319 = vxor.u32 %v315, 2147483648
  %v320 = vmul.f32 %v319, 1.442695
  %v321 = vpow.pop %v320
  %v322 = vadd.f32 %v321, 1.0
  %v323 = vrcp.pop %v322
  %v324 = vmul.f32 1.0, %v323
  %v325 = vsel %vm318, %v324, %v315
  %326 = vst [vmem:[%s7] sm:$0x3] %v325
  // Predicated region
  $region30: #{world_model_forward.19} parent=0 // pred_check
    _
  $region31: #{world_model_forward.19} parent=0 // pred_check_branch
    %328 = sbr.rel (0) target = $region33
  $region32: #{world_model_forward.19} parent=0 // pred_region
    _
  $region33: #{world_model_forward.19} parent=0 // pred_fallthru
    _
  // Predicated region
  $region34: #{world_model_forward.19} parent=0 // pred_check
    _
  $region35: #{world_model_forward.19} parent=0 // pred_check_branch
    %330 = sbr.rel (0) target = $region37
  $region36: #{world_model_forward.19} parent=0 // pred_region
    _
  $region37: #{world_model_forward.19} parent=0 // pred_fallthru
    _

</llo_original>
